<compile_context>
chip_gen: v5e
topology: v5e:2x2
jax: 0.10.0
libtpu: 0.0.40
codegen_flags: <defaults>
</compile_context>

<pallas_src>
import functools

import jax
import jax.numpy as jnp
import numpy as np
from jax.experimental import pallas as pl
from jax.experimental.pallas import tpu as pltpu


def _fused_conv_relu_kernel(x_ref, w_ref, b_ref, o_ref, *,
                            H, W, KH, KW, pad, Cin, Cout):
    # x_ref: (Cin, FLATP) f32 vertically-padded input, lane-flattened over
    #        (H+2*pad, W), shifted right by `pad` zero lanes (so every tap's
    #        slice offset kh*W + kw is >= 0) and lane-padded to a multiple of
    #        128.
    # w_ref: (KH*KW, Cout, Cin) f32 conv weight, tap-major.
    # b_ref: (Cout, 1) f32 bias.
    # o_ref: (Cout, M)  f32 relu(conv) output, M = H*W (multiple of 128).
    M = H * W
    acc = jnp.zeros((Cout, M), jnp.float32)

    # w-coordinate of each output lane; identifies columns that fall into the
    # horizontal padding for a given kw.  Hoisted out of the tap loop (JAX
    # does not CSE broadcast/iota).
    col = jax.lax.broadcasted_iota(jnp.int32, (1, M), 1) % W
    masks = []
    for kw in range(KW):
        dw = kw - pad
        if dw == 0:
            masks.append(None)                        # tap fully in-bounds
        else:
            masks.append((col + dw >= 0) & (col + dw < W))

    # Fused im2col: each (kh, kw) tap is a contiguous (statically offset)
    # lane slice of the flattened input, masked for horizontal padding and
    # accumulated via a (Cout,Cin)x(Cin,M) MXU matmul.
    for kh in range(KH):
        for kw in range(KW):
            off = kh * W + kw                         # static lane offset
            xs = x_ref[:, pl.ds(off, M)]              # (Cin, M) shifted window
            if masks[kw] is not None:
                xs = jnp.where(masks[kw], xs, 0.0)    # horizontal zero-pad
            acc = acc + jnp.dot(w_ref[kh * KW + kw], xs,
                                preferred_element_type=jnp.float32)

    o_ref[...] = jnp.maximum(acc + b_ref[...], 0.0)


def conv2d_relu_pallas(x_nchw, weight_oihw, bias, *, padding=3):
    N, Cin, H, W = x_nchw.shape
    Cout, Cin_w, KH, KW = weight_oihw.shape
    assert N == 1 and Cin == Cin_w
    M = H * W
    # TODO(synk): for H*W not a multiple of 128, pad M and mask the last lane
    # tile inside the kernel instead of slicing the output afterwards.
    assert M % 128 == 0, "demo (16x16) and real model (64x64) keep M lane-dense"

    pad = padding
    Hp = H + 2 * pad

    # ---- host-side prep (tiny; no im2col, no input transpose) -------------
    # Vertical padding only, then flatten (Hp, W) into the lane axis.  Tap
    # (kh, kw) is then the contiguous slice starting at lane kh*W + kw after
    # prepending `pad` zero lanes; horizontal padding is a lane mask in-kernel.
    xv = jnp.pad(x_nchw[0], ((0, 0), (pad, pad), (0, 0)))        # (Cin, Hp, W)
    flat_len = Hp * W + 2 * pad
    flat_p = pl.cdiv(flat_len, 128) * 128
    xflat = jnp.pad(xv.reshape(Cin, Hp * W),
                    ((0, 0), (pad, flat_p - Hp * W - pad))).astype(jnp.float32)

    # Conv weight OIHW -> tap-major (KH*KW, Cout, Cin); rows match the taps.
    w = jnp.transpose(weight_oihw, (2, 3, 0, 1)).reshape(KH * KW, Cout, Cin)
    w = w.astype(jnp.float32)
    b2 = bias.reshape(Cout, 1).astype(jnp.float32)

    kernel = functools.partial(_fused_conv_relu_kernel, H=H, W=W, KH=KH,
                               KW=KW, pad=pad, Cin=Cin, Cout=Cout)

    cost = pl.CostEstimate(
        flops=2 * Cout * Cin * KH * KW * M,
        transcendentals=0,
        bytes_accessed=(xflat.size + w.size + b2.size + Cout * M) * 4,
    )

    # Whole problem (~0.5 MB) is VMEM-resident on v5e/v6e/v7x -> single
    # grid-less invocation (no per-step pipeline overhead).
    # TODO(synk): when scaling to the module's real 64x64 / batched shapes,
    # add a "parallel" grid over the M axis (512-1024 lane tiles) so both of
    # v7x's TensorCores are used, and set vmem_limit_bytes explicitly.
    out = pl.pallas_call(
        kernel,
        out_shape=jax.ShapeDtypeStruct((Cout, M), jnp.float32),
        in_specs=[
            pl.BlockSpec(memory_space=pltpu.MemorySpace.VMEM),
            pl.BlockSpec(memory_space=pltpu.MemorySpace.VMEM),
            pl.BlockSpec(memory_space=pltpu.MemorySpace.VMEM),
        ],
        out_specs=pl.BlockSpec(memory_space=pltpu.MemorySpace.VMEM),
        cost_estimate=cost,
    )(xflat, w, b2)
    return out   # (Cout, H*W); row-major == NCHW flatten order


def model_forward(x_nchw, weight_oihw, bias):
    N, Cin, H, W = x_nchw.shape
    Cout = weight_oihw.shape[0]
    relu_c_hw = conv2d_relu_pallas(x_nchw, weight_oihw, bias)   # (Cout, H*W)
    # v3 = relu(conv(x)).flatten(1, -1): NCHW order (c, h, w) -> (1, Cout*H*W)
    # The kernel's (Cout, H*W) layout makes this a free reshape.
    v3 = relu_c_hw.reshape(1, Cout * H * W)
    # v4 = v3.transpose(0, 1) -> (Cout*H*W, 1)
    v4 = v3.T
    # TODO(synk): the reference `v5 = v4.permute(1, 2, 0)` is invalid PyTorch
    # (3-index permute of a 2-D tensor raises), so v5/v6 (the cat) cannot be
    # reproduced; the forward returns v4.
    return v4


if __name__ == "__main__":
    key = jax.random.PRNGKey(0)
    kx, kw_key, kb = jax.random.split(key, 3)

    # Channels fixed at 16 by Conv2d(16,16,7); spatial reduced 64 -> 16 demo.
    N, Cin, H, W = 1, 16, 16, 16
    Cout, KH, KW = 16, 7, 7

    x = jax.random.normal(kx, (N, Cin, H, W), dtype=jnp.float32)

    # Deterministic Conv2d-style init: U(-1/sqrt(fan_in), 1/sqrt(fan_in))
    fan_in = Cin * KH * KW
    bound = 1.0 / float(np.sqrt(fan_in))
    weight = jax.random.uniform(kw_key, (Cout, Cin, KH, KW), jnp.float32,
                                -bound, bound)
    bias = jax.random.uniform(kb, (Cout,), jnp.float32, -bound, bound)

    fwd = jax.jit(model_forward)
    out = jax.block_until_ready(fwd(x, weight, bias))
    assert out.shape == (Cout * H * W, 1), out.shape

    # Sanity check against XLA's f32 conv + relu.
    ref = jax.lax.conv_general_dilated(
        x, weight, window_strides=(1, 1), padding=((3, 3), (3, 3)),
        dimension_numbers=("NCHW", "OIHW", "NCHW"),
        precision=jax.lax.Precision.HIGHEST)
    ref = jnp.maximum(ref + bias.reshape(1, Cout, 1, 1), 0.0)
    ref_v4 = ref.reshape(1, Cout * H * W).T
    if not np.allclose(np.asarray(out), np.asarray(ref_v4), rtol=1e-2, atol=1e-2):
        raise AssertionError("Pallas fused conv+relu mismatch vs XLA reference")

    print("KERNEL_OK")
</pallas_src>

<mosaic_0001>
module attributes {stable_mosaic.version = 11 : i64} {
  func.func @_fused_conv_relu_kernel(%arg0: memref<16x384xf32, #tpu.memory_space<vmem>>, %arg1: memref<49x16x16xf32, #tpu.memory_space<vmem>>, %arg2: memref<16x1xf32, #tpu.memory_space<vmem>>, %arg3: memref<16x256xf32, #tpu.memory_space<vmem>>) attributes {dimension_semantics = [], scalar_prefetch = 0 : i64, scratch_operands = 0 : i64, tpu.core_type = #tpu.core_type<tc>} {
    %cst = arith.constant 0.000000e+00 : f32
    %0 = vector.broadcast %cst : f32 to vector<16x256xf32>
    %1 = tpu.iota {dimensions = array<i32: 1>} : vector<1x256xi32>
    %c16_i32 = arith.constant 16 : i32
    %c0_i32 = arith.constant 0 : i32
    %2 = arith.cmpi eq, %c16_i32, %c0_i32 : i32
    %c1_i32 = arith.constant 1 : i32
    %3 = arith.select %2, %c1_i32, %c16_i32 : i32
    %4 = vector.broadcast %3 : i32 to vector<1x256xi32>
    %5 = arith.remsi %1, %4 : vector<1x256xi32>
    %c0_i32_0 = arith.constant 0 : i32
    %6 = vector.broadcast %c0_i32_0 : i32 to vector<1x256xi32>
    %7 = arith.cmpi ne, %5, %6 : vector<1x256xi32>
    %c0_i32_1 = arith.constant 0 : i32
    %8 = vector.broadcast %c0_i32_1 : i32 to vector<1x256xi32>
    %9 = arith.cmpi slt, %5, %8 : vector<1x256xi32>
    %c0_i32_2 = arith.constant 0 : i32
    %10 = arith.cmpi slt, %3, %c0_i32_2 : i32
    %11 = vector.broadcast %10 : i1 to vector<1x256xi1>
    %12 = vector.broadcast %11 : vector<1x256xi1> to vector<1x256xi1>
    %13 = arith.xori %9, %12 : vector<1x256xi1>
    %14 = arith.andi %13, %7 : vector<1x256xi1>
    %15 = vector.broadcast %3 : i32 to vector<1x256xi32>
    %16 = arith.addi %5, %15 : vector<1x256xi32>
    %17 = arith.select %14, %16, %5 : vector<1x256xi1>, vector<1x256xi32>
    %c-3_i32 = arith.constant -3 : i32
    %18 = vector.broadcast %c-3_i32 : i32 to vector<1x256xi32>
    %19 = arith.addi %17, %18 : vector<1x256xi32>
    %c0_i32_3 = arith.constant 0 : i32
    %20 = vector.broadcast %c0_i32_3 : i32 to vector<1x256xi32>
    %21 = arith.cmpi sge, %19, %20 : vector<1x256xi32>
    %c-3_i32_4 = arith.constant -3 : i32
    %22 = vector.broadcast %c-3_i32_4 : i32 to vector<1x256xi32>
    %23 = arith.addi %17, %22 : vector<1x256xi32>
    %c16_i32_5 = arith.constant 16 : i32
    %24 = vector.broadcast %c16_i32_5 : i32 to vector<1x256xi32>
    %25 = arith.cmpi slt, %23, %24 : vector<1x256xi32>
    %26 = arith.andi %21, %25 : vector<1x256xi1>
    %c-2_i32 = arith.constant -2 : i32
    %27 = vector.broadcast %c-2_i32 : i32 to vector<1x256xi32>
    %28 = arith.addi %17, %27 : vector<1x256xi32>
    %c0_i32_6 = arith.constant 0 : i32
    %29 = vector.broadcast %c0_i32_6 : i32 to vector<1x256xi32>
    %30 = arith.cmpi sge, %28, %29 : vector<1x256xi32>
    %c-2_i32_7 = arith.constant -2 : i32
    %31 = vector.broadcast %c-2_i32_7 : i32 to vector<1x256xi32>
    %32 = arith.addi %17, %31 : vector<1x256xi32>
    %c16_i32_8 = arith.constant 16 : i32
    %33 = vector.broadcast %c16_i32_8 : i32 to vector<1x256xi32>
    %34 = arith.cmpi slt, %32, %33 : vector<1x256xi32>
    %35 = arith.andi %30, %34 : vector<1x256xi1>
    %c-1_i32 = arith.constant -1 : i32
    %36 = vector.broadcast %c-1_i32 : i32 to vector<1x256xi32>
    %37 = arith.addi %17, %36 : vector<1x256xi32>
    %c0_i32_9 = arith.constant 0 : i32
    %38 = vector.broadcast %c0_i32_9 : i32 to vector<1x256xi32>
    %39 = arith.cmpi sge, %37, %38 : vector<1x256xi32>
    %c-1_i32_10 = arith.constant -1 : i32
    %40 = vector.broadcast %c-1_i32_10 : i32 to vector<1x256xi32>
    %41 = arith.addi %17, %40 : vector<1x256xi32>
    %c16_i32_11 = arith.constant 16 : i32
    %42 = vector.broadcast %c16_i32_11 : i32 to vector<1x256xi32>
    %43 = arith.cmpi slt, %41, %42 : vector<1x256xi32>
    %44 = arith.andi %39, %43 : vector<1x256xi1>
    %c1_i32_12 = arith.constant 1 : i32
    %45 = vector.broadcast %c1_i32_12 : i32 to vector<1x256xi32>
    %46 = arith.addi %17, %45 : vector<1x256xi32>
    %c0_i32_13 = arith.constant 0 : i32
    %47 = vector.broadcast %c0_i32_13 : i32 to vector<1x256xi32>
    %48 = arith.cmpi sge, %46, %47 : vector<1x256xi32>
    %c1_i32_14 = arith.constant 1 : i32
    %49 = vector.broadcast %c1_i32_14 : i32 to vector<1x256xi32>
    %50 = arith.addi %17, %49 : vector<1x256xi32>
    %c16_i32_15 = arith.constant 16 : i32
    %51 = vector.broadcast %c16_i32_15 : i32 to vector<1x256xi32>
    %52 = arith.cmpi slt, %50, %51 : vector<1x256xi32>
    %53 = arith.andi %48, %52 : vector<1x256xi1>
    %c2_i32 = arith.constant 2 : i32
    %54 = vector.broadcast %c2_i32 : i32 to vector<1x256xi32>
    %55 = arith.addi %17, %54 : vector<1x256xi32>
    %c0_i32_16 = arith.constant 0 : i32
    %56 = vector.broadcast %c0_i32_16 : i32 to vector<1x256xi32>
    %57 = arith.cmpi sge, %55, %56 : vector<1x256xi32>
    %c2_i32_17 = arith.constant 2 : i32
    %58 = vector.broadcast %c2_i32_17 : i32 to vector<1x256xi32>
    %59 = arith.addi %17, %58 : vector<1x256xi32>
    %c16_i32_18 = arith.constant 16 : i32
    %60 = vector.broadcast %c16_i32_18 : i32 to vector<1x256xi32>
    %61 = arith.cmpi slt, %59, %60 : vector<1x256xi32>
    %62 = arith.andi %57, %61 : vector<1x256xi1>
    %c3_i32 = arith.constant 3 : i32
    %63 = vector.broadcast %c3_i32 : i32 to vector<1x256xi32>
    %64 = arith.addi %17, %63 : vector<1x256xi32>
    %c0_i32_19 = arith.constant 0 : i32
    %65 = vector.broadcast %c0_i32_19 : i32 to vector<1x256xi32>
    %66 = arith.cmpi sge, %64, %65 : vector<1x256xi32>
    %c3_i32_20 = arith.constant 3 : i32
    %67 = vector.broadcast %c3_i32_20 : i32 to vector<1x256xi32>
    %68 = arith.addi %17, %67 : vector<1x256xi32>
    %c16_i32_21 = arith.constant 16 : i32
    %69 = vector.broadcast %c16_i32_21 : i32 to vector<1x256xi32>
    %70 = arith.cmpi slt, %68, %69 : vector<1x256xi32>
    %71 = arith.andi %66, %70 : vector<1x256xi1>
    %c0 = arith.constant 0 : index
    %c0_22 = arith.constant 0 : index
    %72 = vector.load %arg0[%c0, %c0_22] : memref<16x384xf32, #tpu.memory_space<vmem>>, vector<16x256xf32>
    %cst_23 = arith.constant 0.000000e+00 : f32
    %73 = vector.shape_cast %26 : vector<1x256xi1> to vector<1x256xi1>
    %74 = vector.broadcast %73 : vector<1x256xi1> to vector<16x256xi1>
    %75 = vector.broadcast %cst_23 : f32 to vector<16x256xf32>
    %76 = arith.select %74, %72, %75 : vector<16x256xi1>, vector<16x256xf32>
    %c0_24 = arith.constant 0 : index
    %c0_25 = arith.constant 0 : index
    %c0_26 = arith.constant 0 : index
    %77 = vector.load %arg1[%c0_24, %c0_25, %c0_26] : memref<49x16x16xf32, #tpu.memory_space<vmem>>, vector<1x16x16xf32>
    %78 = vector.shape_cast %77 : vector<1x16x16xf32> to vector<16x16xf32>
    %cst_27 = arith.constant dense<0.000000e+00> : vector<16x256xf32>
    %79 = tpu.matmul %78, %76, %cst_27 {dimension_numbers = #tpu.dot_dimension_numbers<[1], [0], [0], [1], [0, 0, 1, 1], [], []>} : vector<16x16xf32>, vector<16x256xf32>, vector<16x256xf32> -> vector<16x256xf32>
    %80 = arith.addf %0, %79 : vector<16x256xf32>
    %c0_28 = arith.constant 0 : index
    %c1 = arith.constant 1 : index
    %81 = vector.load %arg0[%c0_28, %c1] : memref<16x384xf32, #tpu.memory_space<vmem>>, vector<16x256xf32>
    %cst_29 = arith.constant 0.000000e+00 : f32
    %82 = vector.shape_cast %35 : vector<1x256xi1> to vector<1x256xi1>
    %83 = vector.broadcast %82 : vector<1x256xi1> to vector<16x256xi1>
    %84 = vector.broadcast %cst_29 : f32 to vector<16x256xf32>
    %85 = arith.select %83, %81, %84 : vector<16x256xi1>, vector<16x256xf32>
    %c1_30 = arith.constant 1 : index
    %c0_31 = arith.constant 0 : index
    %c0_32 = arith.constant 0 : index
    %86 = vector.load %arg1[%c1_30, %c0_31, %c0_32] : memref<49x16x16xf32, #tpu.memory_space<vmem>>, vector<1x16x16xf32>
    %87 = vector.shape_cast %86 : vector<1x16x16xf32> to vector<16x16xf32>
    %cst_33 = arith.constant dense<0.000000e+00> : vector<16x256xf32>
    %88 = tpu.matmul %87, %85, %cst_33 {dimension_numbers = #tpu.dot_dimension_numbers<[1], [0], [0], [1], [0, 0, 1, 1], [], []>} : vector<16x16xf32>, vector<16x256xf32>, vector<16x256xf32> -> vector<16x256xf32>
    %89 = arith.addf %80, %88 : vector<16x256xf32>
    %c0_34 = arith.constant 0 : index
    %c2 = arith.constant 2 : index
    %90 = vector.load %arg0[%c0_34, %c2] : memref<16x384xf32, #tpu.memory_space<vmem>>, vector<16x256xf32>
    %cst_35 = arith.constant 0.000000e+00 : f32
    %91 = vector.shape_cast %44 : vector<1x256xi1> to vector<1x256xi1>
    %92 = vector.broadcast %91 : vector<1x256xi1> to vector<16x256xi1>
    %93 = vector.broadcast %cst_35 : f32 to vector<16x256xf32>
    %94 = arith.select %92, %90, %93 : vector<16x256xi1>, vector<16x256xf32>
    %c2_36 = arith.constant 2 : index
    %c0_37 = arith.constant 0 : index
    %c0_38 = arith.constant 0 : index
    %95 = vector.load %arg1[%c2_36, %c0_37, %c0_38] : memref<49x16x16xf32, #tpu.memory_space<vmem>>, vector<1x16x16xf32>
    %96 = vector.shape_cast %95 : vector<1x16x16xf32> to vector<16x16xf32>
    %cst_39 = arith.constant dense<0.000000e+00> : vector<16x256xf32>
    %97 = tpu.matmul %96, %94, %cst_39 {dimension_numbers = #tpu.dot_dimension_numbers<[1], [0], [0], [1], [0, 0, 1, 1], [], []>} : vector<16x16xf32>, vector<16x256xf32>, vector<16x256xf32> -> vector<16x256xf32>
    %98 = arith.addf %89, %97 : vector<16x256xf32>
    %c0_40 = arith.constant 0 : index
    %c3 = arith.constant 3 : index
    %99 = vector.load %arg0[%c0_40, %c3] : memref<16x384xf32, #tpu.memory_space<vmem>>, vector<16x256xf32>
    %c3_41 = arith.constant 3 : index
    %c0_42 = arith.constant 0 : index
    %c0_43 = arith.constant 0 : index
    %100 = vector.load %arg1[%c3_41, %c0_42, %c0_43] : memref<49x16x16xf32, #tpu.memory_space<vmem>>, vector<1x16x16xf32>
    %101 = vector.shape_cast %100 : vector<1x16x16xf32> to vector<16x16xf32>
    %cst_44 = arith.constant dense<0.000000e+00> : vector<16x256xf32>
    %102 = tpu.matmul %101, %99, %cst_44 {dimension_numbers = #tpu.dot_dimension_numbers<[1], [0], [0], [1], [0, 0, 1, 1], [], []>} : vector<16x16xf32>, vector<16x256xf32>, vector<16x256xf32> -> vector<16x256xf32>
    %103 = arith.addf %98, %102 : vector<16x256xf32>
    %c0_45 = arith.constant 0 : index
    %c4 = arith.constant 4 : index
    %104 = vector.load %arg0[%c0_45, %c4] : memref<16x384xf32, #tpu.memory_space<vmem>>, vector<16x256xf32>
    %cst_46 = arith.constant 0.000000e+00 : f32
    %105 = vector.shape_cast %53 : vector<1x256xi1> to vector<1x256xi1>
    %106 = vector.broadcast %105 : vector<1x256xi1> to vector<16x256xi1>
    %107 = vector.broadcast %cst_46 : f32 to vector<16x256xf32>
    %108 = arith.select %106, %104, %107 : vector<16x256xi1>, vector<16x256xf32>
    %c4_47 = arith.constant 4 : index
    %c0_48 = arith.constant 0 : index
    %c0_49 = arith.constant 0 : index
    %109 = vector.load %arg1[%c4_47, %c0_48, %c0_49] : memref<49x16x16xf32, #tpu.memory_space<vmem>>, vector<1x16x16xf32>
    %110 = vector.shape_cast %109 : vector<1x16x16xf32> to vector<16x16xf32>
    %cst_50 = arith.constant dense<0.000000e+00> : vector<16x256xf32>
    %111 = tpu.matmul %110, %108, %cst_50 {dimension_numbers = #tpu.dot_dimension_numbers<[1], [0], [0], [1], [0, 0, 1, 1], [], []>} : vector<16x16xf32>, vector<16x256xf32>, vector<16x256xf32> -> vector<16x256xf32>
    %112 = arith.addf %103, %111 : vector<16x256xf32>
    %c0_51 = arith.constant 0 : index
    %c5 = arith.constant 5 : index
    %113 = vector.load %arg0[%c0_51, %c5] : memref<16x384xf32, #tpu.memory_space<vmem>>, vector<16x256xf32>
    %cst_52 = arith.constant 0.000000e+00 : f32
    %114 = vector.shape_cast %62 : vector<1x256xi1> to vector<1x256xi1>
    %115 = vector.broadcast %114 : vector<1x256xi1> to vector<16x256xi1>
    %116 = vector.broadcast %cst_52 : f32 to vector<16x256xf32>
    %117 = arith.select %115, %113, %116 : vector<16x256xi1>, vector<16x256xf32>
    %c5_53 = arith.constant 5 : index
    %c0_54 = arith.constant 0 : index
    %c0_55 = arith.constant 0 : index
    %118 = vector.load %arg1[%c5_53, %c0_54, %c0_55] : memref<49x16x16xf32, #tpu.memory_space<vmem>>, vector<1x16x16xf32>
    %119 = vector.shape_cast %118 : vector<1x16x16xf32> to vector<16x16xf32>
    %cst_56 = arith.constant dense<0.000000e+00> : vector<16x256xf32>
    %120 = tpu.matmul %119, %117, %cst_56 {dimension_numbers = #tpu.dot_dimension_numbers<[1], [0], [0], [1], [0, 0, 1, 1], [], []>} : vector<16x16xf32>, vector<16x256xf32>, vector<16x256xf32> -> vector<16x256xf32>
    %121 = arith.addf %112, %120 : vector<16x256xf32>
    %c0_57 = arith.constant 0 : index
    %c6 = arith.constant 6 : index
    %122 = vector.load %arg0[%c0_57, %c6] : memref<16x384xf32, #tpu.memory_space<vmem>>, vector<16x256xf32>
    %cst_58 = arith.constant 0.000000e+00 : f32
    %123 = vector.shape_cast %71 : vector<1x256xi1> to vector<1x256xi1>
    %124 = vector.broadcast %123 : vector<1x256xi1> to vector<16x256xi1>
    %125 = vector.broadcast %cst_58 : f32 to vector<16x256xf32>
    %126 = arith.select %124, %122, %125 : vector<16x256xi1>, vector<16x256xf32>
    %c6_59 = arith.constant 6 : index
    %c0_60 = arith.constant 0 : index
    %c0_61 = arith.constant 0 : index
    %127 = vector.load %arg1[%c6_59, %c0_60, %c0_61] : memref<49x16x16xf32, #tpu.memory_space<vmem>>, vector<1x16x16xf32>
    %128 = vector.shape_cast %127 : vector<1x16x16xf32> to vector<16x16xf32>
    %cst_62 = arith.constant dense<0.000000e+00> : vector<16x256xf32>
    %129 = tpu.matmul %128, %126, %cst_62 {dimension_numbers = #tpu.dot_dimension_numbers<[1], [0], [0], [1], [0, 0, 1, 1], [], []>} : vector<16x16xf32>, vector<16x256xf32>, vector<16x256xf32> -> vector<16x256xf32>
    %130 = arith.addf %121, %129 : vector<16x256xf32>
    %c0_63 = arith.constant 0 : index
    %c16 = arith.constant 16 : index
    %131 = vector.load %arg0[%c0_63, %c16] : memref<16x384xf32, #tpu.memory_space<vmem>>, vector<16x256xf32>
    %cst_64 = arith.constant 0.000000e+00 : f32
    %132 = vector.shape_cast %26 : vector<1x256xi1> to vector<1x256xi1>
    %133 = vector.broadcast %132 : vector<1x256xi1> to vector<16x256xi1>
    %134 = vector.broadcast %cst_64 : f32 to vector<16x256xf32>
    %135 = arith.select %133, %131, %134 : vector<16x256xi1>, vector<16x256xf32>
    %c7 = arith.constant 7 : index
    %c0_65 = arith.constant 0 : index
    %c0_66 = arith.constant 0 : index
    %136 = vector.load %arg1[%c7, %c0_65, %c0_66] : memref<49x16x16xf32, #tpu.memory_space<vmem>>, vector<1x16x16xf32>
    %137 = vector.shape_cast %136 : vector<1x16x16xf32> to vector<16x16xf32>
    %cst_67 = arith.constant dense<0.000000e+00> : vector<16x256xf32>
    %138 = tpu.matmul %137, %135, %cst_67 {dimension_numbers = #tpu.dot_dimension_numbers<[1], [0], [0], [1], [0, 0, 1, 1], [], []>} : vector<16x16xf32>, vector<16x256xf32>, vector<16x256xf32> -> vector<16x256xf32>
    %139 = arith.addf %130, %138 : vector<16x256xf32>
    %c0_68 = arith.constant 0 : index
    %c17 = arith.constant 17 : index
    %140 = vector.load %arg0[%c0_68, %c17] : memref<16x384xf32, #tpu.memory_space<vmem>>, vector<16x256xf32>
    %cst_69 = arith.constant 0.000000e+00 : f32
    %141 = vector.shape_cast %35 : vector<1x256xi1> to vector<1x256xi1>
    %142 = vector.broadcast %141 : vector<1x256xi1> to vector<16x256xi1>
    %143 = vector.broadcast %cst_69 : f32 to vector<16x256xf32>
    %144 = arith.select %142, %140, %143 : vector<16x256xi1>, vector<16x256xf32>
    %c8 = arith.constant 8 : index
    %c0_70 = arith.constant 0 : index
    %c0_71 = arith.constant 0 : index
    %145 = vector.load %arg1[%c8, %c0_70, %c0_71] : memref<49x16x16xf32, #tpu.memory_space<vmem>>, vector<1x16x16xf32>
    %146 = vector.shape_cast %145 : vector<1x16x16xf32> to vector<16x16xf32>
    %cst_72 = arith.constant dense<0.000000e+00> : vector<16x256xf32>
    %147 = tpu.matmul %146, %144, %cst_72 {dimension_numbers = #tpu.dot_dimension_numbers<[1], [0], [0], [1], [0, 0, 1, 1], [], []>} : vector<16x16xf32>, vector<16x256xf32>, vector<16x256xf32> -> vector<16x256xf32>
    %148 = arith.addf %139, %147 : vector<16x256xf32>
    %c0_73 = arith.constant 0 : index
    %c18 = arith.constant 18 : index
    %149 = vector.load %arg0[%c0_73, %c18] : memref<16x384xf32, #tpu.memory_space<vmem>>, vector<16x256xf32>
    %cst_74 = arith.constant 0.000000e+00 : f32
    %150 = vector.shape_cast %44 : vector<1x256xi1> to vector<1x256xi1>
    %151 = vector.broadcast %150 : vector<1x256xi1> to vector<16x256xi1>
    %152 = vector.broadcast %cst_74 : f32 to vector<16x256xf32>
    %153 = arith.select %151, %149, %152 : vector<16x256xi1>, vector<16x256xf32>
    %c9 = arith.constant 9 : index
    %c0_75 = arith.constant 0 : index
    %c0_76 = arith.constant 0 : index
    %154 = vector.load %arg1[%c9, %c0_75, %c0_76] : memref<49x16x16xf32, #tpu.memory_space<vmem>>, vector<1x16x16xf32>
    %155 = vector.shape_cast %154 : vector<1x16x16xf32> to vector<16x16xf32>
    %cst_77 = arith.constant dense<0.000000e+00> : vector<16x256xf32>
    %156 = tpu.matmul %155, %153, %cst_77 {dimension_numbers = #tpu.dot_dimension_numbers<[1], [0], [0], [1], [0, 0, 1, 1], [], []>} : vector<16x16xf32>, vector<16x256xf32>, vector<16x256xf32> -> vector<16x256xf32>
    %157 = arith.addf %148, %156 : vector<16x256xf32>
    %c0_78 = arith.constant 0 : index
    %c19 = arith.constant 19 : index
    %158 = vector.load %arg0[%c0_78, %c19] : memref<16x384xf32, #tpu.memory_space<vmem>>, vector<16x256xf32>
    %c10 = arith.constant 10 : index
    %c0_79 = arith.constant 0 : index
    %c0_80 = arith.constant 0 : index
    %159 = vector.load %arg1[%c10, %c0_79, %c0_80] : memref<49x16x16xf32, #tpu.memory_space<vmem>>, vector<1x16x16xf32>
    %160 = vector.shape_cast %159 : vector<1x16x16xf32> to vector<16x16xf32>
    %cst_81 = arith.constant dense<0.000000e+00> : vector<16x256xf32>
    %161 = tpu.matmul %160, %158, %cst_81 {dimension_numbers = #tpu.dot_dimension_numbers<[1], [0], [0], [1], [0, 0, 1, 1], [], []>} : vector<16x16xf32>, vector<16x256xf32>, vector<16x256xf32> -> vector<16x256xf32>
    %162 = arith.addf %157, %161 : vector<16x256xf32>
    %c0_82 = arith.constant 0 : index
    %c20 = arith.constant 20 : index
    %163 = vector.load %arg0[%c0_82, %c20] : memref<16x384xf32, #tpu.memory_space<vmem>>, vector<16x256xf32>
    %cst_83 = arith.constant 0.000000e+00 : f32
    %164 = vector.shape_cast %53 : vector<1x256xi1> to vector<1x256xi1>
    %165 = vector.broadcast %164 : vector<1x256xi1> to vector<16x256xi1>
    %166 = vector.broadcast %cst_83 : f32 to vector<16x256xf32>
    %167 = arith.select %165, %163, %166 : vector<16x256xi1>, vector<16x256xf32>
    %c11 = arith.constant 11 : index
    %c0_84 = arith.constant 0 : index
    %c0_85 = arith.constant 0 : index
    %168 = vector.load %arg1[%c11, %c0_84, %c0_85] : memref<49x16x16xf32, #tpu.memory_space<vmem>>, vector<1x16x16xf32>
    %169 = vector.shape_cast %168 : vector<1x16x16xf32> to vector<16x16xf32>
    %cst_86 = arith.constant dense<0.000000e+00> : vector<16x256xf32>
    %170 = tpu.matmul %169, %167, %cst_86 {dimension_numbers = #tpu.dot_dimension_numbers<[1], [0], [0], [1], [0, 0, 1, 1], [], []>} : vector<16x16xf32>, vector<16x256xf32>, vector<16x256xf32> -> vector<16x256xf32>
    %171 = arith.addf %162, %170 : vector<16x256xf32>
    %c0_87 = arith.constant 0 : index
    %c21 = arith.constant 21 : index
    %172 = vector.load %arg0[%c0_87, %c21] : memref<16x384xf32, #tpu.memory_space<vmem>>, vector<16x256xf32>
    %cst_88 = arith.constant 0.000000e+00 : f32
    %173 = vector.shape_cast %62 : vector<1x256xi1> to vector<1x256xi1>
    %174 = vector.broadcast %173 : vector<1x256xi1> to vector<16x256xi1>
    %175 = vector.broadcast %cst_88 : f32 to vector<16x256xf32>
    %176 = arith.select %174, %172, %175 : vector<16x256xi1>, vector<16x256xf32>
    %c12 = arith.constant 12 : index
    %c0_89 = arith.constant 0 : index
    %c0_90 = arith.constant 0 : index
    %177 = vector.load %arg1[%c12, %c0_89, %c0_90] : memref<49x16x16xf32, #tpu.memory_space<vmem>>, vector<1x16x16xf32>
    %178 = vector.shape_cast %177 : vector<1x16x16xf32> to vector<16x16xf32>
    %cst_91 = arith.constant dense<0.000000e+00> : vector<16x256xf32>
    %179 = tpu.matmul %178, %176, %cst_91 {dimension_numbers = #tpu.dot_dimension_numbers<[1], [0], [0], [1], [0, 0, 1, 1], [], []>} : vector<16x16xf32>, vector<16x256xf32>, vector<16x256xf32> -> vector<16x256xf32>
    %180 = arith.addf %171, %179 : vector<16x256xf32>
    %c0_92 = arith.constant 0 : index
    %c22 = arith.constant 22 : index
    %181 = vector.load %arg0[%c0_92, %c22] : memref<16x384xf32, #tpu.memory_space<vmem>>, vector<16x256xf32>
    %cst_93 = arith.constant 0.000000e+00 : f32
    %182 = vector.shape_cast %71 : vector<1x256xi1> to vector<1x256xi1>
    %183 = vector.broadcast %182 : vector<1x256xi1> to vector<16x256xi1>
    %184 = vector.broadcast %cst_93 : f32 to vector<16x256xf32>
    %185 = arith.select %183, %181, %184 : vector<16x256xi1>, vector<16x256xf32>
    %c13 = arith.constant 13 : index
    %c0_94 = arith.constant 0 : index
    %c0_95 = arith.constant 0 : index
    %186 = vector.load %arg1[%c13, %c0_94, %c0_95] : memref<49x16x16xf32, #tpu.memory_space<vmem>>, vector<1x16x16xf32>
    %187 = vector.shape_cast %186 : vector<1x16x16xf32> to vector<16x16xf32>
    %cst_96 = arith.constant dense<0.000000e+00> : vector<16x256xf32>
    %188 = tpu.matmul %187, %185, %cst_96 {dimension_numbers = #tpu.dot_dimension_numbers<[1], [0], [0], [1], [0, 0, 1, 1], [], []>} : vector<16x16xf32>, vector<16x256xf32>, vector<16x256xf32> -> vector<16x256xf32>
    %189 = arith.addf %180, %188 : vector<16x256xf32>
    %c0_97 = arith.constant 0 : index
    %c32 = arith.constant 32 : index
    %190 = vector.load %arg0[%c0_97, %c32] : memref<16x384xf32, #tpu.memory_space<vmem>>, vector<16x256xf32>
    %cst_98 = arith.constant 0.000000e+00 : f32
    %191 = vector.shape_cast %26 : vector<1x256xi1> to vector<1x256xi1>
    %192 = vector.broadcast %191 : vector<1x256xi1> to vector<16x256xi1>
    %193 = vector.broadcast %cst_98 : f32 to vector<16x256xf32>
    %194 = arith.select %192, %190, %193 : vector<16x256xi1>, vector<16x256xf32>
    %c14 = arith.constant 14 : index
    %c0_99 = arith.constant 0 : index
    %c0_100 = arith.constant 0 : index
    %195 = vector.load %arg1[%c14, %c0_99, %c0_100] : memref<49x16x16xf32, #tpu.memory_space<vmem>>, vector<1x16x16xf32>
    %196 = vector.shape_cast %195 : vector<1x16x16xf32> to vector<16x16xf32>
    %cst_101 = arith.constant dense<0.000000e+00> : vector<16x256xf32>
    %197 = tpu.matmul %196, %194, %cst_101 {dimension_numbers = #tpu.dot_dimension_numbers<[1], [0], [0], [1], [0, 0, 1, 1], [], []>} : vector<16x16xf32>, vector<16x256xf32>, vector<16x256xf32> -> vector<16x256xf32>
    %198 = arith.addf %189, %197 : vector<16x256xf32>
    %c0_102 = arith.constant 0 : index
    %c33 = arith.constant 33 : index
    %199 = vector.load %arg0[%c0_102, %c33] : memref<16x384xf32, #tpu.memory_space<vmem>>, vector<16x256xf32>
    %cst_103 = arith.constant 0.000000e+00 : f32
    %200 = vector.shape_cast %35 : vector<1x256xi1> to vector<1x256xi1>
    %201 = vector.broadcast %200 : vector<1x256xi1> to vector<16x256xi1>
    %202 = vector.broadcast %cst_103 : f32 to vector<16x256xf32>
    %203 = arith.select %201, %199, %202 : vector<16x256xi1>, vector<16x256xf32>
    %c15 = arith.constant 15 : index
    %c0_104 = arith.constant 0 : index
    %c0_105 = arith.constant 0 : index
    %204 = vector.load %arg1[%c15, %c0_104, %c0_105] : memref<49x16x16xf32, #tpu.memory_space<vmem>>, vector<1x16x16xf32>
    %205 = vector.shape_cast %204 : vector<1x16x16xf32> to vector<16x16xf32>
    %cst_106 = arith.constant dense<0.000000e+00> : vector<16x256xf32>
    %206 = tpu.matmul %205, %203, %cst_106 {dimension_numbers = #tpu.dot_dimension_numbers<[1], [0], [0], [1], [0, 0, 1, 1], [], []>} : vector<16x16xf32>, vector<16x256xf32>, vector<16x256xf32> -> vector<16x256xf32>
    %207 = arith.addf %198, %206 : vector<16x256xf32>
    %c0_107 = arith.constant 0 : index
    %c34 = arith.constant 34 : index
    %208 = vector.load %arg0[%c0_107, %c34] : memref<16x384xf32, #tpu.memory_space<vmem>>, vector<16x256xf32>
    %cst_108 = arith.constant 0.000000e+00 : f32
    %209 = vector.shape_cast %44 : vector<1x256xi1> to vector<1x256xi1>
    %210 = vector.broadcast %209 : vector<1x256xi1> to vector<16x256xi1>
    %211 = vector.broadcast %cst_108 : f32 to vector<16x256xf32>
    %212 = arith.select %210, %208, %211 : vector<16x256xi1>, vector<16x256xf32>
    %c16_109 = arith.constant 16 : index
    %c0_110 = arith.constant 0 : index
    %c0_111 = arith.constant 0 : index
    %213 = vector.load %arg1[%c16_109, %c0_110, %c0_111] : memref<49x16x16xf32, #tpu.memory_space<vmem>>, vector<1x16x16xf32>
    %214 = vector.shape_cast %213 : vector<1x16x16xf32> to vector<16x16xf32>
    %cst_112 = arith.constant dense<0.000000e+00> : vector<16x256xf32>
    %215 = tpu.matmul %214, %212, %cst_112 {dimension_numbers = #tpu.dot_dimension_numbers<[1], [0], [0], [1], [0, 0, 1, 1], [], []>} : vector<16x16xf32>, vector<16x256xf32>, vector<16x256xf32> -> vector<16x256xf32>
    %216 = arith.addf %207, %215 : vector<16x256xf32>
    %c0_113 = arith.constant 0 : index
    %c35 = arith.constant 35 : index
    %217 = vector.load %arg0[%c0_113, %c35] : memref<16x384xf32, #tpu.memory_space<vmem>>, vector<16x256xf32>
    %c17_114 = arith.constant 17 : index
    %c0_115 = arith.constant 0 : index
    %c0_116 = arith.constant 0 : index
    %218 = vector.load %arg1[%c17_114, %c0_115, %c0_116] : memref<49x16x16xf32, #tpu.memory_space<vmem>>, vector<1x16x16xf32>
    %219 = vector.shape_cast %218 : vector<1x16x16xf32> to vector<16x16xf32>
    %cst_117 = arith.constant dense<0.000000e+00> : vector<16x256xf32>
    %220 = tpu.matmul %219, %217, %cst_117 {dimension_numbers = #tpu.dot_dimension_numbers<[1], [0], [0], [1], [0, 0, 1, 1], [], []>} : vector<16x16xf32>, vector<16x256xf32>, vector<16x256xf32> -> vector<16x256xf32>
    %221 = arith.addf %216, %220 : vector<16x256xf32>
    %c0_118 = arith.constant 0 : index
    %c36 = arith.constant 36 : index
    %222 = vector.load %arg0[%c0_118, %c36] : memref<16x384xf32, #tpu.memory_space<vmem>>, vector<16x256xf32>
    %cst_119 = arith.constant 0.000000e+00 : f32
    %223 = vector.shape_cast %53 : vector<1x256xi1> to vector<1x256xi1>
    %224 = vector.broadcast %223 : vector<1x256xi1> to vector<16x256xi1>
    %225 = vector.broadcast %cst_119 : f32 to vector<16x256xf32>
    %226 = arith.select %224, %222, %225 : vector<16x256xi1>, vector<16x256xf32>
    %c18_120 = arith.constant 18 : index
    %c0_121 = arith.constant 0 : index
    %c0_122 = arith.constant 0 : index
    %227 = vector.load %arg1[%c18_120, %c0_121, %c0_122] : memref<49x16x16xf32, #tpu.memory_space<vmem>>, vector<1x16x16xf32>
    %228 = vector.shape_cast %227 : vector<1x16x16xf32> to vector<16x16xf32>
    %cst_123 = arith.constant dense<0.000000e+00> : vector<16x256xf32>
    %229 = tpu.matmul %228, %226, %cst_123 {dimension_numbers = #tpu.dot_dimension_numbers<[1], [0], [0], [1], [0, 0, 1, 1], [], []>} : vector<16x16xf32>, vector<16x256xf32>, vector<16x256xf32> -> vector<16x256xf32>
    %230 = arith.addf %221, %229 : vector<16x256xf32>
    %c0_124 = arith.constant 0 : index
    %c37 = arith.constant 37 : index
    %231 = vector.load %arg0[%c0_124, %c37] : memref<16x384xf32, #tpu.memory_space<vmem>>, vector<16x256xf32>
    %cst_125 = arith.constant 0.000000e+00 : f32
    %232 = vector.shape_cast %62 : vector<1x256xi1> to vector<1x256xi1>
    %233 = vector.broadcast %232 : vector<1x256xi1> to vector<16x256xi1>
    %234 = vector.broadcast %cst_125 : f32 to vector<16x256xf32>
    %235 = arith.select %233, %231, %234 : vector<16x256xi1>, vector<16x256xf32>
    %c19_126 = arith.constant 19 : index
    %c0_127 = arith.constant 0 : index
    %c0_128 = arith.constant 0 : index
    %236 = vector.load %arg1[%c19_126, %c0_127, %c0_128] : memref<49x16x16xf32, #tpu.memory_space<vmem>>, vector<1x16x16xf32>
    %237 = vector.shape_cast %236 : vector<1x16x16xf32> to vector<16x16xf32>
    %cst_129 = arith.constant dense<0.000000e+00> : vector<16x256xf32>
    %238 = tpu.matmul %237, %235, %cst_129 {dimension_numbers = #tpu.dot_dimension_numbers<[1], [0], [0], [1], [0, 0, 1, 1], [], []>} : vector<16x16xf32>, vector<16x256xf32>, vector<16x256xf32> -> vector<16x256xf32>
    %239 = arith.addf %230, %238 : vector<16x256xf32>
    %c0_130 = arith.constant 0 : index
    %c38 = arith.constant 38 : index
    %240 = vector.load %arg0[%c0_130, %c38] : memref<16x384xf32, #tpu.memory_space<vmem>>, vector<16x256xf32>
    %cst_131 = arith.constant 0.000000e+00 : f32
    %241 = vector.shape_cast %71 : vector<1x256xi1> to vector<1x256xi1>
    %242 = vector.broadcast %241 : vector<1x256xi1> to vector<16x256xi1>
    %243 = vector.broadcast %cst_131 : f32 to vector<16x256xf32>
    %244 = arith.select %242, %240, %243 : vector<16x256xi1>, vector<16x256xf32>
    %c20_132 = arith.constant 20 : index
    %c0_133 = arith.constant 0 : index
    %c0_134 = arith.constant 0 : index
    %245 = vector.load %arg1[%c20_132, %c0_133, %c0_134] : memref<49x16x16xf32, #tpu.memory_space<vmem>>, vector<1x16x16xf32>
    %246 = vector.shape_cast %245 : vector<1x16x16xf32> to vector<16x16xf32>
    %cst_135 = arith.constant dense<0.000000e+00> : vector<16x256xf32>
    %247 = tpu.matmul %246, %244, %cst_135 {dimension_numbers = #tpu.dot_dimension_numbers<[1], [0], [0], [1], [0, 0, 1, 1], [], []>} : vector<16x16xf32>, vector<16x256xf32>, vector<16x256xf32> -> vector<16x256xf32>
    %248 = arith.addf %239, %247 : vector<16x256xf32>
    %c0_136 = arith.constant 0 : index
    %c48 = arith.constant 48 : index
    %249 = vector.load %arg0[%c0_136, %c48] : memref<16x384xf32, #tpu.memory_space<vmem>>, vector<16x256xf32>
    %cst_137 = arith.constant 0.000000e+00 : f32
    %250 = vector.shape_cast %26 : vector<1x256xi1> to vector<1x256xi1>
    %251 = vector.broadcast %250 : vector<1x256xi1> to vector<16x256xi1>
    %252 = vector.broadcast %cst_137 : f32 to vector<16x256xf32>
    %253 = arith.select %251, %249, %252 : vector<16x256xi1>, vector<16x256xf32>
    %c21_138 = arith.constant 21 : index
    %c0_139 = arith.constant 0 : index
    %c0_140 = arith.constant 0 : index
    %254 = vector.load %arg1[%c21_138, %c0_139, %c0_140] : memref<49x16x16xf32, #tpu.memory_space<vmem>>, vector<1x16x16xf32>
    %255 = vector.shape_cast %254 : vector<1x16x16xf32> to vector<16x16xf32>
    %cst_141 = arith.constant dense<0.000000e+00> : vector<16x256xf32>
    %256 = tpu.matmul %255, %253, %cst_141 {dimension_numbers = #tpu.dot_dimension_numbers<[1], [0], [0], [1], [0, 0, 1, 1], [], []>} : vector<16x16xf32>, vector<16x256xf32>, vector<16x256xf32> -> vector<16x256xf32>
    %257 = arith.addf %248, %256 : vector<16x256xf32>
    %c0_142 = arith.constant 0 : index
    %c49 = arith.constant 49 : index
    %258 = vector.load %arg0[%c0_142, %c49] : memref<16x384xf32, #tpu.memory_space<vmem>>, vector<16x256xf32>
    %cst_143 = arith.constant 0.000000e+00 : f32
    %259 = vector.shape_cast %35 : vector<1x256xi1> to vector<1x256xi1>
    %260 = vector.broadcast %259 : vector<1x256xi1> to vector<16x256xi1>
    %261 = vector.broadcast %cst_143 : f32 to vector<16x256xf32>
    %262 = arith.select %260, %258, %261 : vector<16x256xi1>, vector<16x256xf32>
    %c22_144 = arith.constant 22 : index
    %c0_145 = arith.constant 0 : index
    %c0_146 = arith.constant 0 : index
    %263 = vector.load %arg1[%c22_144, %c0_145, %c0_146] : memref<49x16x16xf32, #tpu.memory_space<vmem>>, vector<1x16x16xf32>
    %264 = vector.shape_cast %263 : vector<1x16x16xf32> to vector<16x16xf32>
    %cst_147 = arith.constant dense<0.000000e+00> : vector<16x256xf32>
    %265 = tpu.matmul %264, %262, %cst_147 {dimension_numbers = #tpu.dot_dimension_numbers<[1], [0], [0], [1], [0, 0, 1, 1], [], []>} : vector<16x16xf32>, vector<16x256xf32>, vector<16x256xf32> -> vector<16x256xf32>
    %266 = arith.addf %257, %265 : vector<16x256xf32>
    %c0_148 = arith.constant 0 : index
    %c50 = arith.constant 50 : index
    %267 = vector.load %arg0[%c0_148, %c50] : memref<16x384xf32, #tpu.memory_space<vmem>>, vector<16x256xf32>
    %cst_149 = arith.constant 0.000000e+00 : f32
    %268 = vector.shape_cast %44 : vector<1x256xi1> to vector<1x256xi1>
    %269 = vector.broadcast %268 : vector<1x256xi1> to vector<16x256xi1>
    %270 = vector.broadcast %cst_149 : f32 to vector<16x256xf32>
    %271 = arith.select %269, %267, %270 : vector<16x256xi1>, vector<16x256xf32>
    %c23 = arith.constant 23 : index
    %c0_150 = arith.constant 0 : index
    %c0_151 = arith.constant 0 : index
    %272 = vector.load %arg1[%c23, %c0_150, %c0_151] : memref<49x16x16xf32, #tpu.memory_space<vmem>>, vector<1x16x16xf32>
    %273 = vector.shape_cast %272 : vector<1x16x16xf32> to vector<16x16xf32>
    %cst_152 = arith.constant dense<0.000000e+00> : vector<16x256xf32>
    %274 = tpu.matmul %273, %271, %cst_152 {dimension_numbers = #tpu.dot_dimension_numbers<[1], [0], [0], [1], [0, 0, 1, 1], [], []>} : vector<16x16xf32>, vector<16x256xf32>, vector<16x256xf32> -> vector<16x256xf32>
    %275 = arith.addf %266, %274 : vector<16x256xf32>
    %c0_153 = arith.constant 0 : index
    %c51 = arith.constant 51 : index
    %276 = vector.load %arg0[%c0_153, %c51] : memref<16x384xf32, #tpu.memory_space<vmem>>, vector<16x256xf32>
    %c24 = arith.constant 24 : index
    %c0_154 = arith.constant 0 : index
    %c0_155 = arith.constant 0 : index
    %277 = vector.load %arg1[%c24, %c0_154, %c0_155] : memref<49x16x16xf32, #tpu.memory_space<vmem>>, vector<1x16x16xf32>
    %278 = vector.shape_cast %277 : vector<1x16x16xf32> to vector<16x16xf32>
    %cst_156 = arith.constant dense<0.000000e+00> : vector<16x256xf32>
    %279 = tpu.matmul %278, %276, %cst_156 {dimension_numbers = #tpu.dot_dimension_numbers<[1], [0], [0], [1], [0, 0, 1, 1], [], []>} : vector<16x16xf32>, vector<16x256xf32>, vector<16x256xf32> -> vector<16x256xf32>
    %280 = arith.addf %275, %279 : vector<16x256xf32>
    %c0_157 = arith.constant 0 : index
    %c52 = arith.constant 52 : index
    %281 = vector.load %arg0[%c0_157, %c52] : memref<16x384xf32, #tpu.memory_space<vmem>>, vector<16x256xf32>
    %cst_158 = arith.constant 0.000000e+00 : f32
    %282 = vector.shape_cast %53 : vector<1x256xi1> to vector<1x256xi1>
    %283 = vector.broadcast %282 : vector<1x256xi1> to vector<16x256xi1>
    %284 = vector.broadcast %cst_158 : f32 to vector<16x256xf32>
    %285 = arith.select %283, %281, %284 : vector<16x256xi1>, vector<16x256xf32>
    %c25 = arith.constant 25 : index
    %c0_159 = arith.constant 0 : index
    %c0_160 = arith.constant 0 : index
    %286 = vector.load %arg1[%c25, %c0_159, %c0_160] : memref<49x16x16xf32, #tpu.memory_space<vmem>>, vector<1x16x16xf32>
    %287 = vector.shape_cast %286 : vector<1x16x16xf32> to vector<16x16xf32>
    %cst_161 = arith.constant dense<0.000000e+00> : vector<16x256xf32>
    %288 = tpu.matmul %287, %285, %cst_161 {dimension_numbers = #tpu.dot_dimension_numbers<[1], [0], [0], [1], [0, 0, 1, 1], [], []>} : vector<16x16xf32>, vector<16x256xf32>, vector<16x256xf32> -> vector<16x256xf32>
    %289 = arith.addf %280, %288 : vector<16x256xf32>
    %c0_162 = arith.constant 0 : index
    %c53 = arith.constant 53 : index
    %290 = vector.load %arg0[%c0_162, %c53] : memref<16x384xf32, #tpu.memory_space<vmem>>, vector<16x256xf32>
    %cst_163 = arith.constant 0.000000e+00 : f32
    %291 = vector.shape_cast %62 : vector<1x256xi1> to vector<1x256xi1>
    %292 = vector.broadcast %291 : vector<1x256xi1> to vector<16x256xi1>
    %293 = vector.broadcast %cst_163 : f32 to vector<16x256xf32>
    %294 = arith.select %292, %290, %293 : vector<16x256xi1>, vector<16x256xf32>
    %c26 = arith.constant 26 : index
    %c0_164 = arith.constant 0 : index
    %c0_165 = arith.constant 0 : index
    %295 = vector.load %arg1[%c26, %c0_164, %c0_165] : memref<49x16x16xf32, #tpu.memory_space<vmem>>, vector<1x16x16xf32>
    %296 = vector.shape_cast %295 : vector<1x16x16xf32> to vector<16x16xf32>
    %cst_166 = arith.constant dense<0.000000e+00> : vector<16x256xf32>
    %297 = tpu.matmul %296, %294, %cst_166 {dimension_numbers = #tpu.dot_dimension_numbers<[1], [0], [0], [1], [0, 0, 1, 1], [], []>} : vector<16x16xf32>, vector<16x256xf32>, vector<16x256xf32> -> vector<16x256xf32>
    %298 = arith.addf %289, %297 : vector<16x256xf32>
    %c0_167 = arith.constant 0 : index
    %c54 = arith.constant 54 : index
    %299 = vector.load %arg0[%c0_167, %c54] : memref<16x384xf32, #tpu.memory_space<vmem>>, vector<16x256xf32>
    %cst_168 = arith.constant 0.000000e+00 : f32
    %300 = vector.shape_cast %71 : vector<1x256xi1> to vector<1x256xi1>
    %301 = vector.broadcast %300 : vector<1x256xi1> to vector<16x256xi1>
    %302 = vector.broadcast %cst_168 : f32 to vector<16x256xf32>
    %303 = arith.select %301, %299, %302 : vector<16x256xi1>, vector<16x256xf32>
    %c27 = arith.constant 27 : index
    %c0_169 = arith.constant 0 : index
    %c0_170 = arith.constant 0 : index
    %304 = vector.load %arg1[%c27, %c0_169, %c0_170] : memref<49x16x16xf32, #tpu.memory_space<vmem>>, vector<1x16x16xf32>
    %305 = vector.shape_cast %304 : vector<1x16x16xf32> to vector<16x16xf32>
    %cst_171 = arith.constant dense<0.000000e+00> : vector<16x256xf32>
    %306 = tpu.matmul %305, %303, %cst_171 {dimension_numbers = #tpu.dot_dimension_numbers<[1], [0], [0], [1], [0, 0, 1, 1], [], []>} : vector<16x16xf32>, vector<16x256xf32>, vector<16x256xf32> -> vector<16x256xf32>
    %307 = arith.addf %298, %306 : vector<16x256xf32>
    %c0_172 = arith.constant 0 : index
    %c64 = arith.constant 64 : index
    %308 = vector.load %arg0[%c0_172, %c64] : memref<16x384xf32, #tpu.memory_space<vmem>>, vector<16x256xf32>
    %cst_173 = arith.constant 0.000000e+00 : f32
    %309 = vector.shape_cast %26 : vector<1x256xi1> to vector<1x256xi1>
    %310 = vector.broadcast %309 : vector<1x256xi1> to vector<16x256xi1>
    %311 = vector.broadcast %cst_173 : f32 to vector<16x256xf32>
    %312 = arith.select %310, %308, %311 : vector<16x256xi1>, vector<16x256xf32>
    %c28 = arith.constant 28 : index
    %c0_174 = arith.constant 0 : index
    %c0_175 = arith.constant 0 : index
    %313 = vector.load %arg1[%c28, %c0_174, %c0_175] : memref<49x16x16xf32, #tpu.memory_space<vmem>>, vector<1x16x16xf32>
    %314 = vector.shape_cast %313 : vector<1x16x16xf32> to vector<16x16xf32>
    %cst_176 = arith.constant dense<0.000000e+00> : vector<16x256xf32>
    %315 = tpu.matmul %314, %312, %cst_176 {dimension_numbers = #tpu.dot_dimension_numbers<[1], [0], [0], [1], [0, 0, 1, 1], [], []>} : vector<16x16xf32>, vector<16x256xf32>, vector<16x256xf32> -> vector<16x256xf32>
    %316 = arith.addf %307, %315 : vector<16x256xf32>
    %c0_177 = arith.constant 0 : index
    %c65 = arith.constant 65 : index
    %317 = vector.load %arg0[%c0_177, %c65] : memref<16x384xf32, #tpu.memory_space<vmem>>, vector<16x256xf32>
    %cst_178 = arith.constant 0.000000e+00 : f32
    %318 = vector.shape_cast %35 : vector<1x256xi1> to vector<1x256xi1>
    %319 = vector.broadcast %318 : vector<1x256xi1> to vector<16x256xi1>
    %320 = vector.broadcast %cst_178 : f32 to vector<16x256xf32>
    %321 = arith.select %319, %317, %320 : vector<16x256xi1>, vector<16x256xf32>
    %c29 = arith.constant 29 : index
    %c0_179 = arith.constant 0 : index
    %c0_180 = arith.constant 0 : index
    %322 = vector.load %arg1[%c29, %c0_179, %c0_180] : memref<49x16x16xf32, #tpu.memory_space<vmem>>, vector<1x16x16xf32>
    %323 = vector.shape_cast %322 : vector<1x16x16xf32> to vector<16x16xf32>
    %cst_181 = arith.constant dense<0.000000e+00> : vector<16x256xf32>
    %324 = tpu.matmul %323, %321, %cst_181 {dimension_numbers = #tpu.dot_dimension_numbers<[1], [0], [0], [1], [0, 0, 1, 1], [], []>} : vector<16x16xf32>, vector<16x256xf32>, vector<16x256xf32> -> vector<16x256xf32>
    %325 = arith.addf %316, %324 : vector<16x256xf32>
    %c0_182 = arith.constant 0 : index
    %c66 = arith.constant 66 : index
    %326 = vector.load %arg0[%c0_182, %c66] : memref<16x384xf32, #tpu.memory_space<vmem>>, vector<16x256xf32>
    %cst_183 = arith.constant 0.000000e+00 : f32
    %327 = vector.shape_cast %44 : vector<1x256xi1> to vector<1x256xi1>
    %328 = vector.broadcast %327 : vector<1x256xi1> to vector<16x256xi1>
    %329 = vector.broadcast %cst_183 : f32 to vector<16x256xf32>
    %330 = arith.select %328, %326, %329 : vector<16x256xi1>, vector<16x256xf32>
    %c30 = arith.constant 30 : index
    %c0_184 = arith.constant 0 : index
    %c0_185 = arith.constant 0 : index
    %331 = vector.load %arg1[%c30, %c0_184, %c0_185] : memref<49x16x16xf32, #tpu.memory_space<vmem>>, vector<1x16x16xf32>
    %332 = vector.shape_cast %331 : vector<1x16x16xf32> to vector<16x16xf32>
    %cst_186 = arith.constant dense<0.000000e+00> : vector<16x256xf32>
    %333 = tpu.matmul %332, %330, %cst_186 {dimension_numbers = #tpu.dot_dimension_numbers<[1], [0], [0], [1], [0, 0, 1, 1], [], []>} : vector<16x16xf32>, vector<16x256xf32>, vector<16x256xf32> -> vector<16x256xf32>
    %334 = arith.addf %325, %333 : vector<16x256xf32>
    %c0_187 = arith.constant 0 : index
    %c67 = arith.constant 67 : index
    %335 = vector.load %arg0[%c0_187, %c67] : memref<16x384xf32, #tpu.memory_space<vmem>>, vector<16x256xf32>
    %c31 = arith.constant 31 : index
    %c0_188 = arith.constant 0 : index
    %c0_189 = arith.constant 0 : index
    %336 = vector.load %arg1[%c31, %c0_188, %c0_189] : memref<49x16x16xf32, #tpu.memory_space<vmem>>, vector<1x16x16xf32>
    %337 = vector.shape_cast %336 : vector<1x16x16xf32> to vector<16x16xf32>
    %cst_190 = arith.constant dense<0.000000e+00> : vector<16x256xf32>
    %338 = tpu.matmul %337, %335, %cst_190 {dimension_numbers = #tpu.dot_dimension_numbers<[1], [0], [0], [1], [0, 0, 1, 1], [], []>} : vector<16x16xf32>, vector<16x256xf32>, vector<16x256xf32> -> vector<16x256xf32>
    %339 = arith.addf %334, %338 : vector<16x256xf32>
    %c0_191 = arith.constant 0 : index
    %c68 = arith.constant 68 : index
    %340 = vector.load %arg0[%c0_191, %c68] : memref<16x384xf32, #tpu.memory_space<vmem>>, vector<16x256xf32>
    %cst_192 = arith.constant 0.000000e+00 : f32
    %341 = vector.shape_cast %53 : vector<1x256xi1> to vector<1x256xi1>
    %342 = vector.broadcast %341 : vector<1x256xi1> to vector<16x256xi1>
    %343 = vector.broadcast %cst_192 : f32 to vector<16x256xf32>
    %344 = arith.select %342, %340, %343 : vector<16x256xi1>, vector<16x256xf32>
    %c32_193 = arith.constant 32 : index
    %c0_194 = arith.constant 0 : index
    %c0_195 = arith.constant 0 : index
    %345 = vector.load %arg1[%c32_193, %c0_194, %c0_195] : memref<49x16x16xf32, #tpu.memory_space<vmem>>, vector<1x16x16xf32>
    %346 = vector.shape_cast %345 : vector<1x16x16xf32> to vector<16x16xf32>
    %cst_196 = arith.constant dense<0.000000e+00> : vector<16x256xf32>
    %347 = tpu.matmul %346, %344, %cst_196 {dimension_numbers = #tpu.dot_dimension_numbers<[1], [0], [0], [1], [0, 0, 1, 1], [], []>} : vector<16x16xf32>, vector<16x256xf32>, vector<16x256xf32> -> vector<16x256xf32>
    %348 = arith.addf %339, %347 : vector<16x256xf32>
    %c0_197 = arith.constant 0 : index
    %c69 = arith.constant 69 : index
    %349 = vector.load %arg0[%c0_197, %c69] : memref<16x384xf32, #tpu.memory_space<vmem>>, vector<16x256xf32>
    %cst_198 = arith.constant 0.000000e+00 : f32
    %350 = vector.shape_cast %62 : vector<1x256xi1> to vector<1x256xi1>
    %351 = vector.broadcast %350 : vector<1x256xi1> to vector<16x256xi1>
    %352 = vector.broadcast %cst_198 : f32 to vector<16x256xf32>
    %353 = arith.select %351, %349, %352 : vector<16x256xi1>, vector<16x256xf32>
    %c33_199 = arith.constant 33 : index
    %c0_200 = arith.constant 0 : index
    %c0_201 = arith.constant 0 : index
    %354 = vector.load %arg1[%c33_199, %c0_200, %c0_201] : memref<49x16x16xf32, #tpu.memory_space<vmem>>, vector<1x16x16xf32>
    %355 = vector.shape_cast %354 : vector<1x16x16xf32> to vector<16x16xf32>
    %cst_202 = arith.constant dense<0.000000e+00> : vector<16x256xf32>
    %356 = tpu.matmul %355, %353, %cst_202 {dimension_numbers = #tpu.dot_dimension_numbers<[1], [0], [0], [1], [0, 0, 1, 1], [], []>} : vector<16x16xf32>, vector<16x256xf32>, vector<16x256xf32> -> vector<16x256xf32>
    %357 = arith.addf %348, %356 : vector<16x256xf32>
    %c0_203 = arith.constant 0 : index
    %c70 = arith.constant 70 : index
    %358 = vector.load %arg0[%c0_203, %c70] : memref<16x384xf32, #tpu.memory_space<vmem>>, vector<16x256xf32>
    %cst_204 = arith.constant 0.000000e+00 : f32
    %359 = vector.shape_cast %71 : vector<1x256xi1> to vector<1x256xi1>
    %360 = vector.broadcast %359 : vector<1x256xi1> to vector<16x256xi1>
    %361 = vector.broadcast %cst_204 : f32 to vector<16x256xf32>
    %362 = arith.select %360, %358, %361 : vector<16x256xi1>, vector<16x256xf32>
    %c34_205 = arith.constant 34 : index
    %c0_206 = arith.constant 0 : index
    %c0_207 = arith.constant 0 : index
    %363 = vector.load %arg1[%c34_205, %c0_206, %c0_207] : memref<49x16x16xf32, #tpu.memory_space<vmem>>, vector<1x16x16xf32>
    %364 = vector.shape_cast %363 : vector<1x16x16xf32> to vector<16x16xf32>
    %cst_208 = arith.constant dense<0.000000e+00> : vector<16x256xf32>
    %365 = tpu.matmul %364, %362, %cst_208 {dimension_numbers = #tpu.dot_dimension_numbers<[1], [0], [0], [1], [0, 0, 1, 1], [], []>} : vector<16x16xf32>, vector<16x256xf32>, vector<16x256xf32> -> vector<16x256xf32>
    %366 = arith.addf %357, %365 : vector<16x256xf32>
    %c0_209 = arith.constant 0 : index
    %c80 = arith.constant 80 : index
    %367 = vector.load %arg0[%c0_209, %c80] : memref<16x384xf32, #tpu.memory_space<vmem>>, vector<16x256xf32>
    %cst_210 = arith.constant 0.000000e+00 : f32
    %368 = vector.shape_cast %26 : vector<1x256xi1> to vector<1x256xi1>
    %369 = vector.broadcast %368 : vector<1x256xi1> to vector<16x256xi1>
    %370 = vector.broadcast %cst_210 : f32 to vector<16x256xf32>
    %371 = arith.select %369, %367, %370 : vector<16x256xi1>, vector<16x256xf32>
    %c35_211 = arith.constant 35 : index
    %c0_212 = arith.constant 0 : index
    %c0_213 = arith.constant 0 : index
    %372 = vector.load %arg1[%c35_211, %c0_212, %c0_213] : memref<49x16x16xf32, #tpu.memory_space<vmem>>, vector<1x16x16xf32>
    %373 = vector.shape_cast %372 : vector<1x16x16xf32> to vector<16x16xf32>
    %cst_214 = arith.constant dense<0.000000e+00> : vector<16x256xf32>
    %374 = tpu.matmul %373, %371, %cst_214 {dimension_numbers = #tpu.dot_dimension_numbers<[1], [0], [0], [1], [0, 0, 1, 1], [], []>} : vector<16x16xf32>, vector<16x256xf32>, vector<16x256xf32> -> vector<16x256xf32>
    %375 = arith.addf %366, %374 : vector<16x256xf32>
    %c0_215 = arith.constant 0 : index
    %c81 = arith.constant 81 : index
    %376 = vector.load %arg0[%c0_215, %c81] : memref<16x384xf32, #tpu.memory_space<vmem>>, vector<16x256xf32>
    %cst_216 = arith.constant 0.000000e+00 : f32
    %377 = vector.shape_cast %35 : vector<1x256xi1> to vector<1x256xi1>
    %378 = vector.broadcast %377 : vector<1x256xi1> to vector<16x256xi1>
    %379 = vector.broadcast %cst_216 : f32 to vector<16x256xf32>
    %380 = arith.select %378, %376, %379 : vector<16x256xi1>, vector<16x256xf32>
    %c36_217 = arith.constant 36 : index
    %c0_218 = arith.constant 0 : index
    %c0_219 = arith.constant 0 : index
    %381 = vector.load %arg1[%c36_217, %c0_218, %c0_219] : memref<49x16x16xf32, #tpu.memory_space<vmem>>, vector<1x16x16xf32>
    %382 = vector.shape_cast %381 : vector<1x16x16xf32> to vector<16x16xf32>
    %cst_220 = arith.constant dense<0.000000e+00> : vector<16x256xf32>
    %383 = tpu.matmul %382, %380, %cst_220 {dimension_numbers = #tpu.dot_dimension_numbers<[1], [0], [0], [1], [0, 0, 1, 1], [], []>} : vector<16x16xf32>, vector<16x256xf32>, vector<16x256xf32> -> vector<16x256xf32>
    %384 = arith.addf %375, %383 : vector<16x256xf32>
    %c0_221 = arith.constant 0 : index
    %c82 = arith.constant 82 : index
    %385 = vector.load %arg0[%c0_221, %c82] : memref<16x384xf32, #tpu.memory_space<vmem>>, vector<16x256xf32>
    %cst_222 = arith.constant 0.000000e+00 : f32
    %386 = vector.shape_cast %44 : vector<1x256xi1> to vector<1x256xi1>
    %387 = vector.broadcast %386 : vector<1x256xi1> to vector<16x256xi1>
    %388 = vector.broadcast %cst_222 : f32 to vector<16x256xf32>
    %389 = arith.select %387, %385, %388 : vector<16x256xi1>, vector<16x256xf32>
    %c37_223 = arith.constant 37 : index
    %c0_224 = arith.constant 0 : index
    %c0_225 = arith.constant 0 : index
    %390 = vector.load %arg1[%c37_223, %c0_224, %c0_225] : memref<49x16x16xf32, #tpu.memory_space<vmem>>, vector<1x16x16xf32>
    %391 = vector.shape_cast %390 : vector<1x16x16xf32> to vector<16x16xf32>
    %cst_226 = arith.constant dense<0.000000e+00> : vector<16x256xf32>
    %392 = tpu.matmul %391, %389, %cst_226 {dimension_numbers = #tpu.dot_dimension_numbers<[1], [0], [0], [1], [0, 0, 1, 1], [], []>} : vector<16x16xf32>, vector<16x256xf32>, vector<16x256xf32> -> vector<16x256xf32>
    %393 = arith.addf %384, %392 : vector<16x256xf32>
    %c0_227 = arith.constant 0 : index
    %c83 = arith.constant 83 : index
    %394 = vector.load %arg0[%c0_227, %c83] : memref<16x384xf32, #tpu.memory_space<vmem>>, vector<16x256xf32>
    %c38_228 = arith.constant 38 : index
    %c0_229 = arith.constant 0 : index
    %c0_230 = arith.constant 0 : index
    %395 = vector.load %arg1[%c38_228, %c0_229, %c0_230] : memref<49x16x16xf32, #tpu.memory_space<vmem>>, vector<1x16x16xf32>
    %396 = vector.shape_cast %395 : vector<1x16x16xf32> to vector<16x16xf32>
    %cst_231 = arith.constant dense<0.000000e+00> : vector<16x256xf32>
    %397 = tpu.matmul %396, %394, %cst_231 {dimension_numbers = #tpu.dot_dimension_numbers<[1], [0], [0], [1], [0, 0, 1, 1], [], []>} : vector<16x16xf32>, vector<16x256xf32>, vector<16x256xf32> -> vector<16x256xf32>
    %398 = arith.addf %393, %397 : vector<16x256xf32>
    %c0_232 = arith.constant 0 : index
    %c84 = arith.constant 84 : index
    %399 = vector.load %arg0[%c0_232, %c84] : memref<16x384xf32, #tpu.memory_space<vmem>>, vector<16x256xf32>
    %cst_233 = arith.constant 0.000000e+00 : f32
    %400 = vector.shape_cast %53 : vector<1x256xi1> to vector<1x256xi1>
    %401 = vector.broadcast %400 : vector<1x256xi1> to vector<16x256xi1>
    %402 = vector.broadcast %cst_233 : f32 to vector<16x256xf32>
    %403 = arith.select %401, %399, %402 : vector<16x256xi1>, vector<16x256xf32>
    %c39 = arith.constant 39 : index
    %c0_234 = arith.constant 0 : index
    %c0_235 = arith.constant 0 : index
    %404 = vector.load %arg1[%c39, %c0_234, %c0_235] : memref<49x16x16xf32, #tpu.memory_space<vmem>>, vector<1x16x16xf32>
    %405 = vector.shape_cast %404 : vector<1x16x16xf32> to vector<16x16xf32>
    %cst_236 = arith.constant dense<0.000000e+00> : vector<16x256xf32>
    %406 = tpu.matmul %405, %403, %cst_236 {dimension_numbers = #tpu.dot_dimension_numbers<[1], [0], [0], [1], [0, 0, 1, 1], [], []>} : vector<16x16xf32>, vector<16x256xf32>, vector<16x256xf32> -> vector<16x256xf32>
    %407 = arith.addf %398, %406 : vector<16x256xf32>
    %c0_237 = arith.constant 0 : index
    %c85 = arith.constant 85 : index
    %408 = vector.load %arg0[%c0_237, %c85] : memref<16x384xf32, #tpu.memory_space<vmem>>, vector<16x256xf32>
    %cst_238 = arith.constant 0.000000e+00 : f32
    %409 = vector.shape_cast %62 : vector<1x256xi1> to vector<1x256xi1>
    %410 = vector.broadcast %409 : vector<1x256xi1> to vector<16x256xi1>
    %411 = vector.broadcast %cst_238 : f32 to vector<16x256xf32>
    %412 = arith.select %410, %408, %411 : vector<16x256xi1>, vector<16x256xf32>
    %c40 = arith.constant 40 : index
    %c0_239 = arith.constant 0 : index
    %c0_240 = arith.constant 0 : index
    %413 = vector.load %arg1[%c40, %c0_239, %c0_240] : memref<49x16x16xf32, #tpu.memory_space<vmem>>, vector<1x16x16xf32>
    %414 = vector.shape_cast %413 : vector<1x16x16xf32> to vector<16x16xf32>
    %cst_241 = arith.constant dense<0.000000e+00> : vector<16x256xf32>
    %415 = tpu.matmul %414, %412, %cst_241 {dimension_numbers = #tpu.dot_dimension_numbers<[1], [0], [0], [1], [0, 0, 1, 1], [], []>} : vector<16x16xf32>, vector<16x256xf32>, vector<16x256xf32> -> vector<16x256xf32>
    %416 = arith.addf %407, %415 : vector<16x256xf32>
    %c0_242 = arith.constant 0 : index
    %c86 = arith.constant 86 : index
    %417 = vector.load %arg0[%c0_242, %c86] : memref<16x384xf32, #tpu.memory_space<vmem>>, vector<16x256xf32>
    %cst_243 = arith.constant 0.000000e+00 : f32
    %418 = vector.shape_cast %71 : vector<1x256xi1> to vector<1x256xi1>
    %419 = vector.broadcast %418 : vector<1x256xi1> to vector<16x256xi1>
    %420 = vector.broadcast %cst_243 : f32 to vector<16x256xf32>
    %421 = arith.select %419, %417, %420 : vector<16x256xi1>, vector<16x256xf32>
    %c41 = arith.constant 41 : index
    %c0_244 = arith.constant 0 : index
    %c0_245 = arith.constant 0 : index
    %422 = vector.load %arg1[%c41, %c0_244, %c0_245] : memref<49x16x16xf32, #tpu.memory_space<vmem>>, vector<1x16x16xf32>
    %423 = vector.shape_cast %422 : vector<1x16x16xf32> to vector<16x16xf32>
    %cst_246 = arith.constant dense<0.000000e+00> : vector<16x256xf32>
    %424 = tpu.matmul %423, %421, %cst_246 {dimension_numbers = #tpu.dot_dimension_numbers<[1], [0], [0], [1], [0, 0, 1, 1], [], []>} : vector<16x16xf32>, vector<16x256xf32>, vector<16x256xf32> -> vector<16x256xf32>
    %425 = arith.addf %416, %424 : vector<16x256xf32>
    %c0_247 = arith.constant 0 : index
    %c96 = arith.constant 96 : index
    %426 = vector.load %arg0[%c0_247, %c96] : memref<16x384xf32, #tpu.memory_space<vmem>>, vector<16x256xf32>
    %cst_248 = arith.constant 0.000000e+00 : f32
    %427 = vector.shape_cast %26 : vector<1x256xi1> to vector<1x256xi1>
    %428 = vector.broadcast %427 : vector<1x256xi1> to vector<16x256xi1>
    %429 = vector.broadcast %cst_248 : f32 to vector<16x256xf32>
    %430 = arith.select %428, %426, %429 : vector<16x256xi1>, vector<16x256xf32>
    %c42 = arith.constant 42 : index
    %c0_249 = arith.constant 0 : index
    %c0_250 = arith.constant 0 : index
    %431 = vector.load %arg1[%c42, %c0_249, %c0_250] : memref<49x16x16xf32, #tpu.memory_space<vmem>>, vector<1x16x16xf32>
    %432 = vector.shape_cast %431 : vector<1x16x16xf32> to vector<16x16xf32>
    %cst_251 = arith.constant dense<0.000000e+00> : vector<16x256xf32>
    %433 = tpu.matmul %432, %430, %cst_251 {dimension_numbers = #tpu.dot_dimension_numbers<[1], [0], [0], [1], [0, 0, 1, 1], [], []>} : vector<16x16xf32>, vector<16x256xf32>, vector<16x256xf32> -> vector<16x256xf32>
    %434 = arith.addf %425, %433 : vector<16x256xf32>
    %c0_252 = arith.constant 0 : index
    %c97 = arith.constant 97 : index
    %435 = vector.load %arg0[%c0_252, %c97] : memref<16x384xf32, #tpu.memory_space<vmem>>, vector<16x256xf32>
    %cst_253 = arith.constant 0.000000e+00 : f32
    %436 = vector.shape_cast %35 : vector<1x256xi1> to vector<1x256xi1>
    %437 = vector.broadcast %436 : vector<1x256xi1> to vector<16x256xi1>
    %438 = vector.broadcast %cst_253 : f32 to vector<16x256xf32>
    %439 = arith.select %437, %435, %438 : vector<16x256xi1>, vector<16x256xf32>
    %c43 = arith.constant 43 : index
    %c0_254 = arith.constant 0 : index
    %c0_255 = arith.constant 0 : index
    %440 = vector.load %arg1[%c43, %c0_254, %c0_255] : memref<49x16x16xf32, #tpu.memory_space<vmem>>, vector<1x16x16xf32>
    %441 = vector.shape_cast %440 : vector<1x16x16xf32> to vector<16x16xf32>
    %cst_256 = arith.constant dense<0.000000e+00> : vector<16x256xf32>
    %442 = tpu.matmul %441, %439, %cst_256 {dimension_numbers = #tpu.dot_dimension_numbers<[1], [0], [0], [1], [0, 0, 1, 1], [], []>} : vector<16x16xf32>, vector<16x256xf32>, vector<16x256xf32> -> vector<16x256xf32>
    %443 = arith.addf %434, %442 : vector<16x256xf32>
    %c0_257 = arith.constant 0 : index
    %c98 = arith.constant 98 : index
    %444 = vector.load %arg0[%c0_257, %c98] : memref<16x384xf32, #tpu.memory_space<vmem>>, vector<16x256xf32>
    %cst_258 = arith.constant 0.000000e+00 : f32
    %445 = vector.shape_cast %44 : vector<1x256xi1> to vector<1x256xi1>
    %446 = vector.broadcast %445 : vector<1x256xi1> to vector<16x256xi1>
    %447 = vector.broadcast %cst_258 : f32 to vector<16x256xf32>
    %448 = arith.select %446, %444, %447 : vector<16x256xi1>, vector<16x256xf32>
    %c44 = arith.constant 44 : index
    %c0_259 = arith.constant 0 : index
    %c0_260 = arith.constant 0 : index
    %449 = vector.load %arg1[%c44, %c0_259, %c0_260] : memref<49x16x16xf32, #tpu.memory_space<vmem>>, vector<1x16x16xf32>
    %450 = vector.shape_cast %449 : vector<1x16x16xf32> to vector<16x16xf32>
    %cst_261 = arith.constant dense<0.000000e+00> : vector<16x256xf32>
    %451 = tpu.matmul %450, %448, %cst_261 {dimension_numbers = #tpu.dot_dimension_numbers<[1], [0], [0], [1], [0, 0, 1, 1], [], []>} : vector<16x16xf32>, vector<16x256xf32>, vector<16x256xf32> -> vector<16x256xf32>
    %452 = arith.addf %443, %451 : vector<16x256xf32>
    %c0_262 = arith.constant 0 : index
    %c99 = arith.constant 99 : index
    %453 = vector.load %arg0[%c0_262, %c99] : memref<16x384xf32, #tpu.memory_space<vmem>>, vector<16x256xf32>
    %c45 = arith.constant 45 : index
    %c0_263 = arith.constant 0 : index
    %c0_264 = arith.constant 0 : index
    %454 = vector.load %arg1[%c45, %c0_263, %c0_264] : memref<49x16x16xf32, #tpu.memory_space<vmem>>, vector<1x16x16xf32>
    %455 = vector.shape_cast %454 : vector<1x16x16xf32> to vector<16x16xf32>
    %cst_265 = arith.constant dense<0.000000e+00> : vector<16x256xf32>
    %456 = tpu.matmul %455, %453, %cst_265 {dimension_numbers = #tpu.dot_dimension_numbers<[1], [0], [0], [1], [0, 0, 1, 1], [], []>} : vector<16x16xf32>, vector<16x256xf32>, vector<16x256xf32> -> vector<16x256xf32>
    %457 = arith.addf %452, %456 : vector<16x256xf32>
    %c0_266 = arith.constant 0 : index
    %c100 = arith.constant 100 : index
    %458 = vector.load %arg0[%c0_266, %c100] : memref<16x384xf32, #tpu.memory_space<vmem>>, vector<16x256xf32>
    %cst_267 = arith.constant 0.000000e+00 : f32
    %459 = vector.shape_cast %53 : vector<1x256xi1> to vector<1x256xi1>
    %460 = vector.broadcast %459 : vector<1x256xi1> to vector<16x256xi1>
    %461 = vector.broadcast %cst_267 : f32 to vector<16x256xf32>
    %462 = arith.select %460, %458, %461 : vector<16x256xi1>, vector<16x256xf32>
    %c46 = arith.constant 46 : index
    %c0_268 = arith.constant 0 : index
    %c0_269 = arith.constant 0 : index
    %463 = vector.load %arg1[%c46, %c0_268, %c0_269] : memref<49x16x16xf32, #tpu.memory_space<vmem>>, vector<1x16x16xf32>
    %464 = vector.shape_cast %463 : vector<1x16x16xf32> to vector<16x16xf32>
    %cst_270 = arith.constant dense<0.000000e+00> : vector<16x256xf32>
    %465 = tpu.matmul %464, %462, %cst_270 {dimension_numbers = #tpu.dot_dimension_numbers<[1], [0], [0], [1], [0, 0, 1, 1], [], []>} : vector<16x16xf32>, vector<16x256xf32>, vector<16x256xf32> -> vector<16x256xf32>
    %466 = arith.addf %457, %465 : vector<16x256xf32>
    %c0_271 = arith.constant 0 : index
    %c101 = arith.constant 101 : index
    %467 = vector.load %arg0[%c0_271, %c101] : memref<16x384xf32, #tpu.memory_space<vmem>>, vector<16x256xf32>
    %cst_272 = arith.constant 0.000000e+00 : f32
    %468 = vector.shape_cast %62 : vector<1x256xi1> to vector<1x256xi1>
    %469 = vector.broadcast %468 : vector<1x256xi1> to vector<16x256xi1>
    %470 = vector.broadcast %cst_272 : f32 to vector<16x256xf32>
    %471 = arith.select %469, %467, %470 : vector<16x256xi1>, vector<16x256xf32>
    %c47 = arith.constant 47 : index
    %c0_273 = arith.constant 0 : index
    %c0_274 = arith.constant 0 : index
    %472 = vector.load %arg1[%c47, %c0_273, %c0_274] : memref<49x16x16xf32, #tpu.memory_space<vmem>>, vector<1x16x16xf32>
    %473 = vector.shape_cast %472 : vector<1x16x16xf32> to vector<16x16xf32>
    %cst_275 = arith.constant dense<0.000000e+00> : vector<16x256xf32>
    %474 = tpu.matmul %473, %471, %cst_275 {dimension_numbers = #tpu.dot_dimension_numbers<[1], [0], [0], [1], [0, 0, 1, 1], [], []>} : vector<16x16xf32>, vector<16x256xf32>, vector<16x256xf32> -> vector<16x256xf32>
    %475 = arith.addf %466, %474 : vector<16x256xf32>
    %c0_276 = arith.constant 0 : index
    %c102 = arith.constant 102 : index
    %476 = vector.load %arg0[%c0_276, %c102] : memref<16x384xf32, #tpu.memory_space<vmem>>, vector<16x256xf32>
    %cst_277 = arith.constant 0.000000e+00 : f32
    %477 = vector.shape_cast %71 : vector<1x256xi1> to vector<1x256xi1>
    %478 = vector.broadcast %477 : vector<1x256xi1> to vector<16x256xi1>
    %479 = vector.broadcast %cst_277 : f32 to vector<16x256xf32>
    %480 = arith.select %478, %476, %479 : vector<16x256xi1>, vector<16x256xf32>
    %c48_278 = arith.constant 48 : index
    %c0_279 = arith.constant 0 : index
    %c0_280 = arith.constant 0 : index
    %481 = vector.load %arg1[%c48_278, %c0_279, %c0_280] : memref<49x16x16xf32, #tpu.memory_space<vmem>>, vector<1x16x16xf32>
    %482 = vector.shape_cast %481 : vector<1x16x16xf32> to vector<16x16xf32>
    %cst_281 = arith.constant dense<0.000000e+00> : vector<16x256xf32>
    %483 = tpu.matmul %482, %480, %cst_281 {dimension_numbers = #tpu.dot_dimension_numbers<[1], [0], [0], [1], [0, 0, 1, 1], [], []>} : vector<16x16xf32>, vector<16x256xf32>, vector<16x256xf32> -> vector<16x256xf32>
    %484 = arith.addf %475, %483 : vector<16x256xf32>
    %c0_282 = arith.constant 0 : index
    %c0_283 = arith.constant 0 : index
    %485 = vector.load %arg2[%c0_282, %c0_283] : memref<16x1xf32, #tpu.memory_space<vmem>>, vector<16x1xf32>
    %486 = vector.broadcast %485 : vector<16x1xf32> to vector<16x256xf32>
    %487 = arith.addf %484, %486 : vector<16x256xf32>
    %cst_284 = arith.constant 0.000000e+00 : f32
    %488 = vector.broadcast %cst_284 : f32 to vector<16x256xf32>
    %489 = arith.maximumf %487, %488 : vector<16x256xf32>
    %c0_285 = arith.constant 0 : index
    %c0_286 = arith.constant 0 : index
    %490 = vector.load %arg3[%c0_285, %c0_286] : memref<16x256xf32, #tpu.memory_space<vmem>>, vector<16x256xf32>
    tpu.vector_store %arg3[%c0_285, %c0_286], %489 {strides = array<i32>} : memref<16x256xf32, #tpu.memory_space<vmem>>, vector<16x256xf32>,
    return
  }
}

</mosaic_0001>

<llo_original>
// kernel: model_forward.1
$region0: #{model_forward.1}
  #allocation0 [shape = 'u32[]', space=smem, size = 0x4, offset = 0x4, fixed_abs, tag = 'smem constant byte address 0x4 - core index']
  #allocation1 [shape = 'u32[72,128]{1,0:T(1,128)}', space=vmem, size = 0x9000, scoped, tag = 'internal scratch']
  %s0 = inlined_call_operand.vmem [shape: f32[16,384], index: 0, kind: input, shape index: {}]
  %s1 = inlined_call_operand.vmem [shape: f32[49,16,16], index: 1, kind: input, shape index: {}]
  %s2 = inlined_call_operand.vmem [shape: f32[16,1], index: 2, kind: input, shape index: {}]
  %s3 = inlined_call_operand.vmem [shape: f32[16,256], index: 3, kind: output, shape index: {}]
  %s4 = sld [smem:[#allocation0]]
  $region22: #{model_forward.1} parent=0
    _
  %s6 = ssub.s32 1, %s4
  %s7 = scalar_select 0, %s6, %s4
  // Predicated region
  $region2: #{model_forward.1} parent=0 // pred_check
    _
  $region3: #{model_forward.1} parent=0 // pred_check_branch
    %9 = sbr.rel (0) target = $region5
  $region4: #{model_forward.1} parent=0 // pred_region
    _
  $region5: #{model_forward.1} parent=0 // pred_fallthru
    _
  // Predicated region
  $region6: #{model_forward.1} parent=0 // pred_check
    _
  $region7: #{model_forward.1} parent=0 // pred_check_branch
    %11 = sbr.rel (0) target = $region9
  $region8: #{model_forward.1} parent=0 // pred_region
    _
  $region9: #{model_forward.1} parent=0 // pred_fallthru
    _
  // Predicated region
  $region10: #{model_forward.1} parent=0 // pred_check
    _
  $region11: #{model_forward.1} parent=0 // pred_check_branch
    %13 = sbr.rel (0) target = $region13
  $region12: #{model_forward.1} parent=0 // pred_region
    _
  $region13: #{model_forward.1} parent=0 // pred_fallthru
    _
  %v14 = vlaneseq
  %v15 = vand.u32 %v14, 127
  %v16 = vadd.s32 %v15, 128
  %vm17 = vcmp.lt.s32.totalorder %v15, 0
  %v18 = vsub.s32 0, %v15
  %v19 = vsel %vm17, %v18, %v15
  %v20 = vshrl.u32 %v19, 4
  %v21 = vand.u32 %v19, 15
  %v22 = vsub.s32 0, %v21
  %v23 = vsel %vm17, %v22, %v21
  %vm24 = vcmp.lt.s32.totalorder %v16, 0
  %v25 = vsub.s32 0, %v16
  %v26 = vsel %vm24, %v25, %v16
  %v27 = vshrl.u32 %v26, 4
  %v28 = vand.u32 %v26, 15
  %v29 = vsub.s32 0, %v28
  %v30 = vsel %vm24, %v29, %v28
  %vm31 = vcmp.ne.s32.totalorder %v23, 0
  %vm32 = vcmp.ne.s32.totalorder %v30, 0
  %vm33 = vcmp.lt.s32.totalorder %v23, 0
  %vm34 = vcmp.lt.s32.totalorder %v30, 0
  %vm35 = vmand %vm33, %vm31
  %vm36 = vmand %vm34, %vm32
  %v37 = vadd.s32 %v23, 16
  %v38 = vadd.s32 %v30, 16
  %v39 = vsel %vm35, %v37, %v23
  %v40 = vsel %vm36, %v38, %v30
  %v41 = vadd.s32 %v39, 4294967293
  %v42 = vadd.s32 %v40, 4294967293
  %vm43 = vcmp.ge.s32.totalorder %v41, 0
  %vm44 = vcmp.ge.s32.totalorder %v42, 0
  %vm45 = vcmp.lt.s32.totalorder %v41, 16
  %vm46 = vcmp.lt.s32.totalorder %v42, 16
  %vm47 = vmand %vm43, %vm45
  %vm48 = vmand %vm44, %vm46
  %v49 = vadd.s32 %v39, 4294967294
  %v50 = vadd.s32 %v40, 4294967294
  %vm51 = vcmp.ge.s32.totalorder %v49, 0
  %vm52 = vcmp.ge.s32.totalorder %v50, 0
  %vm53 = vcmp.lt.s32.totalorder %v49, 16
  %vm54 = vcmp.lt.s32.totalorder %v50, 16
  %vm55 = vmand %vm51, %vm53
  %vm56 = vmand %vm52, %vm54
  %v57 = vadd.s32 %v39, 4294967295
  %v58 = vadd.s32 %v40, 4294967295
  %vm59 = vcmp.ge.s32.totalorder %v57, 0
  %vm60 = vcmp.ge.s32.totalorder %v58, 0
  %vm61 = vcmp.lt.s32.totalorder %v57, 16
  %vm62 = vcmp.lt.s32.totalorder %v58, 16
  %vm63 = vmand %vm59, %vm61
  %vm64 = vmand %vm60, %vm62
  %v65 = vadd.s32 %v39, 1
  %v66 = vadd.s32 %v40, 1
  %vm67 = vcmp.ge.s32.totalorder %v65, 0
  %vm68 = vcmp.ge.s32.totalorder %v66, 0
  %vm69 = vcmp.lt.s32.totalorder %v65, 16
  %vm70 = vcmp.lt.s32.totalorder %v66, 16
  %vm71 = vmand %vm67, %vm69
  %vm72 = vmand %vm68, %vm70
  %v73 = vadd.s32 %v39, 2
  %v74 = vadd.s32 %v40, 2
  %vm75 = vcmp.ge.s32.totalorder %v73, 0
  %vm76 = vcmp.ge.s32.totalorder %v74, 0
  %vm77 = vcmp.lt.s32.totalorder %v73, 16
  %vm78 = vcmp.lt.s32.totalorder %v74, 16
  %vm79 = vmand %vm75, %vm77
  %vm80 = vmand %vm76, %vm78
  %v81 = vadd.s32 %v39, 3
  %v82 = vadd.s32 %v40, 3
  %vm83 = vcmp.ge.s32.totalorder %v81, 0
  %vm84 = vcmp.ge.s32.totalorder %v82, 0
  %vm85 = vcmp.lt.s32.totalorder %v81, 16
  %vm86 = vcmp.lt.s32.totalorder %v82, 16
  %vm87 = vmand %vm83, %vm85
  %vm88 = vmand %vm84, %vm86
  %v89 = vld [vmem:[%s0] sm:$0xff]
  %v90 = vld [vmem:[%s0 + $0x8] sm:$0xff]
  %v91 = vld [vmem:[%s0 + $0x18] sm:$0xff]
  %v92 = vld [vmem:[%s0 + $0x20] sm:$0xff]
  %v93 = vsel %vm47, 1, 0
  %v94 = vsel %vm48, 1, 0
  %vm95 = vcmp.eq.s32.totalorder %v93, 1
  %vm96 = vcmp.eq.s32.totalorder %v94, 1
  %v97 = vsel %vm95, %v89, 0.0
  %v98 = vsel %vm96, %v90, 0.0
  %v99 = vsel %vm95, %v91, 0.0
  %v100 = vsel %vm96, %v92, 0.0
  %v101 = vld [vmem:[%s1] sm:$0xff]
  %v102 = vld [vmem:[%s1 + $0x8] sm:$0xff]
  %v103 = vld [vmem:[%s0] sm:$0xff]
  %v104 = vld [vmem:[%s0 + $0x8] sm:$0xff]
  %v105 = vld [vmem:[%s0 + $0x10] sm:$0xff]
  %v106 = vld [vmem:[%s0 + $0x18] sm:$0xff]
  %v107 = vld [vmem:[%s0 + $0x20] sm:$0xff]
  %v108 = vld [vmem:[%s0 + $0x28] sm:$0xff]
  %v109 = vsel %vm55, 1, 0
  %v110 = vsel %vm56, 1, 0
  %vm111 = vcmp.eq.s32.totalorder %v109, 1
  %vm112 = vcmp.eq.s32.totalorder %v110, 1
  %119 = vrot.lane.b32.xlu0 %v103, 127
  %v120 = vpop.permute.xlu0 %119
  %121 = vrot.lane.b32.xlu0 %v104, 127
  %v122 = vpop.permute.xlu0 %121
  %123 = vrot.lane.b32.xlu0 %v105, 127
  %v124 = vpop.permute.xlu0 %123
  %125 = vrot.lane.b32.xlu0 %v106, 127
  %v126 = vpop.permute.xlu0 %125
  %127 = vrot.lane.b32.xlu0 %v107, 127
  %v128 = vpop.permute.xlu0 %127
  %129 = vrot.lane.b32.xlu0 %v108, 127
  %v130 = vpop.permute.xlu0 %129
  %vm131 = vcmask 1039360
  %v132 = vsel %vm131, %v120, %v122
  %v133 = vsel %vm131, %v122, %v124
  %v134 = vsel %vm131, %v126, %v128
  %v135 = vsel %vm131, %v128, %v130
  %v140 = vsel %vm111, %v132, 0.0
  %v141 = vsel %vm112, %v133, 0.0
  %v142 = vsel %vm111, %v134, 0.0
  %v143 = vsel %vm112, %v135, 0.0
  %s144 = scalar_lea.vmem %s1, 16
  %v145 = vld [vmem:[%s144] sm:$0xff]
  %v146 = vld [vmem:[%s144 + $0x8] sm:$0xff]
  %vm147 = vcmask 130048
  %v149 = vsel %vm147, %v145, 0
  %v152 = vsel %vm147, %v146, 0
  %154 = vmatpush.msra.mxu0 0.0
  %155 = vmatpush.msra.mxu0 0.0
  %156 = vmatpush.msra.mxu0 0.0
  %157 = vmatpush.msra.mxu0 0.0
  %158 = vmatpush.msra.mxu0 0.0
  %159 = vmatpush.msra.mxu0 0.0
  %160 = vmatpush.msra.mxu0 0.0
  %161 = vmatpush.msra.mxu0 0.0
  %162 = vmatpush.msra.mxu0 0.0
  %163 = vmatpush.msra.mxu0 0.0
  %164 = vmatpush.msra.mxu0 0.0
  %165 = vmatpush.msra.mxu0 0.0
  %166 = vmatpush.msra.mxu0 0.0
  %167 = vmatpush.msra.mxu0 0.0
  %168 = vmatpush.msra.mxu0 %v142
  %169 = vmatpush.msra.mxu0 %v140
  %170 = vmatmul.f32.gmra.mxu0 %v149
  %v171 = vpop.f32.mrf.mxu0
  %v172 = vadd.f32 0.0, %v171
  %173 = vmatmul.f32.gmra.mxu0 %v152
  %v174 = vpop.f32.mrf.mxu0
  %v175 = vadd.f32 0.0, %v174
  %176 = vdwg.mxu0
  %177 = vmatpush.msra.mxu0 0.0
  %178 = vmatpush.msra.mxu0 0.0
  %179 = vmatpush.msra.mxu0 0.0
  %180 = vmatpush.msra.mxu0 0.0
  %181 = vmatpush.msra.mxu0 0.0
  %182 = vmatpush.msra.mxu0 0.0
  %183 = vmatpush.msra.mxu0 0.0
  %184 = vmatpush.msra.mxu0 0.0
  %185 = vmatpush.msra.mxu0 0.0
  %186 = vmatpush.msra.mxu0 0.0
  %187 = vmatpush.msra.mxu0 0.0
  %188 = vmatpush.msra.mxu0 0.0
  %189 = vmatpush.msra.mxu0 0.0
  %190 = vmatpush.msra.mxu0 0.0
  %191 = vmatpush.msra.mxu0 %v143
  %192 = vmatpush.msra.mxu0 %v141
  %193 = vmatmul.f32.gmra.mxu0 %v149
  %v194 = vpop.f32.mrf.mxu0
  %v195 = vadd.f32 0.0, %v194
  %196 = vmatmul.f32.gmra.mxu0 %v152
  %v197 = vpop.f32.mrf.mxu0
  %v198 = vadd.f32 0.0, %v197
  %199 = vdwg.mxu0
  %v201 = vsel %vm147, %v101, 0
  %v204 = vsel %vm147, %v102, 0
  %206 = vmatpush.msra.mxu0 0.0
  %207 = vmatpush.msra.mxu0 0.0
  %208 = vmatpush.msra.mxu0 0.0
  %209 = vmatpush.msra.mxu0 0.0
  %210 = vmatpush.msra.mxu0 0.0
  %211 = vmatpush.msra.mxu0 0.0
  %212 = vmatpush.msra.mxu0 0.0
  %213 = vmatpush.msra.mxu0 0.0
  %214 = vmatpush.msra.mxu0 0.0
  %215 = vmatpush.msra.mxu0 0.0
  %216 = vmatpush.msra.mxu0 0.0
  %217 = vmatpush.msra.mxu0 0.0
  %218 = vmatpush.msra.mxu0 0.0
  %219 = vmatpush.msra.mxu0 0.0
  %220 = vmatpush.msra.mxu0 %v99
  %221 = vmatpush.msra.mxu0 %v97
  %222 = vmatmul.f32.gmra.mxu0 %v201
  %v223 = vpop.f32.mrf.mxu0
  %v224 = vadd.f32 %v172, %v223
  %225 = vmatmul.f32.gmra.mxu0 %v204
  %v226 = vpop.f32.mrf.mxu0
  %v227 = vadd.f32 %v175, %v226
  %228 = vdwg.mxu0
  %229 = vmatpush.msra.mxu0 0.0
  %230 = vmatpush.msra.mxu0 0.0
  %231 = vmatpush.msra.mxu0 0.0
  %232 = vmatpush.msra.mxu0 0.0
  %233 = vmatpush.msra.mxu0 0.0
  %234 = vmatpush.msra.mxu0 0.0
  %235 = vmatpush.msra.mxu0 0.0
  %236 = vmatpush.msra.mxu0 0.0
  %237 = vmatpush.msra.mxu0 0.0
  %238 = vmatpush.msra.mxu0 0.0
  %239 = vmatpush.msra.mxu0 0.0
  %240 = vmatpush.msra.mxu0 0.0
  %241 = vmatpush.msra.mxu0 0.0
  %242 = vmatpush.msra.mxu0 0.0
  %243 = vmatpush.msra.mxu0 %v100
  %244 = vmatpush.msra.mxu0 %v98
  %245 = vmatmul.f32.gmra.mxu0 %v201
  %v246 = vpop.f32.mrf.mxu0
  %v247 = vadd.f32 %v195, %v246
  %248 = vmatmul.f32.gmra.mxu0 %v204
  %v249 = vpop.f32.mrf.mxu0
  %v250 = vadd.f32 %v198, %v249
  %251 = vdwg.mxu0
  %v252 = vsel %vm63, 1, 0
  %v253 = vsel %vm64, 1, 0
  %vm254 = vcmp.eq.s32.totalorder %v252, 1
  %vm255 = vcmp.eq.s32.totalorder %v253, 1
  %256 = vrot.lane.b32.xlu0 %v103, 126
  %v257 = vpop.permute.xlu0 %256
  %258 = vrot.lane.b32.xlu0 %v104, 126
  %v259 = vpop.permute.xlu0 %258
  %260 = vrot.lane.b32.xlu0 %v105, 126
  %v261 = vpop.permute.xlu0 %260
  %262 = vrot.lane.b32.xlu0 %v106, 126
  %v263 = vpop.permute.xlu0 %262
  %264 = vrot.lane.b32.xlu0 %v107, 126
  %v265 = vpop.permute.xlu0 %264
  %266 = vrot.lane.b32.xlu0 %v108, 126
  %v267 = vpop.permute.xlu0 %266
  %vm268 = vcmask 1031168
  %v269 = vsel %vm268, %v257, %v259
  %v270 = vsel %vm268, %v259, %v261
  %v271 = vsel %vm268, %v263, %v265
  %v272 = vsel %vm268, %v265, %v267
  %v277 = vsel %vm254, %v269, 0.0
  %v278 = vsel %vm255, %v270, 0.0
  %v279 = vsel %vm254, %v271, 0.0
  %v280 = vsel %vm255, %v272, 0.0
  %s281 = scalar_lea.vmem %s1, 32
  %v282 = vld [vmem:[%s281] sm:$0xff]
  %v283 = vld [vmem:[%s281 + $0x8] sm:$0xff]
  %v285 = vsel %vm147, %v282, 0
  %v288 = vsel %vm147, %v283, 0
  %290 = vmatpush.msra.mxu0 0.0
  %291 = vmatpush.msra.mxu0 0.0
  %292 = vmatpush.msra.mxu0 0.0
  %293 = vmatpush.msra.mxu0 0.0
  %294 = vmatpush.msra.mxu0 0.0
  %295 = vmatpush.msra.mxu0 0.0
  %296 = vmatpush.msra.mxu0 0.0
  %297 = vmatpush.msra.mxu0 0.0
  %298 = vmatpush.msra.mxu0 0.0
  %299 = vmatpush.msra.mxu0 0.0
  %300 = vmatpush.msra.mxu0 0.0
  %301 = vmatpush.msra.mxu0 0.0
  %302 = vmatpush.msra.mxu0 0.0
  %303 = vmatpush.msra.mxu0 0.0
  %304 = vmatpush.msra.mxu0 %v279
  %305 = vmatpush.msra.mxu0 %v277
  %306 = vmatmul.f32.gmra.mxu0 %v285
  %v307 = vpop.f32.mrf.mxu0
  %v308 = vadd.f32 0.0, %v307
  %309 = vmatmul.f32.gmra.mxu0 %v288
  %v310 = vpop.f32.mrf.mxu0
  %v311 = vadd.f32 0.0, %v310
  %312 = vdwg.mxu0
  %313 = vmatpush.msra.mxu0 0.0
  %314 = vmatpush.msra.mxu0 0.0
  %315 = vmatpush.msra.mxu0 0.0
  %316 = vmatpush.msra.mxu0 0.0
  %317 = vmatpush.msra.mxu0 0.0
  %318 = vmatpush.msra.mxu0 0.0
  %319 = vmatpush.msra.mxu0 0.0
  %320 = vmatpush.msra.mxu0 0.0
  %321 = vmatpush.msra.mxu0 0.0
  %322 = vmatpush.msra.mxu0 0.0
  %323 = vmatpush.msra.mxu0 0.0
  %324 = vmatpush.msra.mxu0 0.0
  %325 = vmatpush.msra.mxu0 0.0
  %326 = vmatpush.msra.mxu0 0.0
  %327 = vmatpush.msra.mxu0 %v280
  %328 = vmatpush.msra.mxu0 %v278
  %329 = vmatmul.f32.gmra.mxu0 %v285
  %v330 = vpop.f32.mrf.mxu0
  %v331 = vadd.f32 0.0, %v330
  %332 = vmatmul.f32.gmra.mxu0 %v288
  %v333 = vpop.f32.mrf.mxu0
  %v334 = vadd.f32 0.0, %v333
  %335 = vdwg.mxu0
  %v336 = vadd.f32 %v224, %v308
  %v337 = vadd.f32 %v247, %v331
  %v338 = vadd.f32 %v227, %v311
  %v339 = vadd.f32 %v250, %v334
  %s340 = scalar_lea.vmem %s1, 48
  %v341 = vld [vmem:[%s340] sm:$0xff]
  %v342 = vld [vmem:[%s340 + $0x8] sm:$0xff]
  %343 = vrot.lane.b32.xlu0 %v103, 125
  %v344 = vpop.permute.xlu0 %343
  %345 = vrot.lane.b32.xlu0 %v104, 125
  %v346 = vpop.permute.xlu0 %345
  %347 = vrot.lane.b32.xlu0 %v105, 125
  %v348 = vpop.permute.xlu0 %347
  %349 = vrot.lane.b32.xlu0 %v106, 125
  %v350 = vpop.permute.xlu0 %349
  %351 = vrot.lane.b32.xlu0 %v107, 125
  %v352 = vpop.permute.xlu0 %351
  %353 = vrot.lane.b32.xlu0 %v108, 125
  %v354 = vpop.permute.xlu0 %353
  %vm355 = vcmask 1022976
  %v356 = vsel %vm355, %v344, %v346
  %v357 = vsel %vm355, %v346, %v348
  %v358 = vsel %vm355, %v350, %v352
  %v359 = vsel %vm355, %v352, %v354
  %v365 = vsel %vm147, %v341, 0
  %v368 = vsel %vm147, %v342, 0
  %370 = vmatpush.msra.mxu0 0.0
  %371 = vmatpush.msra.mxu0 0.0
  %372 = vmatpush.msra.mxu0 0.0
  %373 = vmatpush.msra.mxu0 0.0
  %374 = vmatpush.msra.mxu0 0.0
  %375 = vmatpush.msra.mxu0 0.0
  %376 = vmatpush.msra.mxu0 0.0
  %377 = vmatpush.msra.mxu0 0.0
  %378 = vmatpush.msra.mxu0 0.0
  %379 = vmatpush.msra.mxu0 0.0
  %380 = vmatpush.msra.mxu0 0.0
  %381 = vmatpush.msra.mxu0 0.0
  %382 = vmatpush.msra.mxu0 0.0
  %383 = vmatpush.msra.mxu0 0.0
  %384 = vmatpush.msra.mxu0 %v358
  %385 = vmatpush.msra.mxu0 %v356
  %386 = vmatmul.f32.gmra.mxu0 %v365
  %v387 = vpop.f32.mrf.mxu0
  %v388 = vadd.f32 0.0, %v387
  %389 = vmatmul.f32.gmra.mxu0 %v368
  %v390 = vpop.f32.mrf.mxu0
  %v391 = vadd.f32 0.0, %v390
  %392 = vdwg.mxu0
  %393 = vmatpush.msra.mxu0 0.0
  %394 = vmatpush.msra.mxu0 0.0
  %395 = vmatpush.msra.mxu0 0.0
  %396 = vmatpush.msra.mxu0 0.0
  %397 = vmatpush.msra.mxu0 0.0
  %398 = vmatpush.msra.mxu0 0.0
  %399 = vmatpush.msra.mxu0 0.0
  %400 = vmatpush.msra.mxu0 0.0
  %401 = vmatpush.msra.mxu0 0.0
  %402 = vmatpush.msra.mxu0 0.0
  %403 = vmatpush.msra.mxu0 0.0
  %404 = vmatpush.msra.mxu0 0.0
  %405 = vmatpush.msra.mxu0 0.0
  %406 = vmatpush.msra.mxu0 0.0
  %407 = vmatpush.msra.mxu0 %v359
  %408 = vmatpush.msra.mxu0 %v357
  %409 = vmatmul.f32.gmra.mxu0 %v365
  %v410 = vpop.f32.mrf.mxu0
  %v411 = vadd.f32 0.0, %v410
  %412 = vmatmul.f32.gmra.mxu0 %v368
  %v413 = vpop.f32.mrf.mxu0
  %v414 = vadd.f32 0.0, %v413
  %415 = vdwg.mxu0
  %v416 = vadd.f32 %v336, %v388
  %v417 = vadd.f32 %v337, %v411
  %v418 = vadd.f32 %v338, %v391
  %v419 = vadd.f32 %v339, %v414
  %v420 = vsel %vm71, 1, 0
  %v421 = vsel %vm72, 1, 0
  %vm422 = vcmp.eq.s32.totalorder %v420, 1
  %vm423 = vcmp.eq.s32.totalorder %v421, 1
  %424 = vrot.lane.b32.xlu0 %v103, 124
  %v425 = vpop.permute.xlu0 %424
  %426 = vrot.lane.b32.xlu0 %v104, 124
  %v427 = vpop.permute.xlu0 %426
  %428 = vrot.lane.b32.xlu0 %v105, 124
  %v429 = vpop.permute.xlu0 %428
  %430 = vrot.lane.b32.xlu0 %v106, 124
  %v431 = vpop.permute.xlu0 %430
  %432 = vrot.lane.b32.xlu0 %v107, 124
  %v433 = vpop.permute.xlu0 %432
  %434 = vrot.lane.b32.xlu0 %v108, 124
  %v435 = vpop.permute.xlu0 %434
  %vm436 = vcmask 1014784
  %v437 = vsel %vm436, %v425, %v427
  %v438 = vsel %vm436, %v427, %v429
  %v439 = vsel %vm436, %v431, %v433
  %v440 = vsel %vm436, %v433, %v435
  %v445 = vsel %vm422, %v437, 0.0
  %v446 = vsel %vm423, %v438, 0.0
  %v447 = vsel %vm422, %v439, 0.0
  %v448 = vsel %vm423, %v440, 0.0
  %s449 = scalar_lea.vmem %s1, 64
  %v450 = vld [vmem:[%s449] sm:$0xff]
  %v451 = vld [vmem:[%s449 + $0x8] sm:$0xff]
  %v453 = vsel %vm147, %v450, 0
  %v456 = vsel %vm147, %v451, 0
  %458 = vmatpush.msra.mxu0 0.0
  %459 = vmatpush.msra.mxu0 0.0
  %460 = vmatpush.msra.mxu0 0.0
  %461 = vmatpush.msra.mxu0 0.0
  %462 = vmatpush.msra.mxu0 0.0
  %463 = vmatpush.msra.mxu0 0.0
  %464 = vmatpush.msra.mxu0 0.0
  %465 = vmatpush.msra.mxu0 0.0
  %466 = vmatpush.msra.mxu0 0.0
  %467 = vmatpush.msra.mxu0 0.0
  %468 = vmatpush.msra.mxu0 0.0
  %469 = vmatpush.msra.mxu0 0.0
  %470 = vmatpush.msra.mxu0 0.0
  %471 = vmatpush.msra.mxu0 0.0
  %472 = vmatpush.msra.mxu0 %v447
  %473 = vmatpush.msra.mxu0 %v445
  %474 = vmatmul.f32.gmra.mxu0 %v453
  %v475 = vpop.f32.mrf.mxu0
  %v476 = vadd.f32 0.0, %v475
  %477 = vmatmul.f32.gmra.mxu0 %v456
  %v478 = vpop.f32.mrf.mxu0
  %v479 = vadd.f32 0.0, %v478
  %480 = vdwg.mxu0
  %481 = vmatpush.msra.mxu0 0.0
  %482 = vmatpush.msra.mxu0 0.0
  %483 = vmatpush.msra.mxu0 0.0
  %484 = vmatpush.msra.mxu0 0.0
  %485 = vmatpush.msra.mxu0 0.0
  %486 = vmatpush.msra.mxu0 0.0
  %487 = vmatpush.msra.mxu0 0.0
  %488 = vmatpush.msra.mxu0 0.0
  %489 = vmatpush.msra.mxu0 0.0
  %490 = vmatpush.msra.mxu0 0.0
  %491 = vmatpush.msra.mxu0 0.0
  %492 = vmatpush.msra.mxu0 0.0
  %493 = vmatpush.msra.mxu0 0.0
  %494 = vmatpush.msra.mxu0 0.0
  %495 = vmatpush.msra.mxu0 %v448
  %496 = vmatpush.msra.mxu0 %v446
  %497 = vmatmul.f32.gmra.mxu0 %v453
  %v498 = vpop.f32.mrf.mxu0
  %v499 = vadd.f32 0.0, %v498
  %500 = vmatmul.f32.gmra.mxu0 %v456
  %v501 = vpop.f32.mrf.mxu0
  %v502 = vadd.f32 0.0, %v501
  %503 = vdwg.mxu0
  %v504 = vadd.f32 %v416, %v476
  %v505 = vadd.f32 %v417, %v499
  %v506 = vadd.f32 %v418, %v479
  %v507 = vadd.f32 %v419, %v502
  %v508 = vsel %vm79, 1, 0
  %v509 = vsel %vm80, 1, 0
  %vm510 = vcmp.eq.s32.totalorder %v508, 1
  %vm511 = vcmp.eq.s32.totalorder %v509, 1
  %512 = vrot.lane.b32.xlu0 %v103, 123
  %v513 = vpop.permute.xlu0 %512
  %514 = vrot.lane.b32.xlu0 %v104, 123
  %v515 = vpop.permute.xlu0 %514
  %516 = vrot.lane.b32.xlu0 %v105, 123
  %v517 = vpop.permute.xlu0 %516
  %518 = vrot.lane.b32.xlu0 %v106, 123
  %v519 = vpop.permute.xlu0 %518
  %520 = vrot.lane.b32.xlu0 %v107, 123
  %v521 = vpop.permute.xlu0 %520
  %522 = vrot.lane.b32.xlu0 %v108, 123
  %v523 = vpop.permute.xlu0 %522
  %vm524 = vcmask 1006592
  %v525 = vsel %vm524, %v513, %v515
  %v526 = vsel %vm524, %v515, %v517
  %v527 = vsel %vm524, %v519, %v521
  %v528 = vsel %vm524, %v521, %v523
  %v533 = vsel %vm510, %v525, 0.0
  %v534 = vsel %vm511, %v526, 0.0
  %v535 = vsel %vm510, %v527, 0.0
  %v536 = vsel %vm511, %v528, 0.0
  %s537 = scalar_lea.vmem %s1, 80
  %v538 = vld [vmem:[%s537] sm:$0xff]
  %v539 = vld [vmem:[%s537 + $0x8] sm:$0xff]
  %v541 = vsel %vm147, %v538, 0
  %v544 = vsel %vm147, %v539, 0
  %546 = vmatpush.msra.mxu0 0.0
  %547 = vmatpush.msra.mxu0 0.0
  %548 = vmatpush.msra.mxu0 0.0
  %549 = vmatpush.msra.mxu0 0.0
  %550 = vmatpush.msra.mxu0 0.0
  %551 = vmatpush.msra.mxu0 0.0
  %552 = vmatpush.msra.mxu0 0.0
  %553 = vmatpush.msra.mxu0 0.0
  %554 = vmatpush.msra.mxu0 0.0
  %555 = vmatpush.msra.mxu0 0.0
  %556 = vmatpush.msra.mxu0 0.0
  %557 = vmatpush.msra.mxu0 0.0
  %558 = vmatpush.msra.mxu0 0.0
  %559 = vmatpush.msra.mxu0 0.0
  %560 = vmatpush.msra.mxu0 %v535
  %561 = vmatpush.msra.mxu0 %v533
  %562 = vmatmul.f32.gmra.mxu0 %v541
  %v563 = vpop.f32.mrf.mxu0
  %v564 = vadd.f32 0.0, %v563
  %565 = vmatmul.f32.gmra.mxu0 %v544
  %v566 = vpop.f32.mrf.mxu0
  %v567 = vadd.f32 0.0, %v566
  %568 = vdwg.mxu0
  %569 = vmatpush.msra.mxu0 0.0
  %570 = vmatpush.msra.mxu0 0.0
  %571 = vmatpush.msra.mxu0 0.0
  %572 = vmatpush.msra.mxu0 0.0
  %573 = vmatpush.msra.mxu0 0.0
  %574 = vmatpush.msra.mxu0 0.0
  %575 = vmatpush.msra.mxu0 0.0
  %576 = vmatpush.msra.mxu0 0.0
  %577 = vmatpush.msra.mxu0 0.0
  %578 = vmatpush.msra.mxu0 0.0
  %579 = vmatpush.msra.mxu0 0.0
  %580 = vmatpush.msra.mxu0 0.0
  %581 = vmatpush.msra.mxu0 0.0
  %582 = vmatpush.msra.mxu0 0.0
  %583 = vmatpush.msra.mxu0 %v536
  %584 = vmatpush.msra.mxu0 %v534
  %585 = vmatmul.f32.gmra.mxu0 %v541
  %v586 = vpop.f32.mrf.mxu0
  %v587 = vadd.f32 0.0, %v586
  %588 = vmatmul.f32.gmra.mxu0 %v544
  %v589 = vpop.f32.mrf.mxu0
  %v590 = vadd.f32 0.0, %v589
  %591 = vdwg.mxu0
  %v592 = vadd.f32 %v504, %v564
  %v593 = vadd.f32 %v505, %v587
  %v594 = vadd.f32 %v506, %v567
  %v595 = vadd.f32 %v507, %v590
  %v596 = vsel %vm87, 1, 0
  %v597 = vsel %vm88, 1, 0
  %vm598 = vcmp.eq.s32.totalorder %v596, 1
  %vm599 = vcmp.eq.s32.totalorder %v597, 1
  %600 = vrot.lane.b32.xlu0 %v103, 122
  %v601 = vpop.permute.xlu0 %600
  %602 = vrot.lane.b32.xlu0 %v104, 122
  %v603 = vpop.permute.xlu0 %602
  %604 = vrot.lane.b32.xlu0 %v105, 122
  %v605 = vpop.permute.xlu0 %604
  %606 = vrot.lane.b32.xlu0 %v106, 122
  %v607 = vpop.permute.xlu0 %606
  %608 = vrot.lane.b32.xlu0 %v107, 122
  %v609 = vpop.permute.xlu0 %608
  %610 = vrot.lane.b32.xlu0 %v108, 122
  %v611 = vpop.permute.xlu0 %610
  %vm612 = vcmask 998400
  %v613 = vsel %vm612, %v601, %v603
  %v614 = vsel %vm612, %v603, %v605
  %v615 = vsel %vm612, %v607, %v609
  %v616 = vsel %vm612, %v609, %v611
  %v621 = vsel %vm598, %v613, 0.0
  %v622 = vsel %vm599, %v614, 0.0
  %v623 = vsel %vm598, %v615, 0.0
  %v624 = vsel %vm599, %v616, 0.0
  %s625 = scalar_lea.vmem %s1, 96
  %v626 = vld [vmem:[%s625] sm:$0xff]
  %v627 = vld [vmem:[%s625 + $0x8] sm:$0xff]
  %v629 = vsel %vm147, %v626, 0
  %v632 = vsel %vm147, %v627, 0
  %634 = vmatpush.msra.mxu0 0.0
  %635 = vmatpush.msra.mxu0 0.0
  %636 = vmatpush.msra.mxu0 0.0
  %637 = vmatpush.msra.mxu0 0.0
  %638 = vmatpush.msra.mxu0 0.0
  %639 = vmatpush.msra.mxu0 0.0
  %640 = vmatpush.msra.mxu0 0.0
  %641 = vmatpush.msra.mxu0 0.0
  %642 = vmatpush.msra.mxu0 0.0
  %643 = vmatpush.msra.mxu0 0.0
  %644 = vmatpush.msra.mxu0 0.0
  %645 = vmatpush.msra.mxu0 0.0
  %646 = vmatpush.msra.mxu0 0.0
  %647 = vmatpush.msra.mxu0 0.0
  %648 = vmatpush.msra.mxu0 %v623
  %649 = vmatpush.msra.mxu0 %v621
  %650 = vmatmul.f32.gmra.mxu0 %v629
  %v651 = vpop.f32.mrf.mxu0
  %v652 = vadd.f32 0.0, %v651
  %653 = vmatmul.f32.gmra.mxu0 %v632
  %v654 = vpop.f32.mrf.mxu0
  %v655 = vadd.f32 0.0, %v654
  %656 = vdwg.mxu0
  %657 = vmatpush.msra.mxu0 0.0
  %658 = vmatpush.msra.mxu0 0.0
  %659 = vmatpush.msra.mxu0 0.0
  %660 = vmatpush.msra.mxu0 0.0
  %661 = vmatpush.msra.mxu0 0.0
  %662 = vmatpush.msra.mxu0 0.0
  %663 = vmatpush.msra.mxu0 0.0
  %664 = vmatpush.msra.mxu0 0.0
  %665 = vmatpush.msra.mxu0 0.0
  %666 = vmatpush.msra.mxu0 0.0
  %667 = vmatpush.msra.mxu0 0.0
  %668 = vmatpush.msra.mxu0 0.0
  %669 = vmatpush.msra.mxu0 0.0
  %670 = vmatpush.msra.mxu0 0.0
  %671 = vmatpush.msra.mxu0 %v624
  %672 = vmatpush.msra.mxu0 %v622
  %673 = vmatmul.f32.gmra.mxu0 %v629
  %v674 = vpop.f32.mrf.mxu0
  %v675 = vadd.f32 0.0, %v674
  %676 = vmatmul.f32.gmra.mxu0 %v632
  %v677 = vpop.f32.mrf.mxu0
  %v678 = vadd.f32 0.0, %v677
  %679 = vdwg.mxu0
  %v680 = vadd.f32 %v592, %v652
  %v681 = vadd.f32 %v593, %v675
  %v682 = vadd.f32 %v594, %v655
  %v683 = vadd.f32 %v595, %v678
  %684 = vrot.lane.b32.xlu0 %v103, 112
  %v685 = vpop.permute.xlu0 %684
  %686 = vrot.lane.b32.xlu0 %v104, 112
  %v687 = vpop.permute.xlu0 %686
  %688 = vrot.lane.b32.xlu0 %v105, 112
  %v689 = vpop.permute.xlu0 %688
  %690 = vrot.lane.b32.xlu0 %v106, 112
  %v691 = vpop.permute.xlu0 %690
  %692 = vrot.lane.b32.xlu0 %v107, 112
  %v693 = vpop.permute.xlu0 %692
  %694 = vrot.lane.b32.xlu0 %v108, 112
  %v695 = vpop.permute.xlu0 %694
  %vm696 = vcmask 916480
  %v697 = vsel %vm696, %v685, %v687
  %v698 = vsel %vm696, %v687, %v689
  %v699 = vsel %vm696, %v691, %v693
  %v700 = vsel %vm696, %v693, %v695
  %v705 = vsel %vm95, %v697, 0.0
  %v706 = vsel %vm96, %v698, 0.0
  %v707 = vsel %vm95, %v699, 0.0
  %v708 = vsel %vm96, %v700, 0.0
  %s709 = scalar_lea.vmem %s1, 112
  %v710 = vld [vmem:[%s709] sm:$0xff]
  %v711 = vld [vmem:[%s709 + $0x8] sm:$0xff]
  %v713 = vsel %vm147, %v710, 0
  %v716 = vsel %vm147, %v711, 0
  %718 = vmatpush.msra.mxu0 0.0
  %719 = vmatpush.msra.mxu0 0.0
  %720 = vmatpush.msra.mxu0 0.0
  %721 = vmatpush.msra.mxu0 0.0
  %722 = vmatpush.msra.mxu0 0.0
  %723 = vmatpush.msra.mxu0 0.0
  %724 = vmatpush.msra.mxu0 0.0
  %725 = vmatpush.msra.mxu0 0.0
  %726 = vmatpush.msra.mxu0 0.0
  %727 = vmatpush.msra.mxu0 0.0
  %728 = vmatpush.msra.mxu0 0.0
  %729 = vmatpush.msra.mxu0 0.0
  %730 = vmatpush.msra.mxu0 0.0
  %731 = vmatpush.msra.mxu0 0.0
  %732 = vmatpush.msra.mxu0 %v707
  %733 = vmatpush.msra.mxu0 %v705
  %734 = vmatmul.f32.gmra.mxu0 %v713
  %v735 = vpop.f32.mrf.mxu0
  %v736 = vadd.f32 0.0, %v735
  %737 = vmatmul.f32.gmra.mxu0 %v716
  %v738 = vpop.f32.mrf.mxu0
  %v739 = vadd.f32 0.0, %v738
  %740 = vdwg.mxu0
  %741 = vmatpush.msra.mxu0 0.0
  %742 = vmatpush.msra.mxu0 0.0
  %743 = vmatpush.msra.mxu0 0.0
  %744 = vmatpush.msra.mxu0 0.0
  %745 = vmatpush.msra.mxu0 0.0
  %746 = vmatpush.msra.mxu0 0.0
  %747 = vmatpush.msra.mxu0 0.0
  %748 = vmatpush.msra.mxu0 0.0
  %749 = vmatpush.msra.mxu0 0.0
  %750 = vmatpush.msra.mxu0 0.0
  %751 = vmatpush.msra.mxu0 0.0
  %752 = vmatpush.msra.mxu0 0.0
  %753 = vmatpush.msra.mxu0 0.0
  %754 = vmatpush.msra.mxu0 0.0
  %755 = vmatpush.msra.mxu0 %v708
  %756 = vmatpush.msra.mxu0 %v706
  %757 = vmatmul.f32.gmra.mxu0 %v713
  %v758 = vpop.f32.mrf.mxu0
  %v759 = vadd.f32 0.0, %v758
  %760 = vmatmul.f32.gmra.mxu0 %v716
  %v761 = vpop.f32.mrf.mxu0
  %v762 = vadd.f32 0.0, %v761
  %763 = vdwg.mxu0
  %v764 = vadd.f32 %v680, %v736
  %v765 = vadd.f32 %v681, %v759
  %v766 = vadd.f32 %v682, %v739
  %v767 = vadd.f32 %v683, %v762
  %768 = vrot.lane.b32.xlu0 %v103, 111
  %v769 = vpop.permute.xlu0 %768
  %770 = vrot.lane.b32.xlu0 %v104, 111
  %v771 = vpop.permute.xlu0 %770
  %772 = vrot.lane.b32.xlu0 %v105, 111
  %v773 = vpop.permute.xlu0 %772
  %774 = vrot.lane.b32.xlu0 %v106, 111
  %v775 = vpop.permute.xlu0 %774
  %776 = vrot.lane.b32.xlu0 %v107, 111
  %v777 = vpop.permute.xlu0 %776
  %778 = vrot.lane.b32.xlu0 %v108, 111
  %v779 = vpop.permute.xlu0 %778
  %vm780 = vcmask 908288
  %v781 = vsel %vm780, %v769, %v771
  %v782 = vsel %vm780, %v771, %v773
  %v783 = vsel %vm780, %v775, %v777
  %v784 = vsel %vm780, %v777, %v779
  %v789 = vsel %vm111, %v781, 0.0
  %v790 = vsel %vm112, %v782, 0.0
  %v791 = vsel %vm111, %v783, 0.0
  %v792 = vsel %vm112, %v784, 0.0
  %s793 = scalar_lea.vmem %s1, 128
  %v794 = vld [vmem:[%s793] sm:$0xff]
  %v795 = vld [vmem:[%s793 + $0x8] sm:$0xff]
  %v797 = vsel %vm147, %v794, 0
  %v800 = vsel %vm147, %v795, 0
  %802 = vmatpush.msra.mxu0 0.0
  %803 = vmatpush.msra.mxu0 0.0
  %804 = vmatpush.msra.mxu0 0.0
  %805 = vmatpush.msra.mxu0 0.0
  %806 = vmatpush.msra.mxu0 0.0
  %807 = vmatpush.msra.mxu0 0.0
  %808 = vmatpush.msra.mxu0 0.0
  %809 = vmatpush.msra.mxu0 0.0
  %810 = vmatpush.msra.mxu0 0.0
  %811 = vmatpush.msra.mxu0 0.0
  %812 = vmatpush.msra.mxu0 0.0
  %813 = vmatpush.msra.mxu0 0.0
  %814 = vmatpush.msra.mxu0 0.0
  %815 = vmatpush.msra.mxu0 0.0
  %816 = vmatpush.msra.mxu0 %v791
  %817 = vmatpush.msra.mxu0 %v789
  %818 = vmatmul.f32.gmra.mxu0 %v797
  %v819 = vpop.f32.mrf.mxu0
  %v820 = vadd.f32 0.0, %v819
  %821 = vmatmul.f32.gmra.mxu0 %v800
  %v822 = vpop.f32.mrf.mxu0
  %v823 = vadd.f32 0.0, %v822
  %824 = vdwg.mxu0
  %825 = vmatpush.msra.mxu0 0.0
  %826 = vmatpush.msra.mxu0 0.0
  %827 = vmatpush.msra.mxu0 0.0
  %828 = vmatpush.msra.mxu0 0.0
  %829 = vmatpush.msra.mxu0 0.0
  %830 = vmatpush.msra.mxu0 0.0
  %831 = vmatpush.msra.mxu0 0.0
  %832 = vmatpush.msra.mxu0 0.0
  %833 = vmatpush.msra.mxu0 0.0
  %834 = vmatpush.msra.mxu0 0.0
  %835 = vmatpush.msra.mxu0 0.0
  %836 = vmatpush.msra.mxu0 0.0
  %837 = vmatpush.msra.mxu0 0.0
  %838 = vmatpush.msra.mxu0 0.0
  %839 = vmatpush.msra.mxu0 %v792
  %840 = vmatpush.msra.mxu0 %v790
  %841 = vmatmul.f32.gmra.mxu0 %v797
  %v842 = vpop.f32.mrf.mxu0
  %v843 = vadd.f32 0.0, %v842
  %844 = vmatmul.f32.gmra.mxu0 %v800
  %v845 = vpop.f32.mrf.mxu0
  %v846 = vadd.f32 0.0, %v845
  %847 = vdwg.mxu0
  %v848 = vadd.f32 %v764, %v820
  %v849 = vadd.f32 %v765, %v843
  %v850 = vadd.f32 %v766, %v823
  %v851 = vadd.f32 %v767, %v846
  %852 = vrot.lane.b32.xlu0 %v103, 110
  %v853 = vpop.permute.xlu0 %852
  %854 = vrot.lane.b32.xlu0 %v104, 110
  %v855 = vpop.permute.xlu0 %854
  %856 = vrot.lane.b32.xlu0 %v105, 110
  %v857 = vpop.permute.xlu0 %856
  %858 = vrot.lane.b32.xlu0 %v106, 110
  %v859 = vpop.permute.xlu0 %858
  %860 = vrot.lane.b32.xlu0 %v107, 110
  %v861 = vpop.permute.xlu0 %860
  %862 = vrot.lane.b32.xlu0 %v108, 110
  %v863 = vpop.permute.xlu0 %862
  %vm864 = vcmask 900096
  %v865 = vsel %vm864, %v853, %v855
  %v866 = vsel %vm864, %v855, %v857
  %v867 = vsel %vm864, %v859, %v861
  %v868 = vsel %vm864, %v861, %v863
  %v873 = vsel %vm254, %v865, 0.0
  %v874 = vsel %vm255, %v866, 0.0
  %v875 = vsel %vm254, %v867, 0.0
  %v876 = vsel %vm255, %v868, 0.0
  %s877 = scalar_lea.vmem %s1, 144
  %v878 = vld [vmem:[%s877] sm:$0xff]
  %v879 = vld [vmem:[%s877 + $0x8] sm:$0xff]
  %v881 = vsel %vm147, %v878, 0
  %v884 = vsel %vm147, %v879, 0
  %886 = vmatpush.msra.mxu0 0.0
  %887 = vmatpush.msra.mxu0 0.0
  %888 = vmatpush.msra.mxu0 0.0
  %889 = vmatpush.msra.mxu0 0.0
  %890 = vmatpush.msra.mxu0 0.0
  %891 = vmatpush.msra.mxu0 0.0
  %892 = vmatpush.msra.mxu0 0.0
  %893 = vmatpush.msra.mxu0 0.0
  %894 = vmatpush.msra.mxu0 0.0
  %895 = vmatpush.msra.mxu0 0.0
  %896 = vmatpush.msra.mxu0 0.0
  %897 = vmatpush.msra.mxu0 0.0
  %898 = vmatpush.msra.mxu0 0.0
  %899 = vmatpush.msra.mxu0 0.0
  %900 = vmatpush.msra.mxu0 %v875
  %901 = vmatpush.msra.mxu0 %v873
  %902 = vmatmul.f32.gmra.mxu0 %v881
  %v903 = vpop.f32.mrf.mxu0
  %v904 = vadd.f32 0.0, %v903
  %905 = vmatmul.f32.gmra.mxu0 %v884
  %v906 = vpop.f32.mrf.mxu0
  %v907 = vadd.f32 0.0, %v906
  %908 = vdwg.mxu0
  %909 = vmatpush.msra.mxu0 0.0
  %910 = vmatpush.msra.mxu0 0.0
  %911 = vmatpush.msra.mxu0 0.0
  %912 = vmatpush.msra.mxu0 0.0
  %913 = vmatpush.msra.mxu0 0.0
  %914 = vmatpush.msra.mxu0 0.0
  %915 = vmatpush.msra.mxu0 0.0
  %916 = vmatpush.msra.mxu0 0.0
  %917 = vmatpush.msra.mxu0 0.0
  %918 = vmatpush.msra.mxu0 0.0
  %919 = vmatpush.msra.mxu0 0.0
  %920 = vmatpush.msra.mxu0 0.0
  %921 = vmatpush.msra.mxu0 0.0
  %922 = vmatpush.msra.mxu0 0.0
  %923 = vmatpush.msra.mxu0 %v876
  %924 = vmatpush.msra.mxu0 %v874
  %925 = vmatmul.f32.gmra.mxu0 %v881
  %v926 = vpop.f32.mrf.mxu0
  %v927 = vadd.f32 0.0, %v926
  %928 = vmatmul.f32.gmra.mxu0 %v884
  %v929 = vpop.f32.mrf.mxu0
  %v930 = vadd.f32 0.0, %v929
  %931 = vdwg.mxu0
  %v932 = vadd.f32 %v848, %v904
  %v933 = vadd.f32 %v849, %v927
  %v934 = vadd.f32 %v850, %v907
  %v935 = vadd.f32 %v851, %v930
  %s936 = scalar_lea.vmem %s1, 160
  %v937 = vld [vmem:[%s936] sm:$0xff]
  %v938 = vld [vmem:[%s936 + $0x8] sm:$0xff]
  %939 = vrot.lane.b32.xlu0 %v103, 109
  %v940 = vpop.permute.xlu0 %939
  %941 = vrot.lane.b32.xlu0 %v104, 109
  %v942 = vpop.permute.xlu0 %941
  %943 = vrot.lane.b32.xlu0 %v105, 109
  %v944 = vpop.permute.xlu0 %943
  %945 = vrot.lane.b32.xlu0 %v106, 109
  %v946 = vpop.permute.xlu0 %945
  %947 = vrot.lane.b32.xlu0 %v107, 109
  %v948 = vpop.permute.xlu0 %947
  %949 = vrot.lane.b32.xlu0 %v108, 109
  %v950 = vpop.permute.xlu0 %949
  %vm951 = vcmask 891904
  %v952 = vsel %vm951, %v940, %v942
  %v953 = vsel %vm951, %v942, %v944
  %v954 = vsel %vm951, %v946, %v948
  %v955 = vsel %vm951, %v948, %v950
  %v961 = vsel %vm147, %v937, 0
  %v964 = vsel %vm147, %v938, 0
  %966 = vmatpush.msra.mxu0 0.0
  %967 = vmatpush.msra.mxu0 0.0
  %968 = vmatpush.msra.mxu0 0.0
  %969 = vmatpush.msra.mxu0 0.0
  %970 = vmatpush.msra.mxu0 0.0
  %971 = vmatpush.msra.mxu0 0.0
  %972 = vmatpush.msra.mxu0 0.0
  %973 = vmatpush.msra.mxu0 0.0
  %974 = vmatpush.msra.mxu0 0.0
  %975 = vmatpush.msra.mxu0 0.0
  %976 = vmatpush.msra.mxu0 0.0
  %977 = vmatpush.msra.mxu0 0.0
  %978 = vmatpush.msra.mxu0 0.0
  %979 = vmatpush.msra.mxu0 0.0
  %980 = vmatpush.msra.mxu0 %v954
  %981 = vmatpush.msra.mxu0 %v952
  %982 = vmatmul.f32.gmra.mxu0 %v961
  %v983 = vpop.f32.mrf.mxu0
  %v984 = vadd.f32 0.0, %v983
  %985 = vmatmul.f32.gmra.mxu0 %v964
  %v986 = vpop.f32.mrf.mxu0
  %v987 = vadd.f32 0.0, %v986
  %988 = vdwg.mxu0
  %989 = vmatpush.msra.mxu0 0.0
  %990 = vmatpush.msra.mxu0 0.0
  %991 = vmatpush.msra.mxu0 0.0
  %992 = vmatpush.msra.mxu0 0.0
  %993 = vmatpush.msra.mxu0 0.0
  %994 = vmatpush.msra.mxu0 0.0
  %995 = vmatpush.msra.mxu0 0.0
  %996 = vmatpush.msra.mxu0 0.0
  %997 = vmatpush.msra.mxu0 0.0
  %998 = vmatpush.msra.mxu0 0.0
  %999 = vmatpush.msra.mxu0 0.0
  %1000 = vmatpush.msra.mxu0 0.0
  %1001 = vmatpush.msra.mxu0 0.0
  %1002 = vmatpush.msra.mxu0 0.0
  %1003 = vmatpush.msra.mxu0 %v955
  %1004 = vmatpush.msra.mxu0 %v953
  %1005 = vmatmul.f32.gmra.mxu0 %v961
  %v1006 = vpop.f32.mrf.mxu0
  %v1007 = vadd.f32 0.0, %v1006
  %1008 = vmatmul.f32.gmra.mxu0 %v964
  %v1009 = vpop.f32.mrf.mxu0
  %v1010 = vadd.f32 0.0, %v1009
  %1011 = vdwg.mxu0
  %v1012 = vadd.f32 %v932, %v984
  %v1013 = vadd.f32 %v933, %v1007
  %v1014 = vadd.f32 %v934, %v987
  %v1015 = vadd.f32 %v935, %v1010
  %1016 = vrot.lane.b32.xlu0 %v103, 108
  %v1017 = vpop.permute.xlu0 %1016
  %1018 = vrot.lane.b32.xlu0 %v104, 108
  %v1019 = vpop.permute.xlu0 %1018
  %1020 = vrot.lane.b32.xlu0 %v105, 108
  %v1021 = vpop.permute.xlu0 %1020
  %1022 = vrot.lane.b32.xlu0 %v106, 108
  %v1023 = vpop.permute.xlu0 %1022
  %1024 = vrot.lane.b32.xlu0 %v107, 108
  %v1025 = vpop.permute.xlu0 %1024
  %1026 = vrot.lane.b32.xlu0 %v108, 108
  %v1027 = vpop.permute.xlu0 %1026
  %vm1028 = vcmask 883712
  %v1029 = vsel %vm1028, %v1017, %v1019
  %v1030 = vsel %vm1028, %v1019, %v1021
  %v1031 = vsel %vm1028, %v1023, %v1025
  %v1032 = vsel %vm1028, %v1025, %v1027
  %v1037 = vsel %vm422, %v1029, 0.0
  %v1038 = vsel %vm423, %v1030, 0.0
  %v1039 = vsel %vm422, %v1031, 0.0
  %v1040 = vsel %vm423, %v1032, 0.0
  %s1041 = scalar_lea.vmem %s1, 176
  %v1042 = vld [vmem:[%s1041] sm:$0xff]
  %v1043 = vld [vmem:[%s1041 + $0x8] sm:$0xff]
  %v1045 = vsel %vm147, %v1042, 0
  %v1048 = vsel %vm147, %v1043, 0
  %1050 = vmatpush.msra.mxu0 0.0
  %1051 = vmatpush.msra.mxu0 0.0
  %1052 = vmatpush.msra.mxu0 0.0
  %1053 = vmatpush.msra.mxu0 0.0
  %1054 = vmatpush.msra.mxu0 0.0
  %1055 = vmatpush.msra.mxu0 0.0
  %1056 = vmatpush.msra.mxu0 0.0
  %1057 = vmatpush.msra.mxu0 0.0
  %1058 = vmatpush.msra.mxu0 0.0
  %1059 = vmatpush.msra.mxu0 0.0
  %1060 = vmatpush.msra.mxu0 0.0
  %1061 = vmatpush.msra.mxu0 0.0
  %1062 = vmatpush.msra.mxu0 0.0
  %1063 = vmatpush.msra.mxu0 0.0
  %1064 = vmatpush.msra.mxu0 %v1039
  %1065 = vmatpush.msra.mxu0 %v1037
  %1066 = vmatmul.f32.gmra.mxu0 %v1045
  %v1067 = vpop.f32.mrf.mxu0
  %v1068 = vadd.f32 0.0, %v1067
  %1069 = vmatmul.f32.gmra.mxu0 %v1048
  %v1070 = vpop.f32.mrf.mxu0
  %v1071 = vadd.f32 0.0, %v1070
  %1072 = vdwg.mxu0
  %1073 = vmatpush.msra.mxu0 0.0
  %1074 = vmatpush.msra.mxu0 0.0
  %1075 = vmatpush.msra.mxu0 0.0
  %1076 = vmatpush.msra.mxu0 0.0
  %1077 = vmatpush.msra.mxu0 0.0
  %1078 = vmatpush.msra.mxu0 0.0
  %1079 = vmatpush.msra.mxu0 0.0
  %1080 = vmatpush.msra.mxu0 0.0
  %1081 = vmatpush.msra.mxu0 0.0
  %1082 = vmatpush.msra.mxu0 0.0
  %1083 = vmatpush.msra.mxu0 0.0
  %1084 = vmatpush.msra.mxu0 0.0
  %1085 = vmatpush.msra.mxu0 0.0
  %1086 = vmatpush.msra.mxu0 0.0
  %1087 = vmatpush.msra.mxu0 %v1040
  %1088 = vmatpush.msra.mxu0 %v1038
  %1089 = vmatmul.f32.gmra.mxu0 %v1045
  %v1090 = vpop.f32.mrf.mxu0
  %v1091 = vadd.f32 0.0, %v1090
  %1092 = vmatmul.f32.gmra.mxu0 %v1048
  %v1093 = vpop.f32.mrf.mxu0
  %v1094 = vadd.f32 0.0, %v1093
  %1095 = vdwg.mxu0
  %v1096 = vadd.f32 %v1012, %v1068
  %v1097 = vadd.f32 %v1013, %v1091
  %v1098 = vadd.f32 %v1014, %v1071
  %v1099 = vadd.f32 %v1015, %v1094
  %1100 = vrot.lane.b32.xlu0 %v103, 107
  %v1101 = vpop.permute.xlu0 %1100
  %1102 = vrot.lane.b32.xlu0 %v104, 107
  %v1103 = vpop.permute.xlu0 %1102
  %1104 = vrot.lane.b32.xlu0 %v105, 107
  %v1105 = vpop.permute.xlu0 %1104
  %1106 = vrot.lane.b32.xlu0 %v106, 107
  %v1107 = vpop.permute.xlu0 %1106
  %1108 = vrot.lane.b32.xlu0 %v107, 107
  %v1109 = vpop.permute.xlu0 %1108
  %1110 = vrot.lane.b32.xlu0 %v108, 107
  %v1111 = vpop.permute.xlu0 %1110
  %vm1112 = vcmask 875520
  %v1113 = vsel %vm1112, %v1101, %v1103
  %v1114 = vsel %vm1112, %v1103, %v1105
  %v1115 = vsel %vm1112, %v1107, %v1109
  %v1116 = vsel %vm1112, %v1109, %v1111
  %v1121 = vsel %vm510, %v1113, 0.0
  %v1122 = vsel %vm511, %v1114, 0.0
  %v1123 = vsel %vm510, %v1115, 0.0
  %v1124 = vsel %vm511, %v1116, 0.0
  %s1125 = scalar_lea.vmem %s1, 192
  %v1126 = vld [vmem:[%s1125] sm:$0xff]
  %v1127 = vld [vmem:[%s1125 + $0x8] sm:$0xff]
  %v1129 = vsel %vm147, %v1126, 0
  %v1132 = vsel %vm147, %v1127, 0
  %1134 = vmatpush.msra.mxu0 0.0
  %1135 = vmatpush.msra.mxu0 0.0
  %1136 = vmatpush.msra.mxu0 0.0
  %1137 = vmatpush.msra.mxu0 0.0
  %1138 = vmatpush.msra.mxu0 0.0
  %1139 = vmatpush.msra.mxu0 0.0
  %1140 = vmatpush.msra.mxu0 0.0
  %1141 = vmatpush.msra.mxu0 0.0
  %1142 = vmatpush.msra.mxu0 0.0
  %1143 = vmatpush.msra.mxu0 0.0
  %1144 = vmatpush.msra.mxu0 0.0
  %1145 = vmatpush.msra.mxu0 0.0
  %1146 = vmatpush.msra.mxu0 0.0
  %1147 = vmatpush.msra.mxu0 0.0
  %1148 = vmatpush.msra.mxu0 %v1123
  %1149 = vmatpush.msra.mxu0 %v1121
  %1150 = vmatmul.f32.gmra.mxu0 %v1129
  %v1151 = vpop.f32.mrf.mxu0
  %v1152 = vadd.f32 0.0, %v1151
  %1153 = vmatmul.f32.gmra.mxu0 %v1132
  %v1154 = vpop.f32.mrf.mxu0
  %v1155 = vadd.f32 0.0, %v1154
  %1156 = vdwg.mxu0
  %1157 = vmatpush.msra.mxu0 0.0
  %1158 = vmatpush.msra.mxu0 0.0
  %1159 = vmatpush.msra.mxu0 0.0
  %1160 = vmatpush.msra.mxu0 0.0
  %1161 = vmatpush.msra.mxu0 0.0
  %1162 = vmatpush.msra.mxu0 0.0
  %1163 = vmatpush.msra.mxu0 0.0
  %1164 = vmatpush.msra.mxu0 0.0
  %1165 = vmatpush.msra.mxu0 0.0
  %1166 = vmatpush.msra.mxu0 0.0
  %1167 = vmatpush.msra.mxu0 0.0
  %1168 = vmatpush.msra.mxu0 0.0
  %1169 = vmatpush.msra.mxu0 0.0
  %1170 = vmatpush.msra.mxu0 0.0
  %1171 = vmatpush.msra.mxu0 %v1124
  %1172 = vmatpush.msra.mxu0 %v1122
  %1173 = vmatmul.f32.gmra.mxu0 %v1129
  %v1174 = vpop.f32.mrf.mxu0
  %v1175 = vadd.f32 0.0, %v1174
  %1176 = vmatmul.f32.gmra.mxu0 %v1132
  %v1177 = vpop.f32.mrf.mxu0
  %v1178 = vadd.f32 0.0, %v1177
  %1179 = vdwg.mxu0
  %v1180 = vadd.f32 %v1096, %v1152
  %v1181 = vadd.f32 %v1097, %v1175
  %v1182 = vadd.f32 %v1098, %v1155
  %v1183 = vadd.f32 %v1099, %v1178
  %1184 = vrot.lane.b32.xlu0 %v103, 106
  %v1185 = vpop.permute.xlu0 %1184
  %1186 = vrot.lane.b32.xlu0 %v104, 106
  %v1187 = vpop.permute.xlu0 %1186
  %1188 = vrot.lane.b32.xlu0 %v105, 106
  %v1189 = vpop.permute.xlu0 %1188
  %1190 = vrot.lane.b32.xlu0 %v106, 106
  %v1191 = vpop.permute.xlu0 %1190
  %1192 = vrot.lane.b32.xlu0 %v107, 106
  %v1193 = vpop.permute.xlu0 %1192
  %1194 = vrot.lane.b32.xlu0 %v108, 106
  %v1195 = vpop.permute.xlu0 %1194
  %vm1196 = vcmask 867328
  %v1197 = vsel %vm1196, %v1185, %v1187
  %v1198 = vsel %vm1196, %v1187, %v1189
  %v1199 = vsel %vm1196, %v1191, %v1193
  %v1200 = vsel %vm1196, %v1193, %v1195
  %v1205 = vsel %vm598, %v1197, 0.0
  %v1206 = vsel %vm599, %v1198, 0.0
  %v1207 = vsel %vm598, %v1199, 0.0
  %v1208 = vsel %vm599, %v1200, 0.0
  %s1209 = scalar_lea.vmem %s1, 208
  %v1210 = vld [vmem:[%s1209] sm:$0xff]
  %v1211 = vld [vmem:[%s1209 + $0x8] sm:$0xff]
  %v1213 = vsel %vm147, %v1210, 0
  %v1216 = vsel %vm147, %v1211, 0
  %1218 = vmatpush.msra.mxu0 0.0
  %1219 = vmatpush.msra.mxu0 0.0
  %1220 = vmatpush.msra.mxu0 0.0
  %1221 = vmatpush.msra.mxu0 0.0
  %1222 = vmatpush.msra.mxu0 0.0
  %1223 = vmatpush.msra.mxu0 0.0
  %1224 = vmatpush.msra.mxu0 0.0
  %1225 = vmatpush.msra.mxu0 0.0
  %1226 = vmatpush.msra.mxu0 0.0
  %1227 = vmatpush.msra.mxu0 0.0
  %1228 = vmatpush.msra.mxu0 0.0
  %1229 = vmatpush.msra.mxu0 0.0
  %1230 = vmatpush.msra.mxu0 0.0
  %1231 = vmatpush.msra.mxu0 0.0
  %1232 = vmatpush.msra.mxu0 %v1207
  %1233 = vmatpush.msra.mxu0 %v1205
  %1234 = vmatmul.f32.gmra.mxu0 %v1213
  %v1235 = vpop.f32.mrf.mxu0
  %v1236 = vadd.f32 0.0, %v1235
  %1237 = vmatmul.f32.gmra.mxu0 %v1216
  %v1238 = vpop.f32.mrf.mxu0
  %v1239 = vadd.f32 0.0, %v1238
  %1240 = vdwg.mxu0
  %1241 = vmatpush.msra.mxu0 0.0
  %1242 = vmatpush.msra.mxu0 0.0
  %1243 = vmatpush.msra.mxu0 0.0
  %1244 = vmatpush.msra.mxu0 0.0
  %1245 = vmatpush.msra.mxu0 0.0
  %1246 = vmatpush.msra.mxu0 0.0
  %1247 = vmatpush.msra.mxu0 0.0
  %1248 = vmatpush.msra.mxu0 0.0
  %1249 = vmatpush.msra.mxu0 0.0
  %1250 = vmatpush.msra.mxu0 0.0
  %1251 = vmatpush.msra.mxu0 0.0
  %1252 = vmatpush.msra.mxu0 0.0
  %1253 = vmatpush.msra.mxu0 0.0
  %1254 = vmatpush.msra.mxu0 0.0
  %1255 = vmatpush.msra.mxu0 %v1208
  %1256 = vmatpush.msra.mxu0 %v1206
  %1257 = vmatmul.f32.gmra.mxu0 %v1213
  %v1258 = vpop.f32.mrf.mxu0
  %v1259 = vadd.f32 0.0, %v1258
  %1260 = vmatmul.f32.gmra.mxu0 %v1216
  %v1261 = vpop.f32.mrf.mxu0
  %v1262 = vadd.f32 0.0, %v1261
  %1263 = vdwg.mxu0
  %v1264 = vadd.f32 %v1180, %v1236
  %v1265 = vadd.f32 %v1181, %v1259
  %v1266 = vadd.f32 %v1182, %v1239
  %v1267 = vadd.f32 %v1183, %v1262
  %1268 = vrot.lane.b32.xlu0 %v103, 96
  %v1269 = vpop.permute.xlu0 %1268
  %1270 = vrot.lane.b32.xlu0 %v104, 96
  %v1271 = vpop.permute.xlu0 %1270
  %1272 = vrot.lane.b32.xlu0 %v105, 96
  %v1273 = vpop.permute.xlu0 %1272
  %1274 = vrot.lane.b32.xlu0 %v106, 96
  %v1275 = vpop.permute.xlu0 %1274
  %1276 = vrot.lane.b32.xlu0 %v107, 96
  %v1277 = vpop.permute.xlu0 %1276
  %1278 = vrot.lane.b32.xlu0 %v108, 96
  %v1279 = vpop.permute.xlu0 %1278
  %vm1280 = vcmask 785408
  %v1281 = vsel %vm1280, %v1269, %v1271
  %v1282 = vsel %vm1280, %v1271, %v1273
  %v1283 = vsel %vm1280, %v1275, %v1277
  %v1284 = vsel %vm1280, %v1277, %v1279
  %v1289 = vsel %vm95, %v1281, 0.0
  %v1290 = vsel %vm96, %v1282, 0.0
  %v1291 = vsel %vm95, %v1283, 0.0
  %v1292 = vsel %vm96, %v1284, 0.0
  %s1293 = scalar_lea.vmem %s1, 224
  %v1294 = vld [vmem:[%s1293] sm:$0xff]
  %v1295 = vld [vmem:[%s1293 + $0x8] sm:$0xff]
  %v1297 = vsel %vm147, %v1294, 0
  %v1300 = vsel %vm147, %v1295, 0
  %1302 = vmatpush.msra.mxu0 0.0
  %1303 = vmatpush.msra.mxu0 0.0
  %1304 = vmatpush.msra.mxu0 0.0
  %1305 = vmatpush.msra.mxu0 0.0
  %1306 = vmatpush.msra.mxu0 0.0
  %1307 = vmatpush.msra.mxu0 0.0
  %1308 = vmatpush.msra.mxu0 0.0
  %1309 = vmatpush.msra.mxu0 0.0
  %1310 = vmatpush.msra.mxu0 0.0
  %1311 = vmatpush.msra.mxu0 0.0
  %1312 = vmatpush.msra.mxu0 0.0
  %1313 = vmatpush.msra.mxu0 0.0
  %1314 = vmatpush.msra.mxu0 0.0
  %1315 = vmatpush.msra.mxu0 0.0
  %1316 = vmatpush.msra.mxu0 %v1291
  %1317 = vmatpush.msra.mxu0 %v1289
  %1318 = vmatmul.f32.gmra.mxu0 %v1297
  %v1319 = vpop.f32.mrf.mxu0
  %v1320 = vadd.f32 0.0, %v1319
  %1321 = vmatmul.f32.gmra.mxu0 %v1300
  %v1322 = vpop.f32.mrf.mxu0
  %v1323 = vadd.f32 0.0, %v1322
  %1324 = vdwg.mxu0
  %1325 = vmatpush.msra.mxu0 0.0
  %1326 = vmatpush.msra.mxu0 0.0
  %1327 = vmatpush.msra.mxu0 0.0
  %1328 = vmatpush.msra.mxu0 0.0
  %1329 = vmatpush.msra.mxu0 0.0
  %1330 = vmatpush.msra.mxu0 0.0
  %1331 = vmatpush.msra.mxu0 0.0
  %1332 = vmatpush.msra.mxu0 0.0
  %1333 = vmatpush.msra.mxu0 0.0
  %1334 = vmatpush.msra.mxu0 0.0
  %1335 = vmatpush.msra.mxu0 0.0
  %1336 = vmatpush.msra.mxu0 0.0
  %1337 = vmatpush.msra.mxu0 0.0
  %1338 = vmatpush.msra.mxu0 0.0
  %1339 = vmatpush.msra.mxu0 %v1292
  %1340 = vmatpush.msra.mxu0 %v1290
  %1341 = vmatmul.f32.gmra.mxu0 %v1297
  %v1342 = vpop.f32.mrf.mxu0
  %v1343 = vadd.f32 0.0, %v1342
  %1344 = vmatmul.f32.gmra.mxu0 %v1300
  %v1345 = vpop.f32.mrf.mxu0
  %v1346 = vadd.f32 0.0, %v1345
  %1347 = vdwg.mxu0
  %v1348 = vadd.f32 %v1264, %v1320
  %v1349 = vadd.f32 %v1265, %v1343
  %v1350 = vadd.f32 %v1266, %v1323
  %v1351 = vadd.f32 %v1267, %v1346
  %1352 = vrot.lane.b32.xlu0 %v103, 95
  %v1353 = vpop.permute.xlu0 %1352
  %1354 = vrot.lane.b32.xlu0 %v104, 95
  %v1355 = vpop.permute.xlu0 %1354
  %1356 = vrot.lane.b32.xlu0 %v105, 95
  %v1357 = vpop.permute.xlu0 %1356
  %1358 = vrot.lane.b32.xlu0 %v106, 95
  %v1359 = vpop.permute.xlu0 %1358
  %1360 = vrot.lane.b32.xlu0 %v107, 95
  %v1361 = vpop.permute.xlu0 %1360
  %1362 = vrot.lane.b32.xlu0 %v108, 95
  %v1363 = vpop.permute.xlu0 %1362
  %vm1364 = vcmask 777216
  %v1365 = vsel %vm1364, %v1353, %v1355
  %v1366 = vsel %vm1364, %v1355, %v1357
  %v1367 = vsel %vm1364, %v1359, %v1361
  %v1368 = vsel %vm1364, %v1361, %v1363
  %v1373 = vsel %vm111, %v1365, 0.0
  %v1374 = vsel %vm112, %v1366, 0.0
  %v1375 = vsel %vm111, %v1367, 0.0
  %v1376 = vsel %vm112, %v1368, 0.0
  %s1377 = scalar_lea.vmem %s1, 240
  %v1378 = vld [vmem:[%s1377] sm:$0xff]
  %v1379 = vld [vmem:[%s1377 + $0x8] sm:$0xff]
  %v1381 = vsel %vm147, %v1378, 0
  %v1384 = vsel %vm147, %v1379, 0
  %1386 = vmatpush.msra.mxu0 0.0
  %1387 = vmatpush.msra.mxu0 0.0
  %1388 = vmatpush.msra.mxu0 0.0
  %1389 = vmatpush.msra.mxu0 0.0
  %1390 = vmatpush.msra.mxu0 0.0
  %1391 = vmatpush.msra.mxu0 0.0
  %1392 = vmatpush.msra.mxu0 0.0
  %1393 = vmatpush.msra.mxu0 0.0
  %1394 = vmatpush.msra.mxu0 0.0
  %1395 = vmatpush.msra.mxu0 0.0
  %1396 = vmatpush.msra.mxu0 0.0
  %1397 = vmatpush.msra.mxu0 0.0
  %1398 = vmatpush.msra.mxu0 0.0
  %1399 = vmatpush.msra.mxu0 0.0
  %1400 = vmatpush.msra.mxu0 %v1375
  %1401 = vmatpush.msra.mxu0 %v1373
  %1402 = vmatmul.f32.gmra.mxu0 %v1381
  %v1403 = vpop.f32.mrf.mxu0
  %v1404 = vadd.f32 0.0, %v1403
  %1405 = vmatmul.f32.gmra.mxu0 %v1384
  %v1406 = vpop.f32.mrf.mxu0
  %v1407 = vadd.f32 0.0, %v1406
  %1408 = vdwg.mxu0
  %1409 = vmatpush.msra.mxu0 0.0
  %1410 = vmatpush.msra.mxu0 0.0
  %1411 = vmatpush.msra.mxu0 0.0
  %1412 = vmatpush.msra.mxu0 0.0
  %1413 = vmatpush.msra.mxu0 0.0
  %1414 = vmatpush.msra.mxu0 0.0
  %1415 = vmatpush.msra.mxu0 0.0
  %1416 = vmatpush.msra.mxu0 0.0
  %1417 = vmatpush.msra.mxu0 0.0
  %1418 = vmatpush.msra.mxu0 0.0
  %1419 = vmatpush.msra.mxu0 0.0
  %1420 = vmatpush.msra.mxu0 0.0
  %1421 = vmatpush.msra.mxu0 0.0
  %1422 = vmatpush.msra.mxu0 0.0
  %1423 = vmatpush.msra.mxu0 %v1376
  %1424 = vmatpush.msra.mxu0 %v1374
  %1425 = vmatmul.f32.gmra.mxu0 %v1381
  %v1426 = vpop.f32.mrf.mxu0
  %v1427 = vadd.f32 0.0, %v1426
  %1428 = vmatmul.f32.gmra.mxu0 %v1384
  %v1429 = vpop.f32.mrf.mxu0
  %v1430 = vadd.f32 0.0, %v1429
  %1431 = vdwg.mxu0
  %v1432 = vadd.f32 %v1348, %v1404
  %v1433 = vadd.f32 %v1349, %v1427
  %v1434 = vadd.f32 %v1350, %v1407
  %v1435 = vadd.f32 %v1351, %v1430
  %1436 = vrot.lane.b32.xlu0 %v103, 94
  %v1437 = vpop.permute.xlu0 %1436
  %1438 = vrot.lane.b32.xlu0 %v104, 94
  %v1439 = vpop.permute.xlu0 %1438
  %1440 = vrot.lane.b32.xlu0 %v105, 94
  %v1441 = vpop.permute.xlu0 %1440
  %1442 = vrot.lane.b32.xlu0 %v106, 94
  %v1443 = vpop.permute.xlu0 %1442
  %1444 = vrot.lane.b32.xlu0 %v107, 94
  %v1445 = vpop.permute.xlu0 %1444
  %1446 = vrot.lane.b32.xlu0 %v108, 94
  %v1447 = vpop.permute.xlu0 %1446
  %vm1448 = vcmask 769024
  %v1449 = vsel %vm1448, %v1437, %v1439
  %v1450 = vsel %vm1448, %v1439, %v1441
  %v1451 = vsel %vm1448, %v1443, %v1445
  %v1452 = vsel %vm1448, %v1445, %v1447
  %v1457 = vsel %vm254, %v1449, 0.0
  %v1458 = vsel %vm255, %v1450, 0.0
  %v1459 = vsel %vm254, %v1451, 0.0
  %v1460 = vsel %vm255, %v1452, 0.0
  %s1461 = scalar_lea.vmem %s1, 256
  %v1462 = vld [vmem:[%s1461] sm:$0xff]
  %v1463 = vld [vmem:[%s1461 + $0x8] sm:$0xff]
  %v1465 = vsel %vm147, %v1462, 0
  %v1468 = vsel %vm147, %v1463, 0
  %1470 = vmatpush.msra.mxu0 0.0
  %1471 = vmatpush.msra.mxu0 0.0
  %1472 = vmatpush.msra.mxu0 0.0
  %1473 = vmatpush.msra.mxu0 0.0
  %1474 = vmatpush.msra.mxu0 0.0
  %1475 = vmatpush.msra.mxu0 0.0
  %1476 = vmatpush.msra.mxu0 0.0
  %1477 = vmatpush.msra.mxu0 0.0
  %1478 = vmatpush.msra.mxu0 0.0
  %1479 = vmatpush.msra.mxu0 0.0
  %1480 = vmatpush.msra.mxu0 0.0
  %1481 = vmatpush.msra.mxu0 0.0
  %1482 = vmatpush.msra.mxu0 0.0
  %1483 = vmatpush.msra.mxu0 0.0
  %1484 = vmatpush.msra.mxu0 %v1459
  %1485 = vmatpush.msra.mxu0 %v1457
  %1486 = vmatmul.f32.gmra.mxu0 %v1465
  %v1487 = vpop.f32.mrf.mxu0
  %v1488 = vadd.f32 0.0, %v1487
  %1489 = vmatmul.f32.gmra.mxu0 %v1468
  %v1490 = vpop.f32.mrf.mxu0
  %v1491 = vadd.f32 0.0, %v1490
  %1492 = vdwg.mxu0
  %1493 = vmatpush.msra.mxu0 0.0
  %1494 = vmatpush.msra.mxu0 0.0
  %1495 = vmatpush.msra.mxu0 0.0
  %1496 = vmatpush.msra.mxu0 0.0
  %1497 = vmatpush.msra.mxu0 0.0
  %1498 = vmatpush.msra.mxu0 0.0
  %1499 = vmatpush.msra.mxu0 0.0
  %1500 = vmatpush.msra.mxu0 0.0
  %1501 = vmatpush.msra.mxu0 0.0
  %1502 = vmatpush.msra.mxu0 0.0
  %1503 = vmatpush.msra.mxu0 0.0
  %1504 = vmatpush.msra.mxu0 0.0
  %1505 = vmatpush.msra.mxu0 0.0
  %1506 = vmatpush.msra.mxu0 0.0
  %1507 = vmatpush.msra.mxu0 %v1460
  %1508 = vmatpush.msra.mxu0 %v1458
  %1509 = vmatmul.f32.gmra.mxu0 %v1465
  %v1510 = vpop.f32.mrf.mxu0
  %v1511 = vadd.f32 0.0, %v1510
  %1512 = vmatmul.f32.gmra.mxu0 %v1468
  %v1513 = vpop.f32.mrf.mxu0
  %v1514 = vadd.f32 0.0, %v1513
  %1515 = vdwg.mxu0
  %v1516 = vadd.f32 %v1432, %v1488
  %v1517 = vadd.f32 %v1433, %v1511
  %v1518 = vadd.f32 %v1434, %v1491
  %v1519 = vadd.f32 %v1435, %v1514
  %s1520 = scalar_lea.vmem %s1, 272
  %v1521 = vld [vmem:[%s1520] sm:$0xff]
  %v1522 = vld [vmem:[%s1520 + $0x8] sm:$0xff]
  %1523 = vrot.lane.b32.xlu0 %v103, 93
  %v1524 = vpop.permute.xlu0 %1523
  %1525 = vrot.lane.b32.xlu0 %v104, 93
  %v1526 = vpop.permute.xlu0 %1525
  %1527 = vrot.lane.b32.xlu0 %v105, 93
  %v1528 = vpop.permute.xlu0 %1527
  %1529 = vrot.lane.b32.xlu0 %v106, 93
  %v1530 = vpop.permute.xlu0 %1529
  %1531 = vrot.lane.b32.xlu0 %v107, 93
  %v1532 = vpop.permute.xlu0 %1531
  %1533 = vrot.lane.b32.xlu0 %v108, 93
  %v1534 = vpop.permute.xlu0 %1533
  %vm1535 = vcmask 760832
  %v1536 = vsel %vm1535, %v1524, %v1526
  %v1537 = vsel %vm1535, %v1526, %v1528
  %v1538 = vsel %vm1535, %v1530, %v1532
  %v1539 = vsel %vm1535, %v1532, %v1534
  %v1545 = vsel %vm147, %v1521, 0
  %v1548 = vsel %vm147, %v1522, 0
  %1550 = vmatpush.msra.mxu0 0.0
  %1551 = vmatpush.msra.mxu0 0.0
  %1552 = vmatpush.msra.mxu0 0.0
  %1553 = vmatpush.msra.mxu0 0.0
  %1554 = vmatpush.msra.mxu0 0.0
  %1555 = vmatpush.msra.mxu0 0.0
  %1556 = vmatpush.msra.mxu0 0.0
  %1557 = vmatpush.msra.mxu0 0.0
  %1558 = vmatpush.msra.mxu0 0.0
  %1559 = vmatpush.msra.mxu0 0.0
  %1560 = vmatpush.msra.mxu0 0.0
  %1561 = vmatpush.msra.mxu0 0.0
  %1562 = vmatpush.msra.mxu0 0.0
  %1563 = vmatpush.msra.mxu0 0.0
  %1564 = vmatpush.msra.mxu0 %v1538
  %1565 = vmatpush.msra.mxu0 %v1536
  %1566 = vmatmul.f32.gmra.mxu0 %v1545
  %v1567 = vpop.f32.mrf.mxu0
  %v1568 = vadd.f32 0.0, %v1567
  %1569 = vmatmul.f32.gmra.mxu0 %v1548
  %v1570 = vpop.f32.mrf.mxu0
  %v1571 = vadd.f32 0.0, %v1570
  %1572 = vdwg.mxu0
  %1573 = vmatpush.msra.mxu0 0.0
  %1574 = vmatpush.msra.mxu0 0.0
  %1575 = vmatpush.msra.mxu0 0.0
  %1576 = vmatpush.msra.mxu0 0.0
  %1577 = vmatpush.msra.mxu0 0.0
  %1578 = vmatpush.msra.mxu0 0.0
  %1579 = vmatpush.msra.mxu0 0.0
  %1580 = vmatpush.msra.mxu0 0.0
  %1581 = vmatpush.msra.mxu0 0.0
  %1582 = vmatpush.msra.mxu0 0.0
  %1583 = vmatpush.msra.mxu0 0.0
  %1584 = vmatpush.msra.mxu0 0.0
  %1585 = vmatpush.msra.mxu0 0.0
  %1586 = vmatpush.msra.mxu0 0.0
  %1587 = vmatpush.msra.mxu0 %v1539
  %1588 = vmatpush.msra.mxu0 %v1537
  %1589 = vmatmul.f32.gmra.mxu0 %v1545
  %v1590 = vpop.f32.mrf.mxu0
  %v1591 = vadd.f32 0.0, %v1590
  %1592 = vmatmul.f32.gmra.mxu0 %v1548
  %v1593 = vpop.f32.mrf.mxu0
  %v1594 = vadd.f32 0.0, %v1593
  %1595 = vdwg.mxu0
  %v1596 = vadd.f32 %v1516, %v1568
  %v1597 = vadd.f32 %v1517, %v1591
  %v1598 = vadd.f32 %v1518, %v1571
  %v1599 = vadd.f32 %v1519, %v1594
  %1600 = vrot.lane.b32.xlu0 %v103, 92
  %v1601 = vpop.permute.xlu0 %1600
  %1602 = vrot.lane.b32.xlu0 %v104, 92
  %v1603 = vpop.permute.xlu0 %1602
  %1604 = vrot.lane.b32.xlu0 %v105, 92
  %v1605 = vpop.permute.xlu0 %1604
  %1606 = vrot.lane.b32.xlu0 %v106, 92
  %v1607 = vpop.permute.xlu0 %1606
  %1608 = vrot.lane.b32.xlu0 %v107, 92
  %v1609 = vpop.permute.xlu0 %1608
  %1610 = vrot.lane.b32.xlu0 %v108, 92
  %v1611 = vpop.permute.xlu0 %1610
  %vm1612 = vcmask 752640
  %v1613 = vsel %vm1612, %v1601, %v1603
  %v1614 = vsel %vm1612, %v1603, %v1605
  %v1615 = vsel %vm1612, %v1607, %v1609
  %v1616 = vsel %vm1612, %v1609, %v1611
  %v1621 = vsel %vm422, %v1613, 0.0
  %v1622 = vsel %vm423, %v1614, 0.0
  %v1623 = vsel %vm422, %v1615, 0.0
  %v1624 = vsel %vm423, %v1616, 0.0
  %s1625 = scalar_lea.vmem %s1, 288
  %v1626 = vld [vmem:[%s1625] sm:$0xff]
  %v1627 = vld [vmem:[%s1625 + $0x8] sm:$0xff]
  %v1629 = vsel %vm147, %v1626, 0
  %v1632 = vsel %vm147, %v1627, 0
  %1634 = vmatpush.msra.mxu0 0.0
  %1635 = vmatpush.msra.mxu0 0.0
  %1636 = vmatpush.msra.mxu0 0.0
  %1637 = vmatpush.msra.mxu0 0.0
  %1638 = vmatpush.msra.mxu0 0.0
  %1639 = vmatpush.msra.mxu0 0.0
  %1640 = vmatpush.msra.mxu0 0.0
  %1641 = vmatpush.msra.mxu0 0.0
  %1642 = vmatpush.msra.mxu0 0.0
  %1643 = vmatpush.msra.mxu0 0.0
  %1644 = vmatpush.msra.mxu0 0.0
  %1645 = vmatpush.msra.mxu0 0.0
  %1646 = vmatpush.msra.mxu0 0.0
  %1647 = vmatpush.msra.mxu0 0.0
  %1648 = vmatpush.msra.mxu0 %v1623
  %1649 = vmatpush.msra.mxu0 %v1621
  %1650 = vmatmul.f32.gmra.mxu0 %v1629
  %v1651 = vpop.f32.mrf.mxu0
  %v1652 = vadd.f32 0.0, %v1651
  %1653 = vmatmul.f32.gmra.mxu0 %v1632
  %v1654 = vpop.f32.mrf.mxu0
  %v1655 = vadd.f32 0.0, %v1654
  %1656 = vdwg.mxu0
  %1657 = vmatpush.msra.mxu0 0.0
  %1658 = vmatpush.msra.mxu0 0.0
  %1659 = vmatpush.msra.mxu0 0.0
  %1660 = vmatpush.msra.mxu0 0.0
  %1661 = vmatpush.msra.mxu0 0.0
  %1662 = vmatpush.msra.mxu0 0.0
  %1663 = vmatpush.msra.mxu0 0.0
  %1664 = vmatpush.msra.mxu0 0.0
  %1665 = vmatpush.msra.mxu0 0.0
  %1666 = vmatpush.msra.mxu0 0.0
  %1667 = vmatpush.msra.mxu0 0.0
  %1668 = vmatpush.msra.mxu0 0.0
  %1669 = vmatpush.msra.mxu0 0.0
  %1670 = vmatpush.msra.mxu0 0.0
  %1671 = vmatpush.msra.mxu0 %v1624
  %1672 = vmatpush.msra.mxu0 %v1622
  %1673 = vmatmul.f32.gmra.mxu0 %v1629
  %v1674 = vpop.f32.mrf.mxu0
  %v1675 = vadd.f32 0.0, %v1674
  %1676 = vmatmul.f32.gmra.mxu0 %v1632
  %v1677 = vpop.f32.mrf.mxu0
  %v1678 = vadd.f32 0.0, %v1677
  %1679 = vdwg.mxu0
  %v1680 = vadd.f32 %v1596, %v1652
  %v1681 = vadd.f32 %v1597, %v1675
  %v1682 = vadd.f32 %v1598, %v1655
  %v1683 = vadd.f32 %v1599, %v1678
  %1684 = vrot.lane.b32.xlu0 %v103, 91
  %v1685 = vpop.permute.xlu0 %1684
  %1686 = vrot.lane.b32.xlu0 %v104, 91
  %v1687 = vpop.permute.xlu0 %1686
  %1688 = vrot.lane.b32.xlu0 %v105, 91
  %v1689 = vpop.permute.xlu0 %1688
  %1690 = vrot.lane.b32.xlu0 %v106, 91
  %v1691 = vpop.permute.xlu0 %1690
  %1692 = vrot.lane.b32.xlu0 %v107, 91
  %v1693 = vpop.permute.xlu0 %1692
  %1694 = vrot.lane.b32.xlu0 %v108, 91
  %v1695 = vpop.permute.xlu0 %1694
  %vm1696 = vcmask 744448
  %v1697 = vsel %vm1696, %v1685, %v1687
  %v1698 = vsel %vm1696, %v1687, %v1689
  %v1699 = vsel %vm1696, %v1691, %v1693
  %v1700 = vsel %vm1696, %v1693, %v1695
  %v1705 = vsel %vm510, %v1697, 0.0
  %v1706 = vsel %vm511, %v1698, 0.0
  %v1707 = vsel %vm510, %v1699, 0.0
  %v1708 = vsel %vm511, %v1700, 0.0
  %s1709 = scalar_lea.vmem %s1, 304
  %v1710 = vld [vmem:[%s1709] sm:$0xff]
  %v1711 = vld [vmem:[%s1709 + $0x8] sm:$0xff]
  %v1713 = vsel %vm147, %v1710, 0
  %v1716 = vsel %vm147, %v1711, 0
  %1718 = vmatpush.msra.mxu0 0.0
  %1719 = vmatpush.msra.mxu0 0.0
  %1720 = vmatpush.msra.mxu0 0.0
  %1721 = vmatpush.msra.mxu0 0.0
  %1722 = vmatpush.msra.mxu0 0.0
  %1723 = vmatpush.msra.mxu0 0.0
  %1724 = vmatpush.msra.mxu0 0.0
  %1725 = vmatpush.msra.mxu0 0.0
  %1726 = vmatpush.msra.mxu0 0.0
  %1727 = vmatpush.msra.mxu0 0.0
  %1728 = vmatpush.msra.mxu0 0.0
  %1729 = vmatpush.msra.mxu0 0.0
  %1730 = vmatpush.msra.mxu0 0.0
  %1731 = vmatpush.msra.mxu0 0.0
  %1732 = vmatpush.msra.mxu0 %v1707
  %1733 = vmatpush.msra.mxu0 %v1705
  %1734 = vmatmul.f32.gmra.mxu0 %v1713
  %v1735 = vpop.f32.mrf.mxu0
  %v1736 = vadd.f32 0.0, %v1735
  %1737 = vmatmul.f32.gmra.mxu0 %v1716
  %v1738 = vpop.f32.mrf.mxu0
  %v1739 = vadd.f32 0.0, %v1738
  %1740 = vdwg.mxu0
  %1741 = vmatpush.msra.mxu0 0.0
  %1742 = vmatpush.msra.mxu0 0.0
  %1743 = vmatpush.msra.mxu0 0.0
  %1744 = vmatpush.msra.mxu0 0.0
  %1745 = vmatpush.msra.mxu0 0.0
  %1746 = vmatpush.msra.mxu0 0.0
  %1747 = vmatpush.msra.mxu0 0.0
  %1748 = vmatpush.msra.mxu0 0.0
  %1749 = vmatpush.msra.mxu0 0.0
  %1750 = vmatpush.msra.mxu0 0.0
  %1751 = vmatpush.msra.mxu0 0.0
  %1752 = vmatpush.msra.mxu0 0.0
  %1753 = vmatpush.msra.mxu0 0.0
  %1754 = vmatpush.msra.mxu0 0.0
  %1755 = vmatpush.msra.mxu0 %v1708
  %1756 = vmatpush.msra.mxu0 %v1706
  %1757 = vmatmul.f32.gmra.mxu0 %v1713
  %v1758 = vpop.f32.mrf.mxu0
  %v1759 = vadd.f32 0.0, %v1758
  %1760 = vmatmul.f32.gmra.mxu0 %v1716
  %v1761 = vpop.f32.mrf.mxu0
  %v1762 = vadd.f32 0.0, %v1761
  %1763 = vdwg.mxu0
  %v1764 = vadd.f32 %v1680, %v1736
  %v1765 = vadd.f32 %v1681, %v1759
  %v1766 = vadd.f32 %v1682, %v1739
  %v1767 = vadd.f32 %v1683, %v1762
  %1768 = vrot.lane.b32.xlu0 %v103, 90
  %v1769 = vpop.permute.xlu0 %1768
  %1770 = vrot.lane.b32.xlu0 %v104, 90
  %v1771 = vpop.permute.xlu0 %1770
  %1772 = vrot.lane.b32.xlu0 %v105, 90
  %v1773 = vpop.permute.xlu0 %1772
  %1774 = vrot.lane.b32.xlu0 %v106, 90
  %v1775 = vpop.permute.xlu0 %1774
  %1776 = vrot.lane.b32.xlu0 %v107, 90
  %v1777 = vpop.permute.xlu0 %1776
  %1778 = vrot.lane.b32.xlu0 %v108, 90
  %v1779 = vpop.permute.xlu0 %1778
  %vm1780 = vcmask 736256
  %v1781 = vsel %vm1780, %v1769, %v1771
  %v1782 = vsel %vm1780, %v1771, %v1773
  %v1783 = vsel %vm1780, %v1775, %v1777
  %v1784 = vsel %vm1780, %v1777, %v1779
  %v1789 = vsel %vm598, %v1781, 0.0
  %v1790 = vsel %vm599, %v1782, 0.0
  %v1791 = vsel %vm598, %v1783, 0.0
  %v1792 = vsel %vm599, %v1784, 0.0
  %s1793 = scalar_lea.vmem %s1, 320
  %v1794 = vld [vmem:[%s1793] sm:$0xff]
  %v1795 = vld [vmem:[%s1793 + $0x8] sm:$0xff]
  %v1797 = vsel %vm147, %v1794, 0
  %v1800 = vsel %vm147, %v1795, 0
  %1802 = vmatpush.msra.mxu0 0.0
  %1803 = vmatpush.msra.mxu0 0.0
  %1804 = vmatpush.msra.mxu0 0.0
  %1805 = vmatpush.msra.mxu0 0.0
  %1806 = vmatpush.msra.mxu0 0.0
  %1807 = vmatpush.msra.mxu0 0.0
  %1808 = vmatpush.msra.mxu0 0.0
  %1809 = vmatpush.msra.mxu0 0.0
  %1810 = vmatpush.msra.mxu0 0.0
  %1811 = vmatpush.msra.mxu0 0.0
  %1812 = vmatpush.msra.mxu0 0.0
  %1813 = vmatpush.msra.mxu0 0.0
  %1814 = vmatpush.msra.mxu0 0.0
  %1815 = vmatpush.msra.mxu0 0.0
  %1816 = vmatpush.msra.mxu0 %v1791
  %1817 = vmatpush.msra.mxu0 %v1789
  %1818 = vmatmul.f32.gmra.mxu0 %v1797
  %v1819 = vpop.f32.mrf.mxu0
  %v1820 = vadd.f32 0.0, %v1819
  %1821 = vmatmul.f32.gmra.mxu0 %v1800
  %v1822 = vpop.f32.mrf.mxu0
  %v1823 = vadd.f32 0.0, %v1822
  %1824 = vdwg.mxu0
  %1825 = vmatpush.msra.mxu0 0.0
  %1826 = vmatpush.msra.mxu0 0.0
  %1827 = vmatpush.msra.mxu0 0.0
  %1828 = vmatpush.msra.mxu0 0.0
  %1829 = vmatpush.msra.mxu0 0.0
  %1830 = vmatpush.msra.mxu0 0.0
  %1831 = vmatpush.msra.mxu0 0.0
  %1832 = vmatpush.msra.mxu0 0.0
  %1833 = vmatpush.msra.mxu0 0.0
  %1834 = vmatpush.msra.mxu0 0.0
  %1835 = vmatpush.msra.mxu0 0.0
  %1836 = vmatpush.msra.mxu0 0.0
  %1837 = vmatpush.msra.mxu0 0.0
  %1838 = vmatpush.msra.mxu0 0.0
  %1839 = vmatpush.msra.mxu0 %v1792
  %1840 = vmatpush.msra.mxu0 %v1790
  %1841 = vmatmul.f32.gmra.mxu0 %v1797
  %v1842 = vpop.f32.mrf.mxu0
  %v1843 = vadd.f32 0.0, %v1842
  %1844 = vmatmul.f32.gmra.mxu0 %v1800
  %v1845 = vpop.f32.mrf.mxu0
  %v1846 = vadd.f32 0.0, %v1845
  %1847 = vdwg.mxu0
  %v1848 = vadd.f32 %v1764, %v1820
  %v1849 = vadd.f32 %v1765, %v1843
  %v1850 = vadd.f32 %v1766, %v1823
  %v1851 = vadd.f32 %v1767, %v1846
  %1852 = vrot.lane.b32.xlu0 %v103, 80
  %v1853 = vpop.permute.xlu0 %1852
  %1854 = vrot.lane.b32.xlu0 %v104, 80
  %v1855 = vpop.permute.xlu0 %1854
  %1856 = vrot.lane.b32.xlu0 %v105, 80
  %v1857 = vpop.permute.xlu0 %1856
  %1858 = vrot.lane.b32.xlu0 %v106, 80
  %v1859 = vpop.permute.xlu0 %1858
  %1860 = vrot.lane.b32.xlu0 %v107, 80
  %v1861 = vpop.permute.xlu0 %1860
  %1862 = vrot.lane.b32.xlu0 %v108, 80
  %v1863 = vpop.permute.xlu0 %1862
  %vm1864 = vcmask 654336
  %v1865 = vsel %vm1864, %v1853, %v1855
  %v1866 = vsel %vm1864, %v1855, %v1857
  %v1867 = vsel %vm1864, %v1859, %v1861
  %v1868 = vsel %vm1864, %v1861, %v1863
  %v1873 = vsel %vm95, %v1865, 0.0
  %v1874 = vsel %vm96, %v1866, 0.0
  %v1875 = vsel %vm95, %v1867, 0.0
  %v1876 = vsel %vm96, %v1868, 0.0
  %s1877 = scalar_lea.vmem %s1, 336
  %v1878 = vld [vmem:[%s1877] sm:$0xff]
  %v1879 = vld [vmem:[%s1877 + $0x8] sm:$0xff]
  %v1881 = vsel %vm147, %v1878, 0
  %v1884 = vsel %vm147, %v1879, 0
  %1886 = vmatpush.msra.mxu0 0.0
  %1887 = vmatpush.msra.mxu0 0.0
  %1888 = vmatpush.msra.mxu0 0.0
  %1889 = vmatpush.msra.mxu0 0.0
  %1890 = vmatpush.msra.mxu0 0.0
  %1891 = vmatpush.msra.mxu0 0.0
  %1892 = vmatpush.msra.mxu0 0.0
  %1893 = vmatpush.msra.mxu0 0.0
  %1894 = vmatpush.msra.mxu0 0.0
  %1895 = vmatpush.msra.mxu0 0.0
  %1896 = vmatpush.msra.mxu0 0.0
  %1897 = vmatpush.msra.mxu0 0.0
  %1898 = vmatpush.msra.mxu0 0.0
  %1899 = vmatpush.msra.mxu0 0.0
  %1900 = vmatpush.msra.mxu0 %v1875
  %1901 = vmatpush.msra.mxu0 %v1873
  %1902 = vmatmul.f32.gmra.mxu0 %v1881
  %v1903 = vpop.f32.mrf.mxu0
  %v1904 = vadd.f32 0.0, %v1903
  %1905 = vmatmul.f32.gmra.mxu0 %v1884
  %v1906 = vpop.f32.mrf.mxu0
  %v1907 = vadd.f32 0.0, %v1906
  %1908 = vdwg.mxu0
  %1909 = vmatpush.msra.mxu0 0.0
  %1910 = vmatpush.msra.mxu0 0.0
  %1911 = vmatpush.msra.mxu0 0.0
  %1912 = vmatpush.msra.mxu0 0.0
  %1913 = vmatpush.msra.mxu0 0.0
  %1914 = vmatpush.msra.mxu0 0.0
  %1915 = vmatpush.msra.mxu0 0.0
  %1916 = vmatpush.msra.mxu0 0.0
  %1917 = vmatpush.msra.mxu0 0.0
  %1918 = vmatpush.msra.mxu0 0.0
  %1919 = vmatpush.msra.mxu0 0.0
  %1920 = vmatpush.msra.mxu0 0.0
  %1921 = vmatpush.msra.mxu0 0.0
  %1922 = vmatpush.msra.mxu0 0.0
  %1923 = vmatpush.msra.mxu0 %v1876
  %1924 = vmatpush.msra.mxu0 %v1874
  %1925 = vmatmul.f32.gmra.mxu0 %v1881
  %v1926 = vpop.f32.mrf.mxu0
  %v1927 = vadd.f32 0.0, %v1926
  %1928 = vmatmul.f32.gmra.mxu0 %v1884
  %v1929 = vpop.f32.mrf.mxu0
  %v1930 = vadd.f32 0.0, %v1929
  %1931 = vdwg.mxu0
  %v1932 = vadd.f32 %v1848, %v1904
  %v1933 = vadd.f32 %v1849, %v1927
  %v1934 = vadd.f32 %v1850, %v1907
  %v1935 = vadd.f32 %v1851, %v1930
  %1936 = vrot.lane.b32.xlu0 %v103, 79
  %v1937 = vpop.permute.xlu0 %1936
  %1938 = vrot.lane.b32.xlu0 %v104, 79
  %v1939 = vpop.permute.xlu0 %1938
  %1940 = vrot.lane.b32.xlu0 %v105, 79
  %v1941 = vpop.permute.xlu0 %1940
  %1942 = vrot.lane.b32.xlu0 %v106, 79
  %v1943 = vpop.permute.xlu0 %1942
  %1944 = vrot.lane.b32.xlu0 %v107, 79
  %v1945 = vpop.permute.xlu0 %1944
  %1946 = vrot.lane.b32.xlu0 %v108, 79
  %v1947 = vpop.permute.xlu0 %1946
  %vm1948 = vcmask 646144
  %v1949 = vsel %vm1948, %v1937, %v1939
  %v1950 = vsel %vm1948, %v1939, %v1941
  %v1951 = vsel %vm1948, %v1943, %v1945
  %v1952 = vsel %vm1948, %v1945, %v1947
  %v1957 = vsel %vm111, %v1949, 0.0
  %v1958 = vsel %vm112, %v1950, 0.0
  %v1959 = vsel %vm111, %v1951, 0.0
  %v1960 = vsel %vm112, %v1952, 0.0
  %s1961 = scalar_lea.vmem %s1, 352
  %v1962 = vld [vmem:[%s1961] sm:$0xff]
  %v1963 = vld [vmem:[%s1961 + $0x8] sm:$0xff]
  %v1965 = vsel %vm147, %v1962, 0
  %v1968 = vsel %vm147, %v1963, 0
  %1970 = vmatpush.msra.mxu0 0.0
  %1971 = vmatpush.msra.mxu0 0.0
  %1972 = vmatpush.msra.mxu0 0.0
  %1973 = vmatpush.msra.mxu0 0.0
  %1974 = vmatpush.msra.mxu0 0.0
  %1975 = vmatpush.msra.mxu0 0.0
  %1976 = vmatpush.msra.mxu0 0.0
  %1977 = vmatpush.msra.mxu0 0.0
  %1978 = vmatpush.msra.mxu0 0.0
  %1979 = vmatpush.msra.mxu0 0.0
  %1980 = vmatpush.msra.mxu0 0.0
  %1981 = vmatpush.msra.mxu0 0.0
  %1982 = vmatpush.msra.mxu0 0.0
  %1983 = vmatpush.msra.mxu0 0.0
  %1984 = vmatpush.msra.mxu0 %v1959
  %1985 = vmatpush.msra.mxu0 %v1957
  %1986 = vmatmul.f32.gmra.mxu0 %v1965
  %v1987 = vpop.f32.mrf.mxu0
  %v1988 = vadd.f32 0.0, %v1987
  %1989 = vmatmul.f32.gmra.mxu0 %v1968
  %v1990 = vpop.f32.mrf.mxu0
  %v1991 = vadd.f32 0.0, %v1990
  %1992 = vdwg.mxu0
  %1993 = vmatpush.msra.mxu0 0.0
  %1994 = vmatpush.msra.mxu0 0.0
  %1995 = vmatpush.msra.mxu0 0.0
  %1996 = vmatpush.msra.mxu0 0.0
  %1997 = vmatpush.msra.mxu0 0.0
  %1998 = vmatpush.msra.mxu0 0.0
  %1999 = vmatpush.msra.mxu0 0.0
  %2000 = vmatpush.msra.mxu0 0.0
  %2001 = vmatpush.msra.mxu0 0.0
  %2002 = vmatpush.msra.mxu0 0.0
  %2003 = vmatpush.msra.mxu0 0.0
  %2004 = vmatpush.msra.mxu0 0.0
  %2005 = vmatpush.msra.mxu0 0.0
  %2006 = vmatpush.msra.mxu0 0.0
  %2007 = vmatpush.msra.mxu0 %v1960
  %2008 = vmatpush.msra.mxu0 %v1958
  %2009 = vmatmul.f32.gmra.mxu0 %v1965
  %v2010 = vpop.f32.mrf.mxu0
  %v2011 = vadd.f32 0.0, %v2010
  %2012 = vmatmul.f32.gmra.mxu0 %v1968
  %v2013 = vpop.f32.mrf.mxu0
  %v2014 = vadd.f32 0.0, %v2013
  %2015 = vdwg.mxu0
  %v2016 = vadd.f32 %v1932, %v1988
  %v2017 = vadd.f32 %v1933, %v2011
  %v2018 = vadd.f32 %v1934, %v1991
  %v2019 = vadd.f32 %v1935, %v2014
  %2020 = vrot.lane.b32.xlu0 %v103, 78
  %v2021 = vpop.permute.xlu0 %2020
  %2022 = vrot.lane.b32.xlu0 %v104, 78
  %v2023 = vpop.permute.xlu0 %2022
  %2024 = vrot.lane.b32.xlu0 %v105, 78
  %v2025 = vpop.permute.xlu0 %2024
  %2026 = vrot.lane.b32.xlu0 %v106, 78
  %v2027 = vpop.permute.xlu0 %2026
  %2028 = vrot.lane.b32.xlu0 %v107, 78
  %v2029 = vpop.permute.xlu0 %2028
  %2030 = vrot.lane.b32.xlu0 %v108, 78
  %v2031 = vpop.permute.xlu0 %2030
  %vm2032 = vcmask 637952
  %v2033 = vsel %vm2032, %v2021, %v2023
  %v2034 = vsel %vm2032, %v2023, %v2025
  %v2035 = vsel %vm2032, %v2027, %v2029
  %v2036 = vsel %vm2032, %v2029, %v2031
  %v2041 = vsel %vm254, %v2033, 0.0
  %v2042 = vsel %vm255, %v2034, 0.0
  %v2043 = vsel %vm254, %v2035, 0.0
  %v2044 = vsel %vm255, %v2036, 0.0
  %s2045 = scalar_lea.vmem %s1, 368
  %v2046 = vld [vmem:[%s2045] sm:$0xff]
  %v2047 = vld [vmem:[%s2045 + $0x8] sm:$0xff]
  %v2049 = vsel %vm147, %v2046, 0
  %v2052 = vsel %vm147, %v2047, 0
  %2054 = vmatpush.msra.mxu0 0.0
  %2055 = vmatpush.msra.mxu0 0.0
  %2056 = vmatpush.msra.mxu0 0.0
  %2057 = vmatpush.msra.mxu0 0.0
  %2058 = vmatpush.msra.mxu0 0.0
  %2059 = vmatpush.msra.mxu0 0.0
  %2060 = vmatpush.msra.mxu0 0.0
  %2061 = vmatpush.msra.mxu0 0.0
  %2062 = vmatpush.msra.mxu0 0.0
  %2063 = vmatpush.msra.mxu0 0.0
  %2064 = vmatpush.msra.mxu0 0.0
  %2065 = vmatpush.msra.mxu0 0.0
  %2066 = vmatpush.msra.mxu0 0.0
  %2067 = vmatpush.msra.mxu0 0.0
  %2068 = vmatpush.msra.mxu0 %v2043
  %2069 = vmatpush.msra.mxu0 %v2041
  %2070 = vmatmul.f32.gmra.mxu0 %v2049
  %v2071 = vpop.f32.mrf.mxu0
  %v2072 = vadd.f32 0.0, %v2071
  %2073 = vmatmul.f32.gmra.mxu0 %v2052
  %v2074 = vpop.f32.mrf.mxu0
  %v2075 = vadd.f32 0.0, %v2074
  %2076 = vdwg.mxu0
  %2077 = vmatpush.msra.mxu0 0.0
  %2078 = vmatpush.msra.mxu0 0.0
  %2079 = vmatpush.msra.mxu0 0.0
  %2080 = vmatpush.msra.mxu0 0.0
  %2081 = vmatpush.msra.mxu0 0.0
  %2082 = vmatpush.msra.mxu0 0.0
  %2083 = vmatpush.msra.mxu0 0.0
  %2084 = vmatpush.msra.mxu0 0.0
  %2085 = vmatpush.msra.mxu0 0.0
  %2086 = vmatpush.msra.mxu0 0.0
  %2087 = vmatpush.msra.mxu0 0.0
  %2088 = vmatpush.msra.mxu0 0.0
  %2089 = vmatpush.msra.mxu0 0.0
  %2090 = vmatpush.msra.mxu0 0.0
  %2091 = vmatpush.msra.mxu0 %v2044
  %2092 = vmatpush.msra.mxu0 %v2042
  %2093 = vmatmul.f32.gmra.mxu0 %v2049
  %v2094 = vpop.f32.mrf.mxu0
  %v2095 = vadd.f32 0.0, %v2094
  %2096 = vmatmul.f32.gmra.mxu0 %v2052
  %v2097 = vpop.f32.mrf.mxu0
  %v2098 = vadd.f32 0.0, %v2097
  %2099 = vdwg.mxu0
  %v2100 = vadd.f32 %v2016, %v2072
  %v2101 = vadd.f32 %v2017, %v2095
  %v2102 = vadd.f32 %v2018, %v2075
  %v2103 = vadd.f32 %v2019, %v2098
  %s2104 = scalar_lea.vmem %s1, 384
  %v2105 = vld [vmem:[%s2104] sm:$0xff]
  %v2106 = vld [vmem:[%s2104 + $0x8] sm:$0xff]
  %2107 = vrot.lane.b32.xlu0 %v103, 77
  %v2108 = vpop.permute.xlu0 %2107
  %2109 = vrot.lane.b32.xlu0 %v104, 77
  %v2110 = vpop.permute.xlu0 %2109
  %2111 = vrot.lane.b32.xlu0 %v105, 77
  %v2112 = vpop.permute.xlu0 %2111
  %2113 = vrot.lane.b32.xlu0 %v106, 77
  %v2114 = vpop.permute.xlu0 %2113
  %2115 = vrot.lane.b32.xlu0 %v107, 77
  %v2116 = vpop.permute.xlu0 %2115
  %2117 = vrot.lane.b32.xlu0 %v108, 77
  %v2118 = vpop.permute.xlu0 %2117
  %vm2119 = vcmask 629760
  %v2120 = vsel %vm2119, %v2108, %v2110
  %v2121 = vsel %vm2119, %v2110, %v2112
  %v2122 = vsel %vm2119, %v2114, %v2116
  %v2123 = vsel %vm2119, %v2116, %v2118
  %v2129 = vsel %vm147, %v2105, 0
  %v2132 = vsel %vm147, %v2106, 0
  %2134 = vmatpush.msra.mxu0 0.0
  %2135 = vmatpush.msra.mxu0 0.0
  %2136 = vmatpush.msra.mxu0 0.0
  %2137 = vmatpush.msra.mxu0 0.0
  %2138 = vmatpush.msra.mxu0 0.0
  %2139 = vmatpush.msra.mxu0 0.0
  %2140 = vmatpush.msra.mxu0 0.0
  %2141 = vmatpush.msra.mxu0 0.0
  %2142 = vmatpush.msra.mxu0 0.0
  %2143 = vmatpush.msra.mxu0 0.0
  %2144 = vmatpush.msra.mxu0 0.0
  %2145 = vmatpush.msra.mxu0 0.0
  %2146 = vmatpush.msra.mxu0 0.0
  %2147 = vmatpush.msra.mxu0 0.0
  %2148 = vmatpush.msra.mxu0 %v2122
  %2149 = vmatpush.msra.mxu0 %v2120
  %2150 = vmatmul.f32.gmra.mxu0 %v2129
  %v2151 = vpop.f32.mrf.mxu0
  %v2152 = vadd.f32 0.0, %v2151
  %2153 = vmatmul.f32.gmra.mxu0 %v2132
  %v2154 = vpop.f32.mrf.mxu0
  %v2155 = vadd.f32 0.0, %v2154
  %2156 = vdwg.mxu0
  %2157 = vmatpush.msra.mxu0 0.0
  %2158 = vmatpush.msra.mxu0 0.0
  %2159 = vmatpush.msra.mxu0 0.0
  %2160 = vmatpush.msra.mxu0 0.0
  %2161 = vmatpush.msra.mxu0 0.0
  %2162 = vmatpush.msra.mxu0 0.0
  %2163 = vmatpush.msra.mxu0 0.0
  %2164 = vmatpush.msra.mxu0 0.0
  %2165 = vmatpush.msra.mxu0 0.0
  %2166 = vmatpush.msra.mxu0 0.0
  %2167 = vmatpush.msra.mxu0 0.0
  %2168 = vmatpush.msra.mxu0 0.0
  %2169 = vmatpush.msra.mxu0 0.0
  %2170 = vmatpush.msra.mxu0 0.0
  %2171 = vmatpush.msra.mxu0 %v2123
  %2172 = vmatpush.msra.mxu0 %v2121
  %2173 = vmatmul.f32.gmra.mxu0 %v2129
  %v2174 = vpop.f32.mrf.mxu0
  %v2175 = vadd.f32 0.0, %v2174
  %2176 = vmatmul.f32.gmra.mxu0 %v2132
  %v2177 = vpop.f32.mrf.mxu0
  %v2178 = vadd.f32 0.0, %v2177
  %2179 = vdwg.mxu0
  %v2180 = vadd.f32 %v2100, %v2152
  %v2181 = vadd.f32 %v2101, %v2175
  %v2182 = vadd.f32 %v2102, %v2155
  %v2183 = vadd.f32 %v2103, %v2178
  %2184 = vrot.lane.b32.xlu0 %v103, 76
  %v2185 = vpop.permute.xlu0 %2184
  %2186 = vrot.lane.b32.xlu0 %v104, 76
  %v2187 = vpop.permute.xlu0 %2186
  %2188 = vrot.lane.b32.xlu0 %v105, 76
  %v2189 = vpop.permute.xlu0 %2188
  %2190 = vrot.lane.b32.xlu0 %v106, 76
  %v2191 = vpop.permute.xlu0 %2190
  %2192 = vrot.lane.b32.xlu0 %v107, 76
  %v2193 = vpop.permute.xlu0 %2192
  %2194 = vrot.lane.b32.xlu0 %v108, 76
  %v2195 = vpop.permute.xlu0 %2194
  %vm2196 = vcmask 621568
  %v2197 = vsel %vm2196, %v2185, %v2187
  %v2198 = vsel %vm2196, %v2187, %v2189
  %v2199 = vsel %vm2196, %v2191, %v2193
  %v2200 = vsel %vm2196, %v2193, %v2195
  %v2205 = vsel %vm422, %v2197, 0.0
  %v2206 = vsel %vm423, %v2198, 0.0
  %v2207 = vsel %vm422, %v2199, 0.0
  %v2208 = vsel %vm423, %v2200, 0.0
  %s2209 = scalar_lea.vmem %s1, 400
  %v2210 = vld [vmem:[%s2209] sm:$0xff]
  %v2211 = vld [vmem:[%s2209 + $0x8] sm:$0xff]
  %v2213 = vsel %vm147, %v2210, 0
  %v2216 = vsel %vm147, %v2211, 0
  %2218 = vmatpush.msra.mxu0 0.0
  %2219 = vmatpush.msra.mxu0 0.0
  %2220 = vmatpush.msra.mxu0 0.0
  %2221 = vmatpush.msra.mxu0 0.0
  %2222 = vmatpush.msra.mxu0 0.0
  %2223 = vmatpush.msra.mxu0 0.0
  %2224 = vmatpush.msra.mxu0 0.0
  %2225 = vmatpush.msra.mxu0 0.0
  %2226 = vmatpush.msra.mxu0 0.0
  %2227 = vmatpush.msra.mxu0 0.0
  %2228 = vmatpush.msra.mxu0 0.0
  %2229 = vmatpush.msra.mxu0 0.0
  %2230 = vmatpush.msra.mxu0 0.0
  %2231 = vmatpush.msra.mxu0 0.0
  %2232 = vmatpush.msra.mxu0 %v2207
  %2233 = vmatpush.msra.mxu0 %v2205
  %2234 = vmatmul.f32.gmra.mxu0 %v2213
  %v2235 = vpop.f32.mrf.mxu0
  %v2236 = vadd.f32 0.0, %v2235
  %2237 = vmatmul.f32.gmra.mxu0 %v2216
  %v2238 = vpop.f32.mrf.mxu0
  %v2239 = vadd.f32 0.0, %v2238
  %2240 = vdwg.mxu0
  %2241 = vmatpush.msra.mxu0 0.0
  %2242 = vmatpush.msra.mxu0 0.0
  %2243 = vmatpush.msra.mxu0 0.0
  %2244 = vmatpush.msra.mxu0 0.0
  %2245 = vmatpush.msra.mxu0 0.0
  %2246 = vmatpush.msra.mxu0 0.0
  %2247 = vmatpush.msra.mxu0 0.0
  %2248 = vmatpush.msra.mxu0 0.0
  %2249 = vmatpush.msra.mxu0 0.0
  %2250 = vmatpush.msra.mxu0 0.0
  %2251 = vmatpush.msra.mxu0 0.0
  %2252 = vmatpush.msra.mxu0 0.0
  %2253 = vmatpush.msra.mxu0 0.0
  %2254 = vmatpush.msra.mxu0 0.0
  %2255 = vmatpush.msra.mxu0 %v2208
  %2256 = vmatpush.msra.mxu0 %v2206
  %2257 = vmatmul.f32.gmra.mxu0 %v2213
  %v2258 = vpop.f32.mrf.mxu0
  %v2259 = vadd.f32 0.0, %v2258
  %2260 = vmatmul.f32.gmra.mxu0 %v2216
  %v2261 = vpop.f32.mrf.mxu0
  %v2262 = vadd.f32 0.0, %v2261
  %2263 = vdwg.mxu0
  %v2264 = vadd.f32 %v2180, %v2236
  %v2265 = vadd.f32 %v2181, %v2259
  %v2266 = vadd.f32 %v2182, %v2239
  %v2267 = vadd.f32 %v2183, %v2262
  %2268 = vrot.lane.b32.xlu0 %v103, 75
  %v2269 = vpop.permute.xlu0 %2268
  %2270 = vrot.lane.b32.xlu0 %v104, 75
  %v2271 = vpop.permute.xlu0 %2270
  %2272 = vrot.lane.b32.xlu0 %v105, 75
  %v2273 = vpop.permute.xlu0 %2272
  %2274 = vrot.lane.b32.xlu0 %v106, 75
  %v2275 = vpop.permute.xlu0 %2274
  %2276 = vrot.lane.b32.xlu0 %v107, 75
  %v2277 = vpop.permute.xlu0 %2276
  %2278 = vrot.lane.b32.xlu0 %v108, 75
  %v2279 = vpop.permute.xlu0 %2278
  %vm2280 = vcmask 613376
  %v2281 = vsel %vm2280, %v2269, %v2271
  %v2282 = vsel %vm2280, %v2271, %v2273
  %v2283 = vsel %vm2280, %v2275, %v2277
  %v2284 = vsel %vm2280, %v2277, %v2279
  %v2289 = vsel %vm510, %v2281, 0.0
  %v2290 = vsel %vm511, %v2282, 0.0
  %v2291 = vsel %vm510, %v2283, 0.0
  %v2292 = vsel %vm511, %v2284, 0.0
  %s2293 = scalar_lea.vmem %s1, 416
  %v2294 = vld [vmem:[%s2293] sm:$0xff]
  %v2295 = vld [vmem:[%s2293 + $0x8] sm:$0xff]
  %v2297 = vsel %vm147, %v2294, 0
  %v2300 = vsel %vm147, %v2295, 0
  %2302 = vmatpush.msra.mxu0 0.0
  %2303 = vmatpush.msra.mxu0 0.0
  %2304 = vmatpush.msra.mxu0 0.0
  %2305 = vmatpush.msra.mxu0 0.0
  %2306 = vmatpush.msra.mxu0 0.0
  %2307 = vmatpush.msra.mxu0 0.0
  %2308 = vmatpush.msra.mxu0 0.0
  %2309 = vmatpush.msra.mxu0 0.0
  %2310 = vmatpush.msra.mxu0 0.0
  %2311 = vmatpush.msra.mxu0 0.0
  %2312 = vmatpush.msra.mxu0 0.0
  %2313 = vmatpush.msra.mxu0 0.0
  %2314 = vmatpush.msra.mxu0 0.0
  %2315 = vmatpush.msra.mxu0 0.0
  %2316 = vmatpush.msra.mxu0 %v2291
  %2317 = vmatpush.msra.mxu0 %v2289
  %2318 = vmatmul.f32.gmra.mxu0 %v2297
  %v2319 = vpop.f32.mrf.mxu0
  %v2320 = vadd.f32 0.0, %v2319
  %2321 = vmatmul.f32.gmra.mxu0 %v2300
  %v2322 = vpop.f32.mrf.mxu0
  %v2323 = vadd.f32 0.0, %v2322
  %2324 = vdwg.mxu0
  %2325 = vmatpush.msra.mxu0 0.0
  %2326 = vmatpush.msra.mxu0 0.0
  %2327 = vmatpush.msra.mxu0 0.0
  %2328 = vmatpush.msra.mxu0 0.0
  %2329 = vmatpush.msra.mxu0 0.0
  %2330 = vmatpush.msra.mxu0 0.0
  %2331 = vmatpush.msra.mxu0 0.0
  %2332 = vmatpush.msra.mxu0 0.0
  %2333 = vmatpush.msra.mxu0 0.0
  %2334 = vmatpush.msra.mxu0 0.0
  %2335 = vmatpush.msra.mxu0 0.0
  %2336 = vmatpush.msra.mxu0 0.0
  %2337 = vmatpush.msra.mxu0 0.0
  %2338 = vmatpush.msra.mxu0 0.0
  %2339 = vmatpush.msra.mxu0 %v2292
  %2340 = vmatpush.msra.mxu0 %v2290
  %2341 = vmatmul.f32.gmra.mxu0 %v2297
  %v2342 = vpop.f32.mrf.mxu0
  %v2343 = vadd.f32 0.0, %v2342
  %2344 = vmatmul.f32.gmra.mxu0 %v2300
  %v2345 = vpop.f32.mrf.mxu0
  %v2346 = vadd.f32 0.0, %v2345
  %2347 = vdwg.mxu0
  %v2348 = vadd.f32 %v2264, %v2320
  %v2349 = vadd.f32 %v2265, %v2343
  %v2350 = vadd.f32 %v2266, %v2323
  %v2351 = vadd.f32 %v2267, %v2346
  %2352 = vrot.lane.b32.xlu0 %v103, 74
  %v2353 = vpop.permute.xlu0 %2352
  %2354 = vrot.lane.b32.xlu0 %v104, 74
  %v2355 = vpop.permute.xlu0 %2354
  %2356 = vrot.lane.b32.xlu0 %v105, 74
  %v2357 = vpop.permute.xlu0 %2356
  %2358 = vrot.lane.b32.xlu0 %v106, 74
  %v2359 = vpop.permute.xlu0 %2358
  %2360 = vrot.lane.b32.xlu0 %v107, 74
  %v2361 = vpop.permute.xlu0 %2360
  %2362 = vrot.lane.b32.xlu0 %v108, 74
  %v2363 = vpop.permute.xlu0 %2362
  %vm2364 = vcmask 605184
  %v2365 = vsel %vm2364, %v2353, %v2355
  %v2366 = vsel %vm2364, %v2355, %v2357
  %v2367 = vsel %vm2364, %v2359, %v2361
  %v2368 = vsel %vm2364, %v2361, %v2363
  %v2373 = vsel %vm598, %v2365, 0.0
  %v2374 = vsel %vm599, %v2366, 0.0
  %v2375 = vsel %vm598, %v2367, 0.0
  %v2376 = vsel %vm599, %v2368, 0.0
  %s2377 = scalar_lea.vmem %s1, 432
  %v2378 = vld [vmem:[%s2377] sm:$0xff]
  %v2379 = vld [vmem:[%s2377 + $0x8] sm:$0xff]
  %v2381 = vsel %vm147, %v2378, 0
  %v2384 = vsel %vm147, %v2379, 0
  %2386 = vmatpush.msra.mxu0 0.0
  %2387 = vmatpush.msra.mxu0 0.0
  %2388 = vmatpush.msra.mxu0 0.0
  %2389 = vmatpush.msra.mxu0 0.0
  %2390 = vmatpush.msra.mxu0 0.0
  %2391 = vmatpush.msra.mxu0 0.0
  %2392 = vmatpush.msra.mxu0 0.0
  %2393 = vmatpush.msra.mxu0 0.0
  %2394 = vmatpush.msra.mxu0 0.0
  %2395 = vmatpush.msra.mxu0 0.0
  %2396 = vmatpush.msra.mxu0 0.0
  %2397 = vmatpush.msra.mxu0 0.0
  %2398 = vmatpush.msra.mxu0 0.0
  %2399 = vmatpush.msra.mxu0 0.0
  %2400 = vmatpush.msra.mxu0 %v2375
  %2401 = vmatpush.msra.mxu0 %v2373
  %2402 = vmatmul.f32.gmra.mxu0 %v2381
  %v2403 = vpop.f32.mrf.mxu0
  %v2404 = vadd.f32 0.0, %v2403
  %2405 = vmatmul.f32.gmra.mxu0 %v2384
  %v2406 = vpop.f32.mrf.mxu0
  %v2407 = vadd.f32 0.0, %v2406
  %2408 = vdwg.mxu0
  %2409 = vmatpush.msra.mxu0 0.0
  %2410 = vmatpush.msra.mxu0 0.0
  %2411 = vmatpush.msra.mxu0 0.0
  %2412 = vmatpush.msra.mxu0 0.0
  %2413 = vmatpush.msra.mxu0 0.0
  %2414 = vmatpush.msra.mxu0 0.0
  %2415 = vmatpush.msra.mxu0 0.0
  %2416 = vmatpush.msra.mxu0 0.0
  %2417 = vmatpush.msra.mxu0 0.0
  %2418 = vmatpush.msra.mxu0 0.0
  %2419 = vmatpush.msra.mxu0 0.0
  %2420 = vmatpush.msra.mxu0 0.0
  %2421 = vmatpush.msra.mxu0 0.0
  %2422 = vmatpush.msra.mxu0 0.0
  %2423 = vmatpush.msra.mxu0 %v2376
  %2424 = vmatpush.msra.mxu0 %v2374
  %2425 = vmatmul.f32.gmra.mxu0 %v2381
  %v2426 = vpop.f32.mrf.mxu0
  %v2427 = vadd.f32 0.0, %v2426
  %2428 = vmatmul.f32.gmra.mxu0 %v2384
  %v2429 = vpop.f32.mrf.mxu0
  %v2430 = vadd.f32 0.0, %v2429
  %2431 = vdwg.mxu0
  %v2432 = vadd.f32 %v2348, %v2404
  %v2433 = vadd.f32 %v2349, %v2427
  %v2434 = vadd.f32 %v2350, %v2407
  %v2435 = vadd.f32 %v2351, %v2430
  %2436 = vrot.lane.b32.xlu0 %v103, 64
  %v2437 = vpop.permute.xlu0 %2436
  %2438 = vrot.lane.b32.xlu0 %v104, 64
  %v2439 = vpop.permute.xlu0 %2438
  %2440 = vrot.lane.b32.xlu0 %v105, 64
  %v2441 = vpop.permute.xlu0 %2440
  %2442 = vrot.lane.b32.xlu0 %v106, 64
  %v2443 = vpop.permute.xlu0 %2442
  %2444 = vrot.lane.b32.xlu0 %v107, 64
  %v2445 = vpop.permute.xlu0 %2444
  %2446 = vrot.lane.b32.xlu0 %v108, 64
  %v2447 = vpop.permute.xlu0 %2446
  %vm2448 = vcmask 523264
  %v2449 = vsel %vm2448, %v2437, %v2439
  %v2450 = vsel %vm2448, %v2439, %v2441
  %v2451 = vsel %vm2448, %v2443, %v2445
  %v2452 = vsel %vm2448, %v2445, %v2447
  %v2457 = vsel %vm95, %v2449, 0.0
  %v2458 = vsel %vm96, %v2450, 0.0
  %v2459 = vsel %vm95, %v2451, 0.0
  %v2460 = vsel %vm96, %v2452, 0.0
  %s2461 = scalar_lea.vmem %s1, 448
  %v2462 = vld [vmem:[%s2461] sm:$0xff]
  %v2463 = vld [vmem:[%s2461 + $0x8] sm:$0xff]
  %v2465 = vsel %vm147, %v2462, 0
  %v2468 = vsel %vm147, %v2463, 0
  %2470 = vmatpush.msra.mxu0 0.0
  %2471 = vmatpush.msra.mxu0 0.0
  %2472 = vmatpush.msra.mxu0 0.0
  %2473 = vmatpush.msra.mxu0 0.0
  %2474 = vmatpush.msra.mxu0 0.0
  %2475 = vmatpush.msra.mxu0 0.0
  %2476 = vmatpush.msra.mxu0 0.0
  %2477 = vmatpush.msra.mxu0 0.0
  %2478 = vmatpush.msra.mxu0 0.0
  %2479 = vmatpush.msra.mxu0 0.0
  %2480 = vmatpush.msra.mxu0 0.0
  %2481 = vmatpush.msra.mxu0 0.0
  %2482 = vmatpush.msra.mxu0 0.0
  %2483 = vmatpush.msra.mxu0 0.0
  %2484 = vmatpush.msra.mxu0 %v2459
  %2485 = vmatpush.msra.mxu0 %v2457
  %2486 = vmatmul.f32.gmra.mxu0 %v2465
  %v2487 = vpop.f32.mrf.mxu0
  %v2488 = vadd.f32 0.0, %v2487
  %2489 = vmatmul.f32.gmra.mxu0 %v2468
  %v2490 = vpop.f32.mrf.mxu0
  %v2491 = vadd.f32 0.0, %v2490
  %2492 = vdwg.mxu0
  %2493 = vmatpush.msra.mxu0 0.0
  %2494 = vmatpush.msra.mxu0 0.0
  %2495 = vmatpush.msra.mxu0 0.0
  %2496 = vmatpush.msra.mxu0 0.0
  %2497 = vmatpush.msra.mxu0 0.0
  %2498 = vmatpush.msra.mxu0 0.0
  %2499 = vmatpush.msra.mxu0 0.0
  %2500 = vmatpush.msra.mxu0 0.0
  %2501 = vmatpush.msra.mxu0 0.0
  %2502 = vmatpush.msra.mxu0 0.0
  %2503 = vmatpush.msra.mxu0 0.0
  %2504 = vmatpush.msra.mxu0 0.0
  %2505 = vmatpush.msra.mxu0 0.0
  %2506 = vmatpush.msra.mxu0 0.0
  %2507 = vmatpush.msra.mxu0 %v2460
  %2508 = vmatpush.msra.mxu0 %v2458
  %2509 = vmatmul.f32.gmra.mxu0 %v2465
  %v2510 = vpop.f32.mrf.mxu0
  %v2511 = vadd.f32 0.0, %v2510
  %2512 = vmatmul.f32.gmra.mxu0 %v2468
  %v2513 = vpop.f32.mrf.mxu0
  %v2514 = vadd.f32 0.0, %v2513
  %2515 = vdwg.mxu0
  %v2516 = vadd.f32 %v2432, %v2488
  %v2517 = vadd.f32 %v2433, %v2511
  %v2518 = vadd.f32 %v2434, %v2491
  %v2519 = vadd.f32 %v2435, %v2514
  %2520 = vrot.lane.b32.xlu0 %v103, 63
  %v2521 = vpop.permute.xlu0 %2520
  %2522 = vrot.lane.b32.xlu0 %v104, 63
  %v2523 = vpop.permute.xlu0 %2522
  %2524 = vrot.lane.b32.xlu0 %v105, 63
  %v2525 = vpop.permute.xlu0 %2524
  %2526 = vrot.lane.b32.xlu0 %v106, 63
  %v2527 = vpop.permute.xlu0 %2526
  %2528 = vrot.lane.b32.xlu0 %v107, 63
  %v2529 = vpop.permute.xlu0 %2528
  %2530 = vrot.lane.b32.xlu0 %v108, 63
  %v2531 = vpop.permute.xlu0 %2530
  %vm2532 = vcmask 515072
  %v2533 = vsel %vm2532, %v2521, %v2523
  %v2534 = vsel %vm2532, %v2523, %v2525
  %v2535 = vsel %vm2532, %v2527, %v2529
  %v2536 = vsel %vm2532, %v2529, %v2531
  %v2541 = vsel %vm111, %v2533, 0.0
  %v2542 = vsel %vm112, %v2534, 0.0
  %v2543 = vsel %vm111, %v2535, 0.0
  %v2544 = vsel %vm112, %v2536, 0.0
  %s2545 = scalar_lea.vmem %s1, 464
  %v2546 = vld [vmem:[%s2545] sm:$0xff]
  %v2547 = vld [vmem:[%s2545 + $0x8] sm:$0xff]
  %v2549 = vsel %vm147, %v2546, 0
  %v2552 = vsel %vm147, %v2547, 0
  %2554 = vmatpush.msra.mxu0 0.0
  %2555 = vmatpush.msra.mxu0 0.0
  %2556 = vmatpush.msra.mxu0 0.0
  %2557 = vmatpush.msra.mxu0 0.0
  %2558 = vmatpush.msra.mxu0 0.0
  %2559 = vmatpush.msra.mxu0 0.0
  %2560 = vmatpush.msra.mxu0 0.0
  %2561 = vmatpush.msra.mxu0 0.0
  %2562 = vmatpush.msra.mxu0 0.0
  %2563 = vmatpush.msra.mxu0 0.0
  %2564 = vmatpush.msra.mxu0 0.0
  %2565 = vmatpush.msra.mxu0 0.0
  %2566 = vmatpush.msra.mxu0 0.0
  %2567 = vmatpush.msra.mxu0 0.0
  %2568 = vmatpush.msra.mxu0 %v2543
  %2569 = vmatpush.msra.mxu0 %v2541
  %2570 = vmatmul.f32.gmra.mxu0 %v2549
  %v2571 = vpop.f32.mrf.mxu0
  %v2572 = vadd.f32 0.0, %v2571
  %2573 = vmatmul.f32.gmra.mxu0 %v2552
  %v2574 = vpop.f32.mrf.mxu0
  %v2575 = vadd.f32 0.0, %v2574
  %2576 = vdwg.mxu0
  %2577 = vmatpush.msra.mxu0 0.0
  %2578 = vmatpush.msra.mxu0 0.0
  %2579 = vmatpush.msra.mxu0 0.0
  %2580 = vmatpush.msra.mxu0 0.0
  %2581 = vmatpush.msra.mxu0 0.0
  %2582 = vmatpush.msra.mxu0 0.0
  %2583 = vmatpush.msra.mxu0 0.0
  %2584 = vmatpush.msra.mxu0 0.0
  %2585 = vmatpush.msra.mxu0 0.0
  %2586 = vmatpush.msra.mxu0 0.0
  %2587 = vmatpush.msra.mxu0 0.0
  %2588 = vmatpush.msra.mxu0 0.0
  %2589 = vmatpush.msra.mxu0 0.0
  %2590 = vmatpush.msra.mxu0 0.0
  %2591 = vmatpush.msra.mxu0 %v2544
  %2592 = vmatpush.msra.mxu0 %v2542
  %2593 = vmatmul.f32.gmra.mxu0 %v2549
  %v2594 = vpop.f32.mrf.mxu0
  %v2595 = vadd.f32 0.0, %v2594
  %2596 = vmatmul.f32.gmra.mxu0 %v2552
  %v2597 = vpop.f32.mrf.mxu0
  %v2598 = vadd.f32 0.0, %v2597
  %2599 = vdwg.mxu0
  %v2600 = vadd.f32 %v2516, %v2572
  %v2601 = vadd.f32 %v2517, %v2595
  %v2602 = vadd.f32 %v2518, %v2575
  %v2603 = vadd.f32 %v2519, %v2598
  %2604 = vrot.lane.b32.xlu0 %v103, 62
  %v2605 = vpop.permute.xlu0 %2604
  %2606 = vrot.lane.b32.xlu0 %v104, 62
  %v2607 = vpop.permute.xlu0 %2606
  %2608 = vrot.lane.b32.xlu0 %v105, 62
  %v2609 = vpop.permute.xlu0 %2608
  %2610 = vrot.lane.b32.xlu0 %v106, 62
  %v2611 = vpop.permute.xlu0 %2610
  %2612 = vrot.lane.b32.xlu0 %v107, 62
  %v2613 = vpop.permute.xlu0 %2612
  %2614 = vrot.lane.b32.xlu0 %v108, 62
  %v2615 = vpop.permute.xlu0 %2614
  %vm2616 = vcmask 506880
  %v2617 = vsel %vm2616, %v2605, %v2607
  %v2618 = vsel %vm2616, %v2607, %v2609
  %v2619 = vsel %vm2616, %v2611, %v2613
  %v2620 = vsel %vm2616, %v2613, %v2615
  %v2625 = vsel %vm254, %v2617, 0.0
  %v2626 = vsel %vm255, %v2618, 0.0
  %v2627 = vsel %vm254, %v2619, 0.0
  %v2628 = vsel %vm255, %v2620, 0.0
  %s2629 = scalar_lea.vmem %s1, 480
  %v2630 = vld [vmem:[%s2629] sm:$0xff]
  %v2631 = vld [vmem:[%s2629 + $0x8] sm:$0xff]
  %v2633 = vsel %vm147, %v2630, 0
  %v2636 = vsel %vm147, %v2631, 0
  %2638 = vmatpush.msra.mxu0 0.0
  %2639 = vmatpush.msra.mxu0 0.0
  %2640 = vmatpush.msra.mxu0 0.0
  %2641 = vmatpush.msra.mxu0 0.0
  %2642 = vmatpush.msra.mxu0 0.0
  %2643 = vmatpush.msra.mxu0 0.0
  %2644 = vmatpush.msra.mxu0 0.0
  %2645 = vmatpush.msra.mxu0 0.0
  %2646 = vmatpush.msra.mxu0 0.0
  %2647 = vmatpush.msra.mxu0 0.0
  %2648 = vmatpush.msra.mxu0 0.0
  %2649 = vmatpush.msra.mxu0 0.0
  %2650 = vmatpush.msra.mxu0 0.0
  %2651 = vmatpush.msra.mxu0 0.0
  %2652 = vmatpush.msra.mxu0 %v2627
  %2653 = vmatpush.msra.mxu0 %v2625
  %2654 = vmatmul.f32.gmra.mxu0 %v2633
  %v2655 = vpop.f32.mrf.mxu0
  %v2656 = vadd.f32 0.0, %v2655
  %2657 = vmatmul.f32.gmra.mxu0 %v2636
  %v2658 = vpop.f32.mrf.mxu0
  %v2659 = vadd.f32 0.0, %v2658
  %2660 = vdwg.mxu0
  %2661 = vmatpush.msra.mxu0 0.0
  %2662 = vmatpush.msra.mxu0 0.0
  %2663 = vmatpush.msra.mxu0 0.0
  %2664 = vmatpush.msra.mxu0 0.0
  %2665 = vmatpush.msra.mxu0 0.0
  %2666 = vmatpush.msra.mxu0 0.0
  %2667 = vmatpush.msra.mxu0 0.0
  %2668 = vmatpush.msra.mxu0 0.0
  %2669 = vmatpush.msra.mxu0 0.0
  %2670 = vmatpush.msra.mxu0 0.0
  %2671 = vmatpush.msra.mxu0 0.0
  %2672 = vmatpush.msra.mxu0 0.0
  %2673 = vmatpush.msra.mxu0 0.0
  %2674 = vmatpush.msra.mxu0 0.0
  %2675 = vmatpush.msra.mxu0 %v2628
  %2676 = vmatpush.msra.mxu0 %v2626
  %2677 = vmatmul.f32.gmra.mxu0 %v2633
  %v2678 = vpop.f32.mrf.mxu0
  %v2679 = vadd.f32 0.0, %v2678
  %2680 = vmatmul.f32.gmra.mxu0 %v2636
  %v2681 = vpop.f32.mrf.mxu0
  %v2682 = vadd.f32 0.0, %v2681
  %2683 = vdwg.mxu0
  %v2684 = vadd.f32 %v2600, %v2656
  %v2685 = vadd.f32 %v2601, %v2679
  %v2686 = vadd.f32 %v2602, %v2659
  %v2687 = vadd.f32 %v2603, %v2682
  %s2688 = scalar_lea.vmem %s1, 496
  %v2689 = vld [vmem:[%s2688] sm:$0xff]
  %v2690 = vld [vmem:[%s2688 + $0x8] sm:$0xff]
  %2691 = vrot.lane.b32.xlu0 %v103, 61
  %v2692 = vpop.permute.xlu0 %2691
  %2693 = vrot.lane.b32.xlu0 %v104, 61
  %v2694 = vpop.permute.xlu0 %2693
  %2695 = vrot.lane.b32.xlu0 %v105, 61
  %v2696 = vpop.permute.xlu0 %2695
  %2697 = vrot.lane.b32.xlu0 %v106, 61
  %v2698 = vpop.permute.xlu0 %2697
  %2699 = vrot.lane.b32.xlu0 %v107, 61
  %v2700 = vpop.permute.xlu0 %2699
  %2701 = vrot.lane.b32.xlu0 %v108, 61
  %v2702 = vpop.permute.xlu0 %2701
  %vm2703 = vcmask 498688
  %v2704 = vsel %vm2703, %v2692, %v2694
  %v2705 = vsel %vm2703, %v2694, %v2696
  %v2706 = vsel %vm2703, %v2698, %v2700
  %v2707 = vsel %vm2703, %v2700, %v2702
  %v2713 = vsel %vm147, %v2689, 0
  %v2716 = vsel %vm147, %v2690, 0
  %2718 = vmatpush.msra.mxu0 0.0
  %2719 = vmatpush.msra.mxu0 0.0
  %2720 = vmatpush.msra.mxu0 0.0
  %2721 = vmatpush.msra.mxu0 0.0
  %2722 = vmatpush.msra.mxu0 0.0
  %2723 = vmatpush.msra.mxu0 0.0
  %2724 = vmatpush.msra.mxu0 0.0
  %2725 = vmatpush.msra.mxu0 0.0
  %2726 = vmatpush.msra.mxu0 0.0
  %2727 = vmatpush.msra.mxu0 0.0
  %2728 = vmatpush.msra.mxu0 0.0
  %2729 = vmatpush.msra.mxu0 0.0
  %2730 = vmatpush.msra.mxu0 0.0
  %2731 = vmatpush.msra.mxu0 0.0
  %2732 = vmatpush.msra.mxu0 %v2706
  %2733 = vmatpush.msra.mxu0 %v2704
  %2734 = vmatmul.f32.gmra.mxu0 %v2713
  %v2735 = vpop.f32.mrf.mxu0
  %v2736 = vadd.f32 0.0, %v2735
  %2737 = vmatmul.f32.gmra.mxu0 %v2716
  %v2738 = vpop.f32.mrf.mxu0
  %v2739 = vadd.f32 0.0, %v2738
  %2740 = vdwg.mxu0
  %2741 = vmatpush.msra.mxu0 0.0
  %2742 = vmatpush.msra.mxu0 0.0
  %2743 = vmatpush.msra.mxu0 0.0
  %2744 = vmatpush.msra.mxu0 0.0
  %2745 = vmatpush.msra.mxu0 0.0
  %2746 = vmatpush.msra.mxu0 0.0
  %2747 = vmatpush.msra.mxu0 0.0
  %2748 = vmatpush.msra.mxu0 0.0
  %2749 = vmatpush.msra.mxu0 0.0
  %2750 = vmatpush.msra.mxu0 0.0
  %2751 = vmatpush.msra.mxu0 0.0
  %2752 = vmatpush.msra.mxu0 0.0
  %2753 = vmatpush.msra.mxu0 0.0
  %2754 = vmatpush.msra.mxu0 0.0
  %2755 = vmatpush.msra.mxu0 %v2707
  %2756 = vmatpush.msra.mxu0 %v2705
  %2757 = vmatmul.f32.gmra.mxu0 %v2713
  %v2758 = vpop.f32.mrf.mxu0
  %v2759 = vadd.f32 0.0, %v2758
  %2760 = vmatmul.f32.gmra.mxu0 %v2716
  %v2761 = vpop.f32.mrf.mxu0
  %v2762 = vadd.f32 0.0, %v2761
  %2763 = vdwg.mxu0
  %v2764 = vadd.f32 %v2684, %v2736
  %v2765 = vadd.f32 %v2685, %v2759
  %v2766 = vadd.f32 %v2686, %v2739
  %v2767 = vadd.f32 %v2687, %v2762
  %2768 = vrot.lane.b32.xlu0 %v103, 60
  %v2769 = vpop.permute.xlu0 %2768
  %2770 = vrot.lane.b32.xlu0 %v104, 60
  %v2771 = vpop.permute.xlu0 %2770
  %2772 = vrot.lane.b32.xlu0 %v105, 60
  %v2773 = vpop.permute.xlu0 %2772
  %2774 = vrot.lane.b32.xlu0 %v106, 60
  %v2775 = vpop.permute.xlu0 %2774
  %2776 = vrot.lane.b32.xlu0 %v107, 60
  %v2777 = vpop.permute.xlu0 %2776
  %2778 = vrot.lane.b32.xlu0 %v108, 60
  %v2779 = vpop.permute.xlu0 %2778
  %vm2780 = vcmask 490496
  %v2781 = vsel %vm2780, %v2769, %v2771
  %v2782 = vsel %vm2780, %v2771, %v2773
  %v2783 = vsel %vm2780, %v2775, %v2777
  %v2784 = vsel %vm2780, %v2777, %v2779
  %v2789 = vsel %vm422, %v2781, 0.0
  %v2790 = vsel %vm423, %v2782, 0.0
  %v2791 = vsel %vm422, %v2783, 0.0
  %v2792 = vsel %vm423, %v2784, 0.0
  %s2793 = scalar_lea.vmem %s1, 512
  %v2794 = vld [vmem:[%s2793] sm:$0xff]
  %v2795 = vld [vmem:[%s2793 + $0x8] sm:$0xff]
  %v2797 = vsel %vm147, %v2794, 0
  %v2800 = vsel %vm147, %v2795, 0
  %2802 = vmatpush.msra.mxu0 0.0
  %2803 = vmatpush.msra.mxu0 0.0
  %2804 = vmatpush.msra.mxu0 0.0
  %2805 = vmatpush.msra.mxu0 0.0
  %2806 = vmatpush.msra.mxu0 0.0
  %2807 = vmatpush.msra.mxu0 0.0
  %2808 = vmatpush.msra.mxu0 0.0
  %2809 = vmatpush.msra.mxu0 0.0
  %2810 = vmatpush.msra.mxu0 0.0
  %2811 = vmatpush.msra.mxu0 0.0
  %2812 = vmatpush.msra.mxu0 0.0
  %2813 = vmatpush.msra.mxu0 0.0
  %2814 = vmatpush.msra.mxu0 0.0
  %2815 = vmatpush.msra.mxu0 0.0
  %2816 = vmatpush.msra.mxu0 %v2791
  %2817 = vmatpush.msra.mxu0 %v2789
  %2818 = vmatmul.f32.gmra.mxu0 %v2797
  %v2819 = vpop.f32.mrf.mxu0
  %v2820 = vadd.f32 0.0, %v2819
  %2821 = vmatmul.f32.gmra.mxu0 %v2800
  %v2822 = vpop.f32.mrf.mxu0
  %v2823 = vadd.f32 0.0, %v2822
  %2824 = vdwg.mxu0
  %2825 = vmatpush.msra.mxu0 0.0
  %2826 = vmatpush.msra.mxu0 0.0
  %2827 = vmatpush.msra.mxu0 0.0
  %2828 = vmatpush.msra.mxu0 0.0
  %2829 = vmatpush.msra.mxu0 0.0
  %2830 = vmatpush.msra.mxu0 0.0
  %2831 = vmatpush.msra.mxu0 0.0
  %2832 = vmatpush.msra.mxu0 0.0
  %2833 = vmatpush.msra.mxu0 0.0
  %2834 = vmatpush.msra.mxu0 0.0
  %2835 = vmatpush.msra.mxu0 0.0
  %2836 = vmatpush.msra.mxu0 0.0
  %2837 = vmatpush.msra.mxu0 0.0
  %2838 = vmatpush.msra.mxu0 0.0
  %2839 = vmatpush.msra.mxu0 %v2792
  %2840 = vmatpush.msra.mxu0 %v2790
  %2841 = vmatmul.f32.gmra.mxu0 %v2797
  %v2842 = vpop.f32.mrf.mxu0
  %v2843 = vadd.f32 0.0, %v2842
  %2844 = vmatmul.f32.gmra.mxu0 %v2800
  %v2845 = vpop.f32.mrf.mxu0
  %v2846 = vadd.f32 0.0, %v2845
  %2847 = vdwg.mxu0
  %v2848 = vadd.f32 %v2764, %v2820
  %v2849 = vadd.f32 %v2765, %v2843
  %v2850 = vadd.f32 %v2766, %v2823
  %v2851 = vadd.f32 %v2767, %v2846
  %2852 = vrot.lane.b32.xlu0 %v103, 59
  %v2853 = vpop.permute.xlu0 %2852
  %2854 = vrot.lane.b32.xlu0 %v104, 59
  %v2855 = vpop.permute.xlu0 %2854
  %2856 = vrot.lane.b32.xlu0 %v105, 59
  %v2857 = vpop.permute.xlu0 %2856
  %2858 = vrot.lane.b32.xlu0 %v106, 59
  %v2859 = vpop.permute.xlu0 %2858
  %2860 = vrot.lane.b32.xlu0 %v107, 59
  %v2861 = vpop.permute.xlu0 %2860
  %2862 = vrot.lane.b32.xlu0 %v108, 59
  %v2863 = vpop.permute.xlu0 %2862
  %vm2864 = vcmask 482304
  %v2865 = vsel %vm2864, %v2853, %v2855
  %v2866 = vsel %vm2864, %v2855, %v2857
  %v2867 = vsel %vm2864, %v2859, %v2861
  %v2868 = vsel %vm2864, %v2861, %v2863
  %v2873 = vsel %vm510, %v2865, 0.0
  %v2874 = vsel %vm511, %v2866, 0.0
  %v2875 = vsel %vm510, %v2867, 0.0
  %v2876 = vsel %vm511, %v2868, 0.0
  %s2877 = scalar_lea.vmem %s1, 528
  %v2878 = vld [vmem:[%s2877] sm:$0xff]
  %v2879 = vld [vmem:[%s2877 + $0x8] sm:$0xff]
  %v2881 = vsel %vm147, %v2878, 0
  %v2884 = vsel %vm147, %v2879, 0
  %2886 = vmatpush.msra.mxu0 0.0
  %2887 = vmatpush.msra.mxu0 0.0
  %2888 = vmatpush.msra.mxu0 0.0
  %2889 = vmatpush.msra.mxu0 0.0
  %2890 = vmatpush.msra.mxu0 0.0
  %2891 = vmatpush.msra.mxu0 0.0
  %2892 = vmatpush.msra.mxu0 0.0
  %2893 = vmatpush.msra.mxu0 0.0
  %2894 = vmatpush.msra.mxu0 0.0
  %2895 = vmatpush.msra.mxu0 0.0
  %2896 = vmatpush.msra.mxu0 0.0
  %2897 = vmatpush.msra.mxu0 0.0
  %2898 = vmatpush.msra.mxu0 0.0
  %2899 = vmatpush.msra.mxu0 0.0
  %2900 = vmatpush.msra.mxu0 %v2875
  %2901 = vmatpush.msra.mxu0 %v2873
  %2902 = vmatmul.f32.gmra.mxu0 %v2881
  %v2903 = vpop.f32.mrf.mxu0
  %v2904 = vadd.f32 0.0, %v2903
  %2905 = vmatmul.f32.gmra.mxu0 %v2884
  %v2906 = vpop.f32.mrf.mxu0
  %v2907 = vadd.f32 0.0, %v2906
  %2908 = vdwg.mxu0
  %2909 = vmatpush.msra.mxu0 0.0
  %2910 = vmatpush.msra.mxu0 0.0
  %2911 = vmatpush.msra.mxu0 0.0
  %2912 = vmatpush.msra.mxu0 0.0
  %2913 = vmatpush.msra.mxu0 0.0
  %2914 = vmatpush.msra.mxu0 0.0
  %2915 = vmatpush.msra.mxu0 0.0
  %2916 = vmatpush.msra.mxu0 0.0
  %2917 = vmatpush.msra.mxu0 0.0
  %2918 = vmatpush.msra.mxu0 0.0
  %2919 = vmatpush.msra.mxu0 0.0
  %2920 = vmatpush.msra.mxu0 0.0
  %2921 = vmatpush.msra.mxu0 0.0
  %2922 = vmatpush.msra.mxu0 0.0
  %2923 = vmatpush.msra.mxu0 %v2876
  %2924 = vmatpush.msra.mxu0 %v2874
  %2925 = vmatmul.f32.gmra.mxu0 %v2881
  %v2926 = vpop.f32.mrf.mxu0
  %v2927 = vadd.f32 0.0, %v2926
  %2928 = vmatmul.f32.gmra.mxu0 %v2884
  %v2929 = vpop.f32.mrf.mxu0
  %v2930 = vadd.f32 0.0, %v2929
  %2931 = vdwg.mxu0
  %v2932 = vadd.f32 %v2848, %v2904
  %v2933 = vadd.f32 %v2849, %v2927
  %v2934 = vadd.f32 %v2850, %v2907
  %v2935 = vadd.f32 %v2851, %v2930
  %2936 = vrot.lane.b32.xlu0 %v103, 58
  %v2937 = vpop.permute.xlu0 %2936
  %2938 = vrot.lane.b32.xlu0 %v104, 58
  %v2939 = vpop.permute.xlu0 %2938
  %2940 = vrot.lane.b32.xlu0 %v105, 58
  %v2941 = vpop.permute.xlu0 %2940
  %2942 = vrot.lane.b32.xlu0 %v106, 58
  %v2943 = vpop.permute.xlu0 %2942
  %2944 = vrot.lane.b32.xlu0 %v107, 58
  %v2945 = vpop.permute.xlu0 %2944
  %2946 = vrot.lane.b32.xlu0 %v108, 58
  %v2947 = vpop.permute.xlu0 %2946
  %vm2948 = vcmask 474112
  %v2949 = vsel %vm2948, %v2937, %v2939
  %v2950 = vsel %vm2948, %v2939, %v2941
  %v2951 = vsel %vm2948, %v2943, %v2945
  %v2952 = vsel %vm2948, %v2945, %v2947
  %v2957 = vsel %vm598, %v2949, 0.0
  %v2958 = vsel %vm599, %v2950, 0.0
  %v2959 = vsel %vm598, %v2951, 0.0
  %v2960 = vsel %vm599, %v2952, 0.0
  %s2961 = scalar_lea.vmem %s1, 544
  %v2962 = vld [vmem:[%s2961] sm:$0xff]
  %v2963 = vld [vmem:[%s2961 + $0x8] sm:$0xff]
  %v2965 = vsel %vm147, %v2962, 0
  %v2968 = vsel %vm147, %v2963, 0
  %2970 = vmatpush.msra.mxu0 0.0
  %2971 = vmatpush.msra.mxu0 0.0
  %2972 = vmatpush.msra.mxu0 0.0
  %2973 = vmatpush.msra.mxu0 0.0
  %2974 = vmatpush.msra.mxu0 0.0
  %2975 = vmatpush.msra.mxu0 0.0
  %2976 = vmatpush.msra.mxu0 0.0
  %2977 = vmatpush.msra.mxu0 0.0
  %2978 = vmatpush.msra.mxu0 0.0
  %2979 = vmatpush.msra.mxu0 0.0
  %2980 = vmatpush.msra.mxu0 0.0
  %2981 = vmatpush.msra.mxu0 0.0
  %2982 = vmatpush.msra.mxu0 0.0
  %2983 = vmatpush.msra.mxu0 0.0
  %2984 = vmatpush.msra.mxu0 %v2959
  %2985 = vmatpush.msra.mxu0 %v2957
  %2986 = vmatmul.f32.gmra.mxu0 %v2965
  %v2987 = vpop.f32.mrf.mxu0
  %v2988 = vadd.f32 0.0, %v2987
  %2989 = vmatmul.f32.gmra.mxu0 %v2968
  %v2990 = vpop.f32.mrf.mxu0
  %v2991 = vadd.f32 0.0, %v2990
  %2992 = vdwg.mxu0
  %2993 = vmatpush.msra.mxu0 0.0
  %2994 = vmatpush.msra.mxu0 0.0
  %2995 = vmatpush.msra.mxu0 0.0
  %2996 = vmatpush.msra.mxu0 0.0
  %2997 = vmatpush.msra.mxu0 0.0
  %2998 = vmatpush.msra.mxu0 0.0
  %2999 = vmatpush.msra.mxu0 0.0
  %3000 = vmatpush.msra.mxu0 0.0
  %3001 = vmatpush.msra.mxu0 0.0
  %3002 = vmatpush.msra.mxu0 0.0
  %3003 = vmatpush.msra.mxu0 0.0
  %3004 = vmatpush.msra.mxu0 0.0
  %3005 = vmatpush.msra.mxu0 0.0
  %3006 = vmatpush.msra.mxu0 0.0
  %3007 = vmatpush.msra.mxu0 %v2960
  %3008 = vmatpush.msra.mxu0 %v2958
  %3009 = vmatmul.f32.gmra.mxu0 %v2965
  %v3010 = vpop.f32.mrf.mxu0
  %v3011 = vadd.f32 0.0, %v3010
  %3012 = vmatmul.f32.gmra.mxu0 %v2968
  %v3013 = vpop.f32.mrf.mxu0
  %v3014 = vadd.f32 0.0, %v3013
  %3015 = vdwg.mxu0
  %v3016 = vadd.f32 %v2932, %v2988
  %v3017 = vadd.f32 %v2933, %v3011
  %v3018 = vadd.f32 %v2934, %v2991
  %v3019 = vadd.f32 %v2935, %v3014
  %3020 = vrot.lane.b32.xlu0 %v103, 48
  %v3021 = vpop.permute.xlu0 %3020
  %3022 = vrot.lane.b32.xlu0 %v104, 48
  %v3023 = vpop.permute.xlu0 %3022
  %3024 = vrot.lane.b32.xlu0 %v105, 48
  %v3025 = vpop.permute.xlu0 %3024
  %3026 = vrot.lane.b32.xlu0 %v106, 48
  %v3027 = vpop.permute.xlu0 %3026
  %3028 = vrot.lane.b32.xlu0 %v107, 48
  %v3029 = vpop.permute.xlu0 %3028
  %3030 = vrot.lane.b32.xlu0 %v108, 48
  %v3031 = vpop.permute.xlu0 %3030
  %vm3032 = vcmask 392192
  %v3033 = vsel %vm3032, %v3021, %v3023
  %v3034 = vsel %vm3032, %v3023, %v3025
  %v3035 = vsel %vm3032, %v3027, %v3029
  %v3036 = vsel %vm3032, %v3029, %v3031
  %v3041 = vsel %vm95, %v3033, 0.0
  %v3042 = vsel %vm96, %v3034, 0.0
  %v3043 = vsel %vm95, %v3035, 0.0
  %v3044 = vsel %vm96, %v3036, 0.0
  %s3045 = scalar_lea.vmem %s1, 560
  %v3046 = vld [vmem:[%s3045] sm:$0xff]
  %v3047 = vld [vmem:[%s3045 + $0x8] sm:$0xff]
  %v3049 = vsel %vm147, %v3046, 0
  %v3052 = vsel %vm147, %v3047, 0
  %3054 = vmatpush.msra.mxu0 0.0
  %3055 = vmatpush.msra.mxu0 0.0
  %3056 = vmatpush.msra.mxu0 0.0
  %3057 = vmatpush.msra.mxu0 0.0
  %3058 = vmatpush.msra.mxu0 0.0
  %3059 = vmatpush.msra.mxu0 0.0
  %3060 = vmatpush.msra.mxu0 0.0
  %3061 = vmatpush.msra.mxu0 0.0
  %3062 = vmatpush.msra.mxu0 0.0
  %3063 = vmatpush.msra.mxu0 0.0
  %3064 = vmatpush.msra.mxu0 0.0
  %3065 = vmatpush.msra.mxu0 0.0
  %3066 = vmatpush.msra.mxu0 0.0
  %3067 = vmatpush.msra.mxu0 0.0
  %3068 = vmatpush.msra.mxu0 %v3043
  %3069 = vmatpush.msra.mxu0 %v3041
  %3070 = vmatmul.f32.gmra.mxu0 %v3049
  %v3071 = vpop.f32.mrf.mxu0
  %v3072 = vadd.f32 0.0, %v3071
  %3073 = vmatmul.f32.gmra.mxu0 %v3052
  %v3074 = vpop.f32.mrf.mxu0
  %v3075 = vadd.f32 0.0, %v3074
  %3076 = vdwg.mxu0
  %3077 = vmatpush.msra.mxu0 0.0
  %3078 = vmatpush.msra.mxu0 0.0
  %3079 = vmatpush.msra.mxu0 0.0
  %3080 = vmatpush.msra.mxu0 0.0
  %3081 = vmatpush.msra.mxu0 0.0
  %3082 = vmatpush.msra.mxu0 0.0
  %3083 = vmatpush.msra.mxu0 0.0
  %3084 = vmatpush.msra.mxu0 0.0
  %3085 = vmatpush.msra.mxu0 0.0
  %3086 = vmatpush.msra.mxu0 0.0
  %3087 = vmatpush.msra.mxu0 0.0
  %3088 = vmatpush.msra.mxu0 0.0
  %3089 = vmatpush.msra.mxu0 0.0
  %3090 = vmatpush.msra.mxu0 0.0
  %3091 = vmatpush.msra.mxu0 %v3044
  %3092 = vmatpush.msra.mxu0 %v3042
  %3093 = vmatmul.f32.gmra.mxu0 %v3049
  %v3094 = vpop.f32.mrf.mxu0
  %v3095 = vadd.f32 0.0, %v3094
  %3096 = vmatmul.f32.gmra.mxu0 %v3052
  %v3097 = vpop.f32.mrf.mxu0
  %v3098 = vadd.f32 0.0, %v3097
  %3099 = vdwg.mxu0
  %v3100 = vadd.f32 %v3016, %v3072
  %v3101 = vadd.f32 %v3017, %v3095
  %v3102 = vadd.f32 %v3018, %v3075
  %v3103 = vadd.f32 %v3019, %v3098
  %3104 = vrot.lane.b32.xlu0 %v103, 47
  %v3105 = vpop.permute.xlu0 %3104
  %3106 = vrot.lane.b32.xlu0 %v104, 47
  %v3107 = vpop.permute.xlu0 %3106
  %3108 = vrot.lane.b32.xlu0 %v105, 47
  %v3109 = vpop.permute.xlu0 %3108
  %3110 = vrot.lane.b32.xlu0 %v106, 47
  %v3111 = vpop.permute.xlu0 %3110
  %3112 = vrot.lane.b32.xlu0 %v107, 47
  %v3113 = vpop.permute.xlu0 %3112
  %3114 = vrot.lane.b32.xlu0 %v108, 47
  %v3115 = vpop.permute.xlu0 %3114
  %vm3116 = vcmask 384000
  %v3117 = vsel %vm3116, %v3105, %v3107
  %v3118 = vsel %vm3116, %v3107, %v3109
  %v3119 = vsel %vm3116, %v3111, %v3113
  %v3120 = vsel %vm3116, %v3113, %v3115
  %v3125 = vsel %vm111, %v3117, 0.0
  %v3126 = vsel %vm112, %v3118, 0.0
  %v3127 = vsel %vm111, %v3119, 0.0
  %v3128 = vsel %vm112, %v3120, 0.0
  %s3129 = scalar_lea.vmem %s1, 576
  %v3130 = vld [vmem:[%s3129] sm:$0xff]
  %v3131 = vld [vmem:[%s3129 + $0x8] sm:$0xff]
  %v3133 = vsel %vm147, %v3130, 0
  %v3136 = vsel %vm147, %v3131, 0
  %3138 = vmatpush.msra.mxu0 0.0
  %3139 = vmatpush.msra.mxu0 0.0
  %3140 = vmatpush.msra.mxu0 0.0
  %3141 = vmatpush.msra.mxu0 0.0
  %3142 = vmatpush.msra.mxu0 0.0
  %3143 = vmatpush.msra.mxu0 0.0
  %3144 = vmatpush.msra.mxu0 0.0
  %3145 = vmatpush.msra.mxu0 0.0
  %3146 = vmatpush.msra.mxu0 0.0
  %3147 = vmatpush.msra.mxu0 0.0
  %3148 = vmatpush.msra.mxu0 0.0
  %3149 = vmatpush.msra.mxu0 0.0
  %3150 = vmatpush.msra.mxu0 0.0
  %3151 = vmatpush.msra.mxu0 0.0
  %3152 = vmatpush.msra.mxu0 %v3127
  %3153 = vmatpush.msra.mxu0 %v3125
  %3154 = vmatmul.f32.gmra.mxu0 %v3133
  %v3155 = vpop.f32.mrf.mxu0
  %v3156 = vadd.f32 0.0, %v3155
  %3157 = vmatmul.f32.gmra.mxu0 %v3136
  %v3158 = vpop.f32.mrf.mxu0
  %v3159 = vadd.f32 0.0, %v3158
  %3160 = vdwg.mxu0
  %3161 = vmatpush.msra.mxu0 0.0
  %3162 = vmatpush.msra.mxu0 0.0
  %3163 = vmatpush.msra.mxu0 0.0
  %3164 = vmatpush.msra.mxu0 0.0
  %3165 = vmatpush.msra.mxu0 0.0
  %3166 = vmatpush.msra.mxu0 0.0
  %3167 = vmatpush.msra.mxu0 0.0
  %3168 = vmatpush.msra.mxu0 0.0
  %3169 = vmatpush.msra.mxu0 0.0
  %3170 = vmatpush.msra.mxu0 0.0
  %3171 = vmatpush.msra.mxu0 0.0
  %3172 = vmatpush.msra.mxu0 0.0
  %3173 = vmatpush.msra.mxu0 0.0
  %3174 = vmatpush.msra.mxu0 0.0
  %3175 = vmatpush.msra.mxu0 %v3128
  %3176 = vmatpush.msra.mxu0 %v3126
  %3177 = vmatmul.f32.gmra.mxu0 %v3133
  %v3178 = vpop.f32.mrf.mxu0
  %v3179 = vadd.f32 0.0, %v3178
  %3180 = vmatmul.f32.gmra.mxu0 %v3136
  %v3181 = vpop.f32.mrf.mxu0
  %v3182 = vadd.f32 0.0, %v3181
  %3183 = vdwg.mxu0
  %v3184 = vadd.f32 %v3100, %v3156
  %v3185 = vadd.f32 %v3101, %v3179
  %v3186 = vadd.f32 %v3102, %v3159
  %v3187 = vadd.f32 %v3103, %v3182
  %3188 = vrot.lane.b32.xlu0 %v103, 46
  %v3189 = vpop.permute.xlu0 %3188
  %3190 = vrot.lane.b32.xlu0 %v104, 46
  %v3191 = vpop.permute.xlu0 %3190
  %3192 = vrot.lane.b32.xlu0 %v105, 46
  %v3193 = vpop.permute.xlu0 %3192
  %3194 = vrot.lane.b32.xlu0 %v106, 46
  %v3195 = vpop.permute.xlu0 %3194
  %3196 = vrot.lane.b32.xlu0 %v107, 46
  %v3197 = vpop.permute.xlu0 %3196
  %3198 = vrot.lane.b32.xlu0 %v108, 46
  %v3199 = vpop.permute.xlu0 %3198
  %vm3200 = vcmask 375808
  %v3201 = vsel %vm3200, %v3189, %v3191
  %v3202 = vsel %vm3200, %v3191, %v3193
  %v3203 = vsel %vm3200, %v3195, %v3197
  %v3204 = vsel %vm3200, %v3197, %v3199
  %v3209 = vsel %vm254, %v3201, 0.0
  %v3210 = vsel %vm255, %v3202, 0.0
  %v3211 = vsel %vm254, %v3203, 0.0
  %v3212 = vsel %vm255, %v3204, 0.0
  %s3213 = scalar_lea.vmem %s1, 592
  %v3214 = vld [vmem:[%s3213] sm:$0xff]
  %v3215 = vld [vmem:[%s3213 + $0x8] sm:$0xff]
  %v3217 = vsel %vm147, %v3214, 0
  %v3220 = vsel %vm147, %v3215, 0
  %3222 = vmatpush.msra.mxu0 0.0
  %3223 = vmatpush.msra.mxu0 0.0
  %3224 = vmatpush.msra.mxu0 0.0
  %3225 = vmatpush.msra.mxu0 0.0
  %3226 = vmatpush.msra.mxu0 0.0
  %3227 = vmatpush.msra.mxu0 0.0
  %3228 = vmatpush.msra.mxu0 0.0
  %3229 = vmatpush.msra.mxu0 0.0
  %3230 = vmatpush.msra.mxu0 0.0
  %3231 = vmatpush.msra.mxu0 0.0
  %3232 = vmatpush.msra.mxu0 0.0
  %3233 = vmatpush.msra.mxu0 0.0
  %3234 = vmatpush.msra.mxu0 0.0
  %3235 = vmatpush.msra.mxu0 0.0
  %3236 = vmatpush.msra.mxu0 %v3211
  %3237 = vmatpush.msra.mxu0 %v3209
  %3238 = vmatmul.f32.gmra.mxu0 %v3217
  %v3239 = vpop.f32.mrf.mxu0
  %v3240 = vadd.f32 0.0, %v3239
  %3241 = vmatmul.f32.gmra.mxu0 %v3220
  %v3242 = vpop.f32.mrf.mxu0
  %v3243 = vadd.f32 0.0, %v3242
  %3244 = vdwg.mxu0
  %3245 = vmatpush.msra.mxu0 0.0
  %3246 = vmatpush.msra.mxu0 0.0
  %3247 = vmatpush.msra.mxu0 0.0
  %3248 = vmatpush.msra.mxu0 0.0
  %3249 = vmatpush.msra.mxu0 0.0
  %3250 = vmatpush.msra.mxu0 0.0
  %3251 = vmatpush.msra.mxu0 0.0
  %3252 = vmatpush.msra.mxu0 0.0
  %3253 = vmatpush.msra.mxu0 0.0
  %3254 = vmatpush.msra.mxu0 0.0
  %3255 = vmatpush.msra.mxu0 0.0
  %3256 = vmatpush.msra.mxu0 0.0
  %3257 = vmatpush.msra.mxu0 0.0
  %3258 = vmatpush.msra.mxu0 0.0
  %3259 = vmatpush.msra.mxu0 %v3212
  %3260 = vmatpush.msra.mxu0 %v3210
  %3261 = vmatmul.f32.gmra.mxu0 %v3217
  %v3262 = vpop.f32.mrf.mxu0
  %v3263 = vadd.f32 0.0, %v3262
  %3264 = vmatmul.f32.gmra.mxu0 %v3220
  %v3265 = vpop.f32.mrf.mxu0
  %v3266 = vadd.f32 0.0, %v3265
  %3267 = vdwg.mxu0
  %v3268 = vadd.f32 %v3184, %v3240
  %v3269 = vadd.f32 %v3185, %v3263
  %v3270 = vadd.f32 %v3186, %v3243
  %v3271 = vadd.f32 %v3187, %v3266
  %s3272 = scalar_lea.vmem %s1, 608
  %v3273 = vld [vmem:[%s3272] sm:$0xff]
  %v3274 = vld [vmem:[%s3272 + $0x8] sm:$0xff]
  %3275 = vrot.lane.b32.xlu0 %v103, 45
  %v3276 = vpop.permute.xlu0 %3275
  %3277 = vrot.lane.b32.xlu0 %v104, 45
  %v3278 = vpop.permute.xlu0 %3277
  %3279 = vrot.lane.b32.xlu0 %v105, 45
  %v3280 = vpop.permute.xlu0 %3279
  %3281 = vrot.lane.b32.xlu0 %v106, 45
  %v3282 = vpop.permute.xlu0 %3281
  %3283 = vrot.lane.b32.xlu0 %v107, 45
  %v3284 = vpop.permute.xlu0 %3283
  %3285 = vrot.lane.b32.xlu0 %v108, 45
  %v3286 = vpop.permute.xlu0 %3285
  %vm3287 = vcmask 367616
  %v3288 = vsel %vm3287, %v3276, %v3278
  %v3289 = vsel %vm3287, %v3278, %v3280
  %v3290 = vsel %vm3287, %v3282, %v3284
  %v3291 = vsel %vm3287, %v3284, %v3286
  %v3297 = vsel %vm147, %v3273, 0
  %v3300 = vsel %vm147, %v3274, 0
  %3302 = vmatpush.msra.mxu0 0.0
  %3303 = vmatpush.msra.mxu0 0.0
  %3304 = vmatpush.msra.mxu0 0.0
  %3305 = vmatpush.msra.mxu0 0.0
  %3306 = vmatpush.msra.mxu0 0.0
  %3307 = vmatpush.msra.mxu0 0.0
  %3308 = vmatpush.msra.mxu0 0.0
  %3309 = vmatpush.msra.mxu0 0.0
  %3310 = vmatpush.msra.mxu0 0.0
  %3311 = vmatpush.msra.mxu0 0.0
  %3312 = vmatpush.msra.mxu0 0.0
  %3313 = vmatpush.msra.mxu0 0.0
  %3314 = vmatpush.msra.mxu0 0.0
  %3315 = vmatpush.msra.mxu0 0.0
  %3316 = vmatpush.msra.mxu0 %v3290
  %3317 = vmatpush.msra.mxu0 %v3288
  %3318 = vmatmul.f32.gmra.mxu0 %v3297
  %v3319 = vpop.f32.mrf.mxu0
  %v3320 = vadd.f32 0.0, %v3319
  %3321 = vmatmul.f32.gmra.mxu0 %v3300
  %v3322 = vpop.f32.mrf.mxu0
  %v3323 = vadd.f32 0.0, %v3322
  %3324 = vdwg.mxu0
  %3325 = vmatpush.msra.mxu0 0.0
  %3326 = vmatpush.msra.mxu0 0.0
  %3327 = vmatpush.msra.mxu0 0.0
  %3328 = vmatpush.msra.mxu0 0.0
  %3329 = vmatpush.msra.mxu0 0.0
  %3330 = vmatpush.msra.mxu0 0.0
  %3331 = vmatpush.msra.mxu0 0.0
  %3332 = vmatpush.msra.mxu0 0.0
  %3333 = vmatpush.msra.mxu0 0.0
  %3334 = vmatpush.msra.mxu0 0.0
  %3335 = vmatpush.msra.mxu0 0.0
  %3336 = vmatpush.msra.mxu0 0.0
  %3337 = vmatpush.msra.mxu0 0.0
  %3338 = vmatpush.msra.mxu0 0.0
  %3339 = vmatpush.msra.mxu0 %v3291
  %3340 = vmatpush.msra.mxu0 %v3289
  %3341 = vmatmul.f32.gmra.mxu0 %v3297
  %v3342 = vpop.f32.mrf.mxu0
  %v3343 = vadd.f32 0.0, %v3342
  %3344 = vmatmul.f32.gmra.mxu0 %v3300
  %v3345 = vpop.f32.mrf.mxu0
  %v3346 = vadd.f32 0.0, %v3345
  %3347 = vdwg.mxu0
  %v3348 = vadd.f32 %v3268, %v3320
  %v3349 = vadd.f32 %v3269, %v3343
  %v3350 = vadd.f32 %v3270, %v3323
  %v3351 = vadd.f32 %v3271, %v3346
  %3352 = vrot.lane.b32.xlu0 %v103, 44
  %v3353 = vpop.permute.xlu0 %3352
  %3354 = vrot.lane.b32.xlu0 %v104, 44
  %v3355 = vpop.permute.xlu0 %3354
  %3356 = vrot.lane.b32.xlu0 %v105, 44
  %v3357 = vpop.permute.xlu0 %3356
  %3358 = vrot.lane.b32.xlu0 %v106, 44
  %v3359 = vpop.permute.xlu0 %3358
  %3360 = vrot.lane.b32.xlu0 %v107, 44
  %v3361 = vpop.permute.xlu0 %3360
  %3362 = vrot.lane.b32.xlu0 %v108, 44
  %v3363 = vpop.permute.xlu0 %3362
  %vm3364 = vcmask 359424
  %v3365 = vsel %vm3364, %v3353, %v3355
  %v3366 = vsel %vm3364, %v3355, %v3357
  %v3367 = vsel %vm3364, %v3359, %v3361
  %v3368 = vsel %vm3364, %v3361, %v3363
  %v3373 = vsel %vm422, %v3365, 0.0
  %v3374 = vsel %vm423, %v3366, 0.0
  %v3375 = vsel %vm422, %v3367, 0.0
  %v3376 = vsel %vm423, %v3368, 0.0
  %s3377 = scalar_lea.vmem %s1, 624
  %v3378 = vld [vmem:[%s3377] sm:$0xff]
  %v3379 = vld [vmem:[%s3377 + $0x8] sm:$0xff]
  %v3381 = vsel %vm147, %v3378, 0
  %v3384 = vsel %vm147, %v3379, 0
  %3386 = vmatpush.msra.mxu0 0.0
  %3387 = vmatpush.msra.mxu0 0.0
  %3388 = vmatpush.msra.mxu0 0.0
  %3389 = vmatpush.msra.mxu0 0.0
  %3390 = vmatpush.msra.mxu0 0.0
  %3391 = vmatpush.msra.mxu0 0.0
  %3392 = vmatpush.msra.mxu0 0.0
  %3393 = vmatpush.msra.mxu0 0.0
  %3394 = vmatpush.msra.mxu0 0.0
  %3395 = vmatpush.msra.mxu0 0.0
  %3396 = vmatpush.msra.mxu0 0.0
  %3397 = vmatpush.msra.mxu0 0.0
  %3398 = vmatpush.msra.mxu0 0.0
  %3399 = vmatpush.msra.mxu0 0.0
  %3400 = vmatpush.msra.mxu0 %v3375
  %3401 = vmatpush.msra.mxu0 %v3373
  %3402 = vmatmul.f32.gmra.mxu0 %v3381
  %v3403 = vpop.f32.mrf.mxu0
  %v3404 = vadd.f32 0.0, %v3403
  %3405 = vmatmul.f32.gmra.mxu0 %v3384
  %v3406 = vpop.f32.mrf.mxu0
  %v3407 = vadd.f32 0.0, %v3406
  %3408 = vdwg.mxu0
  %3409 = vmatpush.msra.mxu0 0.0
  %3410 = vmatpush.msra.mxu0 0.0
  %3411 = vmatpush.msra.mxu0 0.0
  %3412 = vmatpush.msra.mxu0 0.0
  %3413 = vmatpush.msra.mxu0 0.0
  %3414 = vmatpush.msra.mxu0 0.0
  %3415 = vmatpush.msra.mxu0 0.0
  %3416 = vmatpush.msra.mxu0 0.0
  %3417 = vmatpush.msra.mxu0 0.0
  %3418 = vmatpush.msra.mxu0 0.0
  %3419 = vmatpush.msra.mxu0 0.0
  %3420 = vmatpush.msra.mxu0 0.0
  %3421 = vmatpush.msra.mxu0 0.0
  %3422 = vmatpush.msra.mxu0 0.0
  %3423 = vmatpush.msra.mxu0 %v3376
  %3424 = vmatpush.msra.mxu0 %v3374
  %3425 = vmatmul.f32.gmra.mxu0 %v3381
  %v3426 = vpop.f32.mrf.mxu0
  %v3427 = vadd.f32 0.0, %v3426
  %3428 = vmatmul.f32.gmra.mxu0 %v3384
  %v3429 = vpop.f32.mrf.mxu0
  %v3430 = vadd.f32 0.0, %v3429
  %3431 = vdwg.mxu0
  %v3432 = vadd.f32 %v3348, %v3404
  %v3433 = vadd.f32 %v3349, %v3427
  %v3434 = vadd.f32 %v3350, %v3407
  %v3435 = vadd.f32 %v3351, %v3430
  %3436 = vrot.lane.b32.xlu0 %v103, 43
  %v3437 = vpop.permute.xlu0 %3436
  %3438 = vrot.lane.b32.xlu0 %v104, 43
  %v3439 = vpop.permute.xlu0 %3438
  %3440 = vrot.lane.b32.xlu0 %v105, 43
  %v3441 = vpop.permute.xlu0 %3440
  %3442 = vrot.lane.b32.xlu0 %v106, 43
  %v3443 = vpop.permute.xlu0 %3442
  %3444 = vrot.lane.b32.xlu0 %v107, 43
  %v3445 = vpop.permute.xlu0 %3444
  %3446 = vrot.lane.b32.xlu0 %v108, 43
  %v3447 = vpop.permute.xlu0 %3446
  %vm3448 = vcmask 351232
  %v3449 = vsel %vm3448, %v3437, %v3439
  %v3450 = vsel %vm3448, %v3439, %v3441
  %v3451 = vsel %vm3448, %v3443, %v3445
  %v3452 = vsel %vm3448, %v3445, %v3447
  %v3457 = vsel %vm510, %v3449, 0.0
  %v3458 = vsel %vm511, %v3450, 0.0
  %v3459 = vsel %vm510, %v3451, 0.0
  %v3460 = vsel %vm511, %v3452, 0.0
  %s3461 = scalar_lea.vmem %s1, 640
  %v3462 = vld [vmem:[%s3461] sm:$0xff]
  %v3463 = vld [vmem:[%s3461 + $0x8] sm:$0xff]
  %v3465 = vsel %vm147, %v3462, 0
  %v3468 = vsel %vm147, %v3463, 0
  %3470 = vmatpush.msra.mxu0 0.0
  %3471 = vmatpush.msra.mxu0 0.0
  %3472 = vmatpush.msra.mxu0 0.0
  %3473 = vmatpush.msra.mxu0 0.0
  %3474 = vmatpush.msra.mxu0 0.0
  %3475 = vmatpush.msra.mxu0 0.0
  %3476 = vmatpush.msra.mxu0 0.0
  %3477 = vmatpush.msra.mxu0 0.0
  %3478 = vmatpush.msra.mxu0 0.0
  %3479 = vmatpush.msra.mxu0 0.0
  %3480 = vmatpush.msra.mxu0 0.0
  %3481 = vmatpush.msra.mxu0 0.0
  %3482 = vmatpush.msra.mxu0 0.0
  %3483 = vmatpush.msra.mxu0 0.0
  %3484 = vmatpush.msra.mxu0 %v3459
  %3485 = vmatpush.msra.mxu0 %v3457
  %3486 = vmatmul.f32.gmra.mxu0 %v3465
  %v3487 = vpop.f32.mrf.mxu0
  %v3488 = vadd.f32 0.0, %v3487
  %3489 = vmatmul.f32.gmra.mxu0 %v3468
  %v3490 = vpop.f32.mrf.mxu0
  %v3491 = vadd.f32 0.0, %v3490
  %3492 = vdwg.mxu0
  %3493 = vmatpush.msra.mxu0 0.0
  %3494 = vmatpush.msra.mxu0 0.0
  %3495 = vmatpush.msra.mxu0 0.0
  %3496 = vmatpush.msra.mxu0 0.0
  %3497 = vmatpush.msra.mxu0 0.0
  %3498 = vmatpush.msra.mxu0 0.0
  %3499 = vmatpush.msra.mxu0 0.0
  %3500 = vmatpush.msra.mxu0 0.0
  %3501 = vmatpush.msra.mxu0 0.0
  %3502 = vmatpush.msra.mxu0 0.0
  %3503 = vmatpush.msra.mxu0 0.0
  %3504 = vmatpush.msra.mxu0 0.0
  %3505 = vmatpush.msra.mxu0 0.0
  %3506 = vmatpush.msra.mxu0 0.0
  %3507 = vmatpush.msra.mxu0 %v3460
  %3508 = vmatpush.msra.mxu0 %v3458
  %3509 = vmatmul.f32.gmra.mxu0 %v3465
  %v3510 = vpop.f32.mrf.mxu0
  %v3511 = vadd.f32 0.0, %v3510
  %3512 = vmatmul.f32.gmra.mxu0 %v3468
  %v3513 = vpop.f32.mrf.mxu0
  %v3514 = vadd.f32 0.0, %v3513
  %3515 = vdwg.mxu0
  %v3516 = vadd.f32 %v3432, %v3488
  %v3517 = vadd.f32 %v3433, %v3511
  %v3518 = vadd.f32 %v3434, %v3491
  %v3519 = vadd.f32 %v3435, %v3514
  %3520 = vrot.lane.b32.xlu0 %v103, 42
  %v3521 = vpop.permute.xlu0 %3520
  %3522 = vrot.lane.b32.xlu0 %v104, 42
  %v3523 = vpop.permute.xlu0 %3522
  %3524 = vrot.lane.b32.xlu0 %v105, 42
  %v3525 = vpop.permute.xlu0 %3524
  %3526 = vrot.lane.b32.xlu0 %v106, 42
  %v3527 = vpop.permute.xlu0 %3526
  %3528 = vrot.lane.b32.xlu0 %v107, 42
  %v3529 = vpop.permute.xlu0 %3528
  %3530 = vrot.lane.b32.xlu0 %v108, 42
  %v3531 = vpop.permute.xlu0 %3530
  %vm3532 = vcmask 343040
  %v3533 = vsel %vm3532, %v3521, %v3523
  %v3534 = vsel %vm3532, %v3523, %v3525
  %v3535 = vsel %vm3532, %v3527, %v3529
  %v3536 = vsel %vm3532, %v3529, %v3531
  %v3541 = vsel %vm598, %v3533, 0.0
  %v3542 = vsel %vm599, %v3534, 0.0
  %v3543 = vsel %vm598, %v3535, 0.0
  %v3544 = vsel %vm599, %v3536, 0.0
  %s3545 = scalar_lea.vmem %s1, 656
  %v3546 = vld [vmem:[%s3545] sm:$0xff]
  %v3547 = vld [vmem:[%s3545 + $0x8] sm:$0xff]
  %v3549 = vsel %vm147, %v3546, 0
  %v3552 = vsel %vm147, %v3547, 0
  %3554 = vmatpush.msra.mxu0 0.0
  %3555 = vmatpush.msra.mxu0 0.0
  %3556 = vmatpush.msra.mxu0 0.0
  %3557 = vmatpush.msra.mxu0 0.0
  %3558 = vmatpush.msra.mxu0 0.0
  %3559 = vmatpush.msra.mxu0 0.0
  %3560 = vmatpush.msra.mxu0 0.0
  %3561 = vmatpush.msra.mxu0 0.0
  %3562 = vmatpush.msra.mxu0 0.0
  %3563 = vmatpush.msra.mxu0 0.0
  %3564 = vmatpush.msra.mxu0 0.0
  %3565 = vmatpush.msra.mxu0 0.0
  %3566 = vmatpush.msra.mxu0 0.0
  %3567 = vmatpush.msra.mxu0 0.0
  %3568 = vmatpush.msra.mxu0 %v3543
  %3569 = vmatpush.msra.mxu0 %v3541
  %3570 = vmatmul.f32.gmra.mxu0 %v3549
  %v3571 = vpop.f32.mrf.mxu0
  %v3572 = vadd.f32 0.0, %v3571
  %3573 = vmatmul.f32.gmra.mxu0 %v3552
  %v3574 = vpop.f32.mrf.mxu0
  %v3575 = vadd.f32 0.0, %v3574
  %3576 = vdwg.mxu0
  %3577 = vmatpush.msra.mxu0 0.0
  %3578 = vmatpush.msra.mxu0 0.0
  %3579 = vmatpush.msra.mxu0 0.0
  %3580 = vmatpush.msra.mxu0 0.0
  %3581 = vmatpush.msra.mxu0 0.0
  %3582 = vmatpush.msra.mxu0 0.0
  %3583 = vmatpush.msra.mxu0 0.0
  %3584 = vmatpush.msra.mxu0 0.0
  %3585 = vmatpush.msra.mxu0 0.0
  %3586 = vmatpush.msra.mxu0 0.0
  %3587 = vmatpush.msra.mxu0 0.0
  %3588 = vmatpush.msra.mxu0 0.0
  %3589 = vmatpush.msra.mxu0 0.0
  %3590 = vmatpush.msra.mxu0 0.0
  %3591 = vmatpush.msra.mxu0 %v3544
  %3592 = vmatpush.msra.mxu0 %v3542
  %3593 = vmatmul.f32.gmra.mxu0 %v3549
  %v3594 = vpop.f32.mrf.mxu0
  %v3595 = vadd.f32 0.0, %v3594
  %3596 = vmatmul.f32.gmra.mxu0 %v3552
  %v3597 = vpop.f32.mrf.mxu0
  %v3598 = vadd.f32 0.0, %v3597
  %3599 = vdwg.mxu0
  %v3600 = vadd.f32 %v3516, %v3572
  %v3601 = vadd.f32 %v3517, %v3595
  %v3602 = vadd.f32 %v3518, %v3575
  %v3603 = vadd.f32 %v3519, %v3598
  %3604 = vrot.lane.b32.xlu0 %v103, 32
  %v3605 = vpop.permute.xlu0 %3604
  %3606 = vrot.lane.b32.xlu0 %v104, 32
  %v3607 = vpop.permute.xlu0 %3606
  %3608 = vrot.lane.b32.xlu0 %v105, 32
  %v3609 = vpop.permute.xlu0 %3608
  %3610 = vrot.lane.b32.xlu0 %v106, 32
  %v3611 = vpop.permute.xlu0 %3610
  %3612 = vrot.lane.b32.xlu0 %v107, 32
  %v3613 = vpop.permute.xlu0 %3612
  %3614 = vrot.lane.b32.xlu0 %v108, 32
  %v3615 = vpop.permute.xlu0 %3614
  %vm3616 = vcmask 261120
  %v3617 = vsel %vm3616, %v3605, %v3607
  %v3618 = vsel %vm3616, %v3607, %v3609
  %v3619 = vsel %vm3616, %v3611, %v3613
  %v3620 = vsel %vm3616, %v3613, %v3615
  %v3625 = vsel %vm95, %v3617, 0.0
  %v3626 = vsel %vm96, %v3618, 0.0
  %v3627 = vsel %vm95, %v3619, 0.0
  %v3628 = vsel %vm96, %v3620, 0.0
  %s3629 = scalar_lea.vmem %s1, 672
  %v3630 = vld [vmem:[%s3629] sm:$0xff]
  %v3631 = vld [vmem:[%s3629 + $0x8] sm:$0xff]
  %v3633 = vsel %vm147, %v3630, 0
  %v3636 = vsel %vm147, %v3631, 0
  %3638 = vmatpush.msra.mxu0 0.0
  %3639 = vmatpush.msra.mxu0 0.0
  %3640 = vmatpush.msra.mxu0 0.0
  %3641 = vmatpush.msra.mxu0 0.0
  %3642 = vmatpush.msra.mxu0 0.0
  %3643 = vmatpush.msra.mxu0 0.0
  %3644 = vmatpush.msra.mxu0 0.0
  %3645 = vmatpush.msra.mxu0 0.0
  %3646 = vmatpush.msra.mxu0 0.0
  %3647 = vmatpush.msra.mxu0 0.0
  %3648 = vmatpush.msra.mxu0 0.0
  %3649 = vmatpush.msra.mxu0 0.0
  %3650 = vmatpush.msra.mxu0 0.0
  %3651 = vmatpush.msra.mxu0 0.0
  %3652 = vmatpush.msra.mxu0 %v3627
  %3653 = vmatpush.msra.mxu0 %v3625
  %3654 = vmatmul.f32.gmra.mxu0 %v3633
  %v3655 = vpop.f32.mrf.mxu0
  %v3656 = vadd.f32 0.0, %v3655
  %3657 = vmatmul.f32.gmra.mxu0 %v3636
  %v3658 = vpop.f32.mrf.mxu0
  %v3659 = vadd.f32 0.0, %v3658
  %3660 = vdwg.mxu0
  %3661 = vmatpush.msra.mxu0 0.0
  %3662 = vmatpush.msra.mxu0 0.0
  %3663 = vmatpush.msra.mxu0 0.0
  %3664 = vmatpush.msra.mxu0 0.0
  %3665 = vmatpush.msra.mxu0 0.0
  %3666 = vmatpush.msra.mxu0 0.0
  %3667 = vmatpush.msra.mxu0 0.0
  %3668 = vmatpush.msra.mxu0 0.0
  %3669 = vmatpush.msra.mxu0 0.0
  %3670 = vmatpush.msra.mxu0 0.0
  %3671 = vmatpush.msra.mxu0 0.0
  %3672 = vmatpush.msra.mxu0 0.0
  %3673 = vmatpush.msra.mxu0 0.0
  %3674 = vmatpush.msra.mxu0 0.0
  %3675 = vmatpush.msra.mxu0 %v3628
  %3676 = vmatpush.msra.mxu0 %v3626
  %3677 = vmatmul.f32.gmra.mxu0 %v3633
  %v3678 = vpop.f32.mrf.mxu0
  %v3679 = vadd.f32 0.0, %v3678
  %3680 = vmatmul.f32.gmra.mxu0 %v3636
  %v3681 = vpop.f32.mrf.mxu0
  %v3682 = vadd.f32 0.0, %v3681
  %3683 = vdwg.mxu0
  %v3684 = vadd.f32 %v3600, %v3656
  %v3685 = vadd.f32 %v3601, %v3679
  %v3686 = vadd.f32 %v3602, %v3659
  %v3687 = vadd.f32 %v3603, %v3682
  %3688 = vrot.lane.b32.xlu0 %v103, 31
  %v3689 = vpop.permute.xlu0 %3688
  %3690 = vrot.lane.b32.xlu0 %v104, 31
  %v3691 = vpop.permute.xlu0 %3690
  %3692 = vrot.lane.b32.xlu0 %v105, 31
  %v3693 = vpop.permute.xlu0 %3692
  %3694 = vrot.lane.b32.xlu0 %v106, 31
  %v3695 = vpop.permute.xlu0 %3694
  %3696 = vrot.lane.b32.xlu0 %v107, 31
  %v3697 = vpop.permute.xlu0 %3696
  %3698 = vrot.lane.b32.xlu0 %v108, 31
  %v3699 = vpop.permute.xlu0 %3698
  %vm3700 = vcmask 252928
  %v3701 = vsel %vm3700, %v3689, %v3691
  %v3702 = vsel %vm3700, %v3691, %v3693
  %v3703 = vsel %vm3700, %v3695, %v3697
  %v3704 = vsel %vm3700, %v3697, %v3699
  %v3709 = vsel %vm111, %v3701, 0.0
  %v3710 = vsel %vm112, %v3702, 0.0
  %v3711 = vsel %vm111, %v3703, 0.0
  %v3712 = vsel %vm112, %v3704, 0.0
  %s3713 = scalar_lea.vmem %s1, 688
  %v3714 = vld [vmem:[%s3713] sm:$0xff]
  %v3715 = vld [vmem:[%s3713 + $0x8] sm:$0xff]
  %v3717 = vsel %vm147, %v3714, 0
  %v3720 = vsel %vm147, %v3715, 0
  %3722 = vmatpush.msra.mxu0 0.0
  %3723 = vmatpush.msra.mxu0 0.0
  %3724 = vmatpush.msra.mxu0 0.0
  %3725 = vmatpush.msra.mxu0 0.0
  %3726 = vmatpush.msra.mxu0 0.0
  %3727 = vmatpush.msra.mxu0 0.0
  %3728 = vmatpush.msra.mxu0 0.0
  %3729 = vmatpush.msra.mxu0 0.0
  %3730 = vmatpush.msra.mxu0 0.0
  %3731 = vmatpush.msra.mxu0 0.0
  %3732 = vmatpush.msra.mxu0 0.0
  %3733 = vmatpush.msra.mxu0 0.0
  %3734 = vmatpush.msra.mxu0 0.0
  %3735 = vmatpush.msra.mxu0 0.0
  %3736 = vmatpush.msra.mxu0 %v3711
  %3737 = vmatpush.msra.mxu0 %v3709
  %3738 = vmatmul.f32.gmra.mxu0 %v3717
  %v3739 = vpop.f32.mrf.mxu0
  %v3740 = vadd.f32 0.0, %v3739
  %3741 = vmatmul.f32.gmra.mxu0 %v3720
  %v3742 = vpop.f32.mrf.mxu0
  %v3743 = vadd.f32 0.0, %v3742
  %3744 = vdwg.mxu0
  %3745 = vmatpush.msra.mxu0 0.0
  %3746 = vmatpush.msra.mxu0 0.0
  %3747 = vmatpush.msra.mxu0 0.0
  %3748 = vmatpush.msra.mxu0 0.0
  %3749 = vmatpush.msra.mxu0 0.0
  %3750 = vmatpush.msra.mxu0 0.0
  %3751 = vmatpush.msra.mxu0 0.0
  %3752 = vmatpush.msra.mxu0 0.0
  %3753 = vmatpush.msra.mxu0 0.0
  %3754 = vmatpush.msra.mxu0 0.0
  %3755 = vmatpush.msra.mxu0 0.0
  %3756 = vmatpush.msra.mxu0 0.0
  %3757 = vmatpush.msra.mxu0 0.0
  %3758 = vmatpush.msra.mxu0 0.0
  %3759 = vmatpush.msra.mxu0 %v3712
  %3760 = vmatpush.msra.mxu0 %v3710
  %3761 = vmatmul.f32.gmra.mxu0 %v3717
  %v3762 = vpop.f32.mrf.mxu0
  %v3763 = vadd.f32 0.0, %v3762
  %3764 = vmatmul.f32.gmra.mxu0 %v3720
  %v3765 = vpop.f32.mrf.mxu0
  %v3766 = vadd.f32 0.0, %v3765
  %3767 = vdwg.mxu0
  %v3768 = vadd.f32 %v3684, %v3740
  %v3769 = vadd.f32 %v3685, %v3763
  %v3770 = vadd.f32 %v3686, %v3743
  %v3771 = vadd.f32 %v3687, %v3766
  %3772 = vrot.lane.b32.xlu0 %v103, 30
  %v3773 = vpop.permute.xlu0 %3772
  %3774 = vrot.lane.b32.xlu0 %v104, 30
  %v3775 = vpop.permute.xlu0 %3774
  %3776 = vrot.lane.b32.xlu0 %v105, 30
  %v3777 = vpop.permute.xlu0 %3776
  %3778 = vrot.lane.b32.xlu0 %v106, 30
  %v3779 = vpop.permute.xlu0 %3778
  %3780 = vrot.lane.b32.xlu0 %v107, 30
  %v3781 = vpop.permute.xlu0 %3780
  %3782 = vrot.lane.b32.xlu0 %v108, 30
  %v3783 = vpop.permute.xlu0 %3782
  %vm3784 = vcmask 244736
  %v3785 = vsel %vm3784, %v3773, %v3775
  %v3786 = vsel %vm3784, %v3775, %v3777
  %v3787 = vsel %vm3784, %v3779, %v3781
  %v3788 = vsel %vm3784, %v3781, %v3783
  %v3793 = vsel %vm254, %v3785, 0.0
  %v3794 = vsel %vm255, %v3786, 0.0
  %v3795 = vsel %vm254, %v3787, 0.0
  %v3796 = vsel %vm255, %v3788, 0.0
  %s3797 = scalar_lea.vmem %s1, 704
  %v3798 = vld [vmem:[%s3797] sm:$0xff]
  %v3799 = vld [vmem:[%s3797 + $0x8] sm:$0xff]
  %v3801 = vsel %vm147, %v3798, 0
  %v3804 = vsel %vm147, %v3799, 0
  %3806 = vmatpush.msra.mxu0 0.0
  %3807 = vmatpush.msra.mxu0 0.0
  %3808 = vmatpush.msra.mxu0 0.0
  %3809 = vmatpush.msra.mxu0 0.0
  %3810 = vmatpush.msra.mxu0 0.0
  %3811 = vmatpush.msra.mxu0 0.0
  %3812 = vmatpush.msra.mxu0 0.0
  %3813 = vmatpush.msra.mxu0 0.0
  %3814 = vmatpush.msra.mxu0 0.0
  %3815 = vmatpush.msra.mxu0 0.0
  %3816 = vmatpush.msra.mxu0 0.0
  %3817 = vmatpush.msra.mxu0 0.0
  %3818 = vmatpush.msra.mxu0 0.0
  %3819 = vmatpush.msra.mxu0 0.0
  %3820 = vmatpush.msra.mxu0 %v3795
  %3821 = vmatpush.msra.mxu0 %v3793
  %3822 = vmatmul.f32.gmra.mxu0 %v3801
  %v3823 = vpop.f32.mrf.mxu0
  %v3824 = vadd.f32 0.0, %v3823
  %3825 = vmatmul.f32.gmra.mxu0 %v3804
  %v3826 = vpop.f32.mrf.mxu0
  %v3827 = vadd.f32 0.0, %v3826
  %3828 = vdwg.mxu0
  %3829 = vmatpush.msra.mxu0 0.0
  %3830 = vmatpush.msra.mxu0 0.0
  %3831 = vmatpush.msra.mxu0 0.0
  %3832 = vmatpush.msra.mxu0 0.0
  %3833 = vmatpush.msra.mxu0 0.0
  %3834 = vmatpush.msra.mxu0 0.0
  %3835 = vmatpush.msra.mxu0 0.0
  %3836 = vmatpush.msra.mxu0 0.0
  %3837 = vmatpush.msra.mxu0 0.0
  %3838 = vmatpush.msra.mxu0 0.0
  %3839 = vmatpush.msra.mxu0 0.0
  %3840 = vmatpush.msra.mxu0 0.0
  %3841 = vmatpush.msra.mxu0 0.0
  %3842 = vmatpush.msra.mxu0 0.0
  %3843 = vmatpush.msra.mxu0 %v3796
  %3844 = vmatpush.msra.mxu0 %v3794
  %3845 = vmatmul.f32.gmra.mxu0 %v3801
  %v3846 = vpop.f32.mrf.mxu0
  %v3847 = vadd.f32 0.0, %v3846
  %3848 = vmatmul.f32.gmra.mxu0 %v3804
  %v3849 = vpop.f32.mrf.mxu0
  %v3850 = vadd.f32 0.0, %v3849
  %3851 = vdwg.mxu0
  %v3852 = vadd.f32 %v3768, %v3824
  %v3853 = vadd.f32 %v3769, %v3847
  %v3854 = vadd.f32 %v3770, %v3827
  %v3855 = vadd.f32 %v3771, %v3850
  %s3856 = scalar_lea.vmem %s1, 720
  %v3857 = vld [vmem:[%s3856] sm:$0xff]
  %v3858 = vld [vmem:[%s3856 + $0x8] sm:$0xff]
  %3859 = vrot.lane.b32.xlu0 %v103, 29
  %v3860 = vpop.permute.xlu0 %3859
  %3861 = vrot.lane.b32.xlu0 %v104, 29
  %v3862 = vpop.permute.xlu0 %3861
  %3863 = vrot.lane.b32.xlu0 %v105, 29
  %v3864 = vpop.permute.xlu0 %3863
  %3865 = vrot.lane.b32.xlu0 %v106, 29
  %v3866 = vpop.permute.xlu0 %3865
  %3867 = vrot.lane.b32.xlu0 %v107, 29
  %v3868 = vpop.permute.xlu0 %3867
  %3869 = vrot.lane.b32.xlu0 %v108, 29
  %v3870 = vpop.permute.xlu0 %3869
  %vm3871 = vcmask 236544
  %v3872 = vsel %vm3871, %v3860, %v3862
  %v3873 = vsel %vm3871, %v3862, %v3864
  %v3874 = vsel %vm3871, %v3866, %v3868
  %v3875 = vsel %vm3871, %v3868, %v3870
  %v3881 = vsel %vm147, %v3857, 0
  %v3884 = vsel %vm147, %v3858, 0
  %3886 = vmatpush.msra.mxu0 0.0
  %3887 = vmatpush.msra.mxu0 0.0
  %3888 = vmatpush.msra.mxu0 0.0
  %3889 = vmatpush.msra.mxu0 0.0
  %3890 = vmatpush.msra.mxu0 0.0
  %3891 = vmatpush.msra.mxu0 0.0
  %3892 = vmatpush.msra.mxu0 0.0
  %3893 = vmatpush.msra.mxu0 0.0
  %3894 = vmatpush.msra.mxu0 0.0
  %3895 = vmatpush.msra.mxu0 0.0
  %3896 = vmatpush.msra.mxu0 0.0
  %3897 = vmatpush.msra.mxu0 0.0
  %3898 = vmatpush.msra.mxu0 0.0
  %3899 = vmatpush.msra.mxu0 0.0
  %3900 = vmatpush.msra.mxu0 %v3874
  %3901 = vmatpush.msra.mxu0 %v3872
  %3902 = vmatmul.f32.gmra.mxu0 %v3881
  %v3903 = vpop.f32.mrf.mxu0
  %v3904 = vadd.f32 0.0, %v3903
  %3905 = vmatmul.f32.gmra.mxu0 %v3884
  %v3906 = vpop.f32.mrf.mxu0
  %v3907 = vadd.f32 0.0, %v3906
  %3908 = vdwg.mxu0
  %3909 = vmatpush.msra.mxu0 0.0
  %3910 = vmatpush.msra.mxu0 0.0
  %3911 = vmatpush.msra.mxu0 0.0
  %3912 = vmatpush.msra.mxu0 0.0
  %3913 = vmatpush.msra.mxu0 0.0
  %3914 = vmatpush.msra.mxu0 0.0
  %3915 = vmatpush.msra.mxu0 0.0
  %3916 = vmatpush.msra.mxu0 0.0
  %3917 = vmatpush.msra.mxu0 0.0
  %3918 = vmatpush.msra.mxu0 0.0
  %3919 = vmatpush.msra.mxu0 0.0
  %3920 = vmatpush.msra.mxu0 0.0
  %3921 = vmatpush.msra.mxu0 0.0
  %3922 = vmatpush.msra.mxu0 0.0
  %3923 = vmatpush.msra.mxu0 %v3875
  %3924 = vmatpush.msra.mxu0 %v3873
  %3925 = vmatmul.f32.gmra.mxu0 %v3881
  %v3926 = vpop.f32.mrf.mxu0
  %v3927 = vadd.f32 0.0, %v3926
  %3928 = vmatmul.f32.gmra.mxu0 %v3884
  %v3929 = vpop.f32.mrf.mxu0
  %v3930 = vadd.f32 0.0, %v3929
  %3931 = vdwg.mxu0
  %v3932 = vadd.f32 %v3852, %v3904
  %v3933 = vadd.f32 %v3853, %v3927
  %v3934 = vadd.f32 %v3854, %v3907
  %v3935 = vadd.f32 %v3855, %v3930
  %3936 = vrot.lane.b32.xlu0 %v103, 28
  %v3937 = vpop.permute.xlu0 %3936
  %3938 = vrot.lane.b32.xlu0 %v104, 28
  %v3939 = vpop.permute.xlu0 %3938
  %3940 = vrot.lane.b32.xlu0 %v105, 28
  %v3941 = vpop.permute.xlu0 %3940
  %3942 = vrot.lane.b32.xlu0 %v106, 28
  %v3943 = vpop.permute.xlu0 %3942
  %3944 = vrot.lane.b32.xlu0 %v107, 28
  %v3945 = vpop.permute.xlu0 %3944
  %3946 = vrot.lane.b32.xlu0 %v108, 28
  %v3947 = vpop.permute.xlu0 %3946
  %vm3948 = vcmask 228352
  %v3949 = vsel %vm3948, %v3937, %v3939
  %v3950 = vsel %vm3948, %v3939, %v3941
  %v3951 = vsel %vm3948, %v3943, %v3945
  %v3952 = vsel %vm3948, %v3945, %v3947
  %v3957 = vsel %vm422, %v3949, 0.0
  %v3958 = vsel %vm423, %v3950, 0.0
  %v3959 = vsel %vm422, %v3951, 0.0
  %v3960 = vsel %vm423, %v3952, 0.0
  %s3961 = scalar_lea.vmem %s1, 736
  %v3962 = vld [vmem:[%s3961] sm:$0xff]
  %v3963 = vld [vmem:[%s3961 + $0x8] sm:$0xff]
  %v3965 = vsel %vm147, %v3962, 0
  %v3968 = vsel %vm147, %v3963, 0
  %3970 = vmatpush.msra.mxu0 0.0
  %3971 = vmatpush.msra.mxu0 0.0
  %3972 = vmatpush.msra.mxu0 0.0
  %3973 = vmatpush.msra.mxu0 0.0
  %3974 = vmatpush.msra.mxu0 0.0
  %3975 = vmatpush.msra.mxu0 0.0
  %3976 = vmatpush.msra.mxu0 0.0
  %3977 = vmatpush.msra.mxu0 0.0
  %3978 = vmatpush.msra.mxu0 0.0
  %3979 = vmatpush.msra.mxu0 0.0
  %3980 = vmatpush.msra.mxu0 0.0
  %3981 = vmatpush.msra.mxu0 0.0
  %3982 = vmatpush.msra.mxu0 0.0
  %3983 = vmatpush.msra.mxu0 0.0
  %3984 = vmatpush.msra.mxu0 %v3959
  %3985 = vmatpush.msra.mxu0 %v3957
  %3986 = vmatmul.f32.gmra.mxu0 %v3965
  %v3987 = vpop.f32.mrf.mxu0
  %v3988 = vadd.f32 0.0, %v3987
  %3989 = vmatmul.f32.gmra.mxu0 %v3968
  %v3990 = vpop.f32.mrf.mxu0
  %v3991 = vadd.f32 0.0, %v3990
  %3992 = vdwg.mxu0
  %3993 = vmatpush.msra.mxu0 0.0
  %3994 = vmatpush.msra.mxu0 0.0
  %3995 = vmatpush.msra.mxu0 0.0
  %3996 = vmatpush.msra.mxu0 0.0
  %3997 = vmatpush.msra.mxu0 0.0
  %3998 = vmatpush.msra.mxu0 0.0
  %3999 = vmatpush.msra.mxu0 0.0
  %4000 = vmatpush.msra.mxu0 0.0
  %4001 = vmatpush.msra.mxu0 0.0
  %4002 = vmatpush.msra.mxu0 0.0
  %4003 = vmatpush.msra.mxu0 0.0
  %4004 = vmatpush.msra.mxu0 0.0
  %4005 = vmatpush.msra.mxu0 0.0
  %4006 = vmatpush.msra.mxu0 0.0
  %4007 = vmatpush.msra.mxu0 %v3960
  %4008 = vmatpush.msra.mxu0 %v3958
  %4009 = vmatmul.f32.gmra.mxu0 %v3965
  %v4010 = vpop.f32.mrf.mxu0
  %v4011 = vadd.f32 0.0, %v4010
  %4012 = vmatmul.f32.gmra.mxu0 %v3968
  %v4013 = vpop.f32.mrf.mxu0
  %v4014 = vadd.f32 0.0, %v4013
  %4015 = vdwg.mxu0
  %v4016 = vadd.f32 %v3932, %v3988
  %v4017 = vadd.f32 %v3933, %v4011
  %v4018 = vadd.f32 %v3934, %v3991
  %v4019 = vadd.f32 %v3935, %v4014
  %4020 = vrot.lane.b32.xlu0 %v103, 27
  %v4021 = vpop.permute.xlu0 %4020
  %4022 = vrot.lane.b32.xlu0 %v104, 27
  %v4023 = vpop.permute.xlu0 %4022
  %4024 = vrot.lane.b32.xlu0 %v105, 27
  %v4025 = vpop.permute.xlu0 %4024
  %4026 = vrot.lane.b32.xlu0 %v106, 27
  %v4027 = vpop.permute.xlu0 %4026
  %4028 = vrot.lane.b32.xlu0 %v107, 27
  %v4029 = vpop.permute.xlu0 %4028
  %4030 = vrot.lane.b32.xlu0 %v108, 27
  %v4031 = vpop.permute.xlu0 %4030
  %vm4032 = vcmask 220160
  %v4033 = vsel %vm4032, %v4021, %v4023
  %v4034 = vsel %vm4032, %v4023, %v4025
  %v4035 = vsel %vm4032, %v4027, %v4029
  %v4036 = vsel %vm4032, %v4029, %v4031
  %v4041 = vsel %vm510, %v4033, 0.0
  %v4042 = vsel %vm511, %v4034, 0.0
  %v4043 = vsel %vm510, %v4035, 0.0
  %v4044 = vsel %vm511, %v4036, 0.0
  %s4045 = scalar_lea.vmem %s1, 752
  %v4046 = vld [vmem:[%s4045] sm:$0xff]
  %v4047 = vld [vmem:[%s4045 + $0x8] sm:$0xff]
  %v4049 = vsel %vm147, %v4046, 0
  %v4052 = vsel %vm147, %v4047, 0
  %4054 = vmatpush.msra.mxu0 0.0
  %4055 = vmatpush.msra.mxu0 0.0
  %4056 = vmatpush.msra.mxu0 0.0
  %4057 = vmatpush.msra.mxu0 0.0
  %4058 = vmatpush.msra.mxu0 0.0
  %4059 = vmatpush.msra.mxu0 0.0
  %4060 = vmatpush.msra.mxu0 0.0
  %4061 = vmatpush.msra.mxu0 0.0
  %4062 = vmatpush.msra.mxu0 0.0
  %4063 = vmatpush.msra.mxu0 0.0
  %4064 = vmatpush.msra.mxu0 0.0
  %4065 = vmatpush.msra.mxu0 0.0
  %4066 = vmatpush.msra.mxu0 0.0
  %4067 = vmatpush.msra.mxu0 0.0
  %4068 = vmatpush.msra.mxu0 %v4043
  %4069 = vmatpush.msra.mxu0 %v4041
  %4070 = vmatmul.f32.gmra.mxu0 %v4049
  %v4071 = vpop.f32.mrf.mxu0
  %v4072 = vadd.f32 0.0, %v4071
  %4073 = vmatmul.f32.gmra.mxu0 %v4052
  %v4074 = vpop.f32.mrf.mxu0
  %v4075 = vadd.f32 0.0, %v4074
  %4076 = vdwg.mxu0
  %4077 = vmatpush.msra.mxu0 0.0
  %4078 = vmatpush.msra.mxu0 0.0
  %4079 = vmatpush.msra.mxu0 0.0
  %4080 = vmatpush.msra.mxu0 0.0
  %4081 = vmatpush.msra.mxu0 0.0
  %4082 = vmatpush.msra.mxu0 0.0
  %4083 = vmatpush.msra.mxu0 0.0
  %4084 = vmatpush.msra.mxu0 0.0
  %4085 = vmatpush.msra.mxu0 0.0
  %4086 = vmatpush.msra.mxu0 0.0
  %4087 = vmatpush.msra.mxu0 0.0
  %4088 = vmatpush.msra.mxu0 0.0
  %4089 = vmatpush.msra.mxu0 0.0
  %4090 = vmatpush.msra.mxu0 0.0
  %4091 = vmatpush.msra.mxu0 %v4044
  %4092 = vmatpush.msra.mxu0 %v4042
  %4093 = vmatmul.f32.gmra.mxu0 %v4049
  %v4094 = vpop.f32.mrf.mxu0
  %v4095 = vadd.f32 0.0, %v4094
  %4096 = vmatmul.f32.gmra.mxu0 %v4052
  %v4097 = vpop.f32.mrf.mxu0
  %v4098 = vadd.f32 0.0, %v4097
  %4099 = vdwg.mxu0
  %v4100 = vadd.f32 %v4016, %v4072
  %v4101 = vadd.f32 %v4017, %v4095
  %v4102 = vadd.f32 %v4018, %v4075
  %v4103 = vadd.f32 %v4019, %v4098
  %4104 = vrot.lane.b32.xlu0 %v103, 26
  %v4105 = vpop.permute.xlu0 %4104
  %4106 = vrot.lane.b32.xlu0 %v104, 26
  %v4107 = vpop.permute.xlu0 %4106
  %4108 = vrot.lane.b32.xlu0 %v105, 26
  %v4109 = vpop.permute.xlu0 %4108
  %4110 = vrot.lane.b32.xlu0 %v106, 26
  %v4111 = vpop.permute.xlu0 %4110
  %4112 = vrot.lane.b32.xlu0 %v107, 26
  %v4113 = vpop.permute.xlu0 %4112
  %4114 = vrot.lane.b32.xlu0 %v108, 26
  %v4115 = vpop.permute.xlu0 %4114
  %vm4116 = vcmask 211968
  %v4117 = vsel %vm4116, %v4105, %v4107
  %v4118 = vsel %vm4116, %v4107, %v4109
  %v4119 = vsel %vm4116, %v4111, %v4113
  %v4120 = vsel %vm4116, %v4113, %v4115
  %v4125 = vsel %vm598, %v4117, 0.0
  %v4126 = vsel %vm599, %v4118, 0.0
  %v4127 = vsel %vm598, %v4119, 0.0
  %v4128 = vsel %vm599, %v4120, 0.0
  %s4129 = scalar_lea.vmem %s1, 768
  %v4130 = vld [vmem:[%s4129] sm:$0xff]
  %v4131 = vld [vmem:[%s4129 + $0x8] sm:$0xff]
  %v4133 = vsel %vm147, %v4130, 0
  %v4136 = vsel %vm147, %v4131, 0
  %4138 = vmatpush.msra.mxu0 0.0
  %4139 = vmatpush.msra.mxu0 0.0
  %4140 = vmatpush.msra.mxu0 0.0
  %4141 = vmatpush.msra.mxu0 0.0
  %4142 = vmatpush.msra.mxu0 0.0
  %4143 = vmatpush.msra.mxu0 0.0
  %4144 = vmatpush.msra.mxu0 0.0
  %4145 = vmatpush.msra.mxu0 0.0
  %4146 = vmatpush.msra.mxu0 0.0
  %4147 = vmatpush.msra.mxu0 0.0
  %4148 = vmatpush.msra.mxu0 0.0
  %4149 = vmatpush.msra.mxu0 0.0
  %4150 = vmatpush.msra.mxu0 0.0
  %4151 = vmatpush.msra.mxu0 0.0
  %4152 = vmatpush.msra.mxu0 %v4127
  %4153 = vmatpush.msra.mxu0 %v4125
  %4154 = vmatmul.f32.gmra.mxu0 %v4133
  %v4155 = vpop.f32.mrf.mxu0
  %v4156 = vadd.f32 0.0, %v4155
  %4157 = vmatmul.f32.gmra.mxu0 %v4136
  %v4158 = vpop.f32.mrf.mxu0
  %v4159 = vadd.f32 0.0, %v4158
  %4160 = vdwg.mxu0
  %4161 = vmatpush.msra.mxu0 0.0
  %4162 = vmatpush.msra.mxu0 0.0
  %4163 = vmatpush.msra.mxu0 0.0
  %4164 = vmatpush.msra.mxu0 0.0
  %4165 = vmatpush.msra.mxu0 0.0
  %4166 = vmatpush.msra.mxu0 0.0
  %4167 = vmatpush.msra.mxu0 0.0
  %4168 = vmatpush.msra.mxu0 0.0
  %4169 = vmatpush.msra.mxu0 0.0
  %4170 = vmatpush.msra.mxu0 0.0
  %4171 = vmatpush.msra.mxu0 0.0
  %4172 = vmatpush.msra.mxu0 0.0
  %4173 = vmatpush.msra.mxu0 0.0
  %4174 = vmatpush.msra.mxu0 0.0
  %4175 = vmatpush.msra.mxu0 %v4128
  %4176 = vmatpush.msra.mxu0 %v4126
  %4177 = vmatmul.f32.gmra.mxu0 %v4133
  %v4178 = vpop.f32.mrf.mxu0
  %v4179 = vadd.f32 0.0, %v4178
  %4180 = vmatmul.f32.gmra.mxu0 %v4136
  %v4181 = vpop.f32.mrf.mxu0
  %v4182 = vadd.f32 0.0, %v4181
  %4183 = vdwg.mxu0
  %v4184 = vadd.f32 %v4100, %v4156
  %v4185 = vadd.f32 %v4101, %v4179
  %v4186 = vadd.f32 %v4102, %v4159
  %v4187 = vadd.f32 %v4103, %v4182
  %v4188 = vld [vmem:[%s2] sm:$0xff]
  %v4189 = vld [vmem:[%s2 + $0x8] sm:$0xff]
  %4191 = vset.pattern.permute.xlu0 0
  %4192 = vperm.xlu0 %4191, %v4188
  %v4193 = vpop.permute.xlu0 %4192
  %4196 = vset.pattern.permute.xlu0 0
  %4197 = vperm.xlu0 %4196, %v4189
  %v4198 = vpop.permute.xlu0 %4197
  %v4200 = vadd.f32 %v4184, %v4193
  %v4201 = vadd.f32 %v4185, %v4193
  %v4202 = vadd.f32 %v4186, %v4198
  %v4203 = vadd.f32 %v4187, %v4198
  %v4204 = vmax.f32 %v4200, 0.0
  %v4205 = vmax.f32 %v4201, 0.0
  %v4206 = vmax.f32 %v4202, 0.0
  %v4207 = vmax.f32 %v4203, 0.0
  %4208 = vst [vmem:[%s3] sm:$0xff] %v4204
  %4209 = vst [vmem:[%s3 + $0x8] sm:$0xff] %v4205
  %4210 = vst [vmem:[%s3 + $0x10] sm:$0xff] %v4206
  %4211 = vst [vmem:[%s3 + $0x18] sm:$0xff] %v4207
  // Predicated region
  $region14: #{model_forward.1} parent=0 // pred_check
    _
  $region15: #{model_forward.1} parent=0 // pred_check_branch
    %4213 = sbr.rel (0) target = $region17
  $region16: #{model_forward.1} parent=0 // pred_region
    _
  $region17: #{model_forward.1} parent=0 // pred_fallthru
    _
  // Predicated region
  $region18: #{model_forward.1} parent=0 // pred_check
    _
  $region19: #{model_forward.1} parent=0 // pred_check_branch
    %4215 = sbr.rel (0) target = $region21
  $region20: #{model_forward.1} parent=0 // pred_region
    _
  $region21: #{model_forward.1} parent=0 // pred_fallthru
    _

</llo_original>
